<compile_context>
chip_gen: v6e
topology: v6e:2x2x1
jax: 0.10.0
libtpu: 0.0.40
codegen_flags: <defaults>
</compile_context>

<pallas_src>
import functools
import math

import jax
import jax.numpy as jnp
from jax.experimental import pallas as pl
from jax.experimental.pallas import tpu as pltpu


# ------------------------------ small helpers -------------------------------

def _row_grid(n_rows):
    """2 parallel grid steps when rows split into >=8-row blocks (v7x 2 TCs)."""
    return 2 if (n_rows % 16 == 0 and n_rows >= 16) else 1


def _ln(x, g, b, eps=1e-5):
    """LayerNorm over the last dim (biased variance, PyTorch eps)."""
    mu = jnp.mean(x, axis=-1, keepdims=True)
    var = jnp.mean((x - mu) ** 2, axis=-1, keepdims=True)
    return (x - mu) * jax.lax.rsqrt(var + eps) * g + b


# ------------------------------ Pallas kernels -------------------------------

def _linear_kernel(x_ref, w_ref, b_ref, o_ref):
    y = jnp.dot(x_ref[...], w_ref[...], preferred_element_type=jnp.float32) + b_ref[...]
    o_ref[...] = y.astype(o_ref.dtype)


def _linear_add_kernel(x_ref, w_ref, b_ref, r_ref, o_ref):
    y = jnp.dot(x_ref[...], w_ref[...], preferred_element_type=jnp.float32) + b_ref[...]
    o_ref[...] = (r_ref[...] + y).astype(o_ref.dtype)


def linear(x, w, b, residual=None):
    """y = x @ w + b (+ residual).  x: [N,K], w: [K,M], b: [M]."""
    N, K = x.shape
    M = w.shape[1]
    G = _row_grid(N)
    bn = N // G
    b2 = b.reshape(1, M)
    in_specs = [pl.BlockSpec((bn, K), lambda i: (i, 0)),
                pl.BlockSpec((K, M), lambda i: (0, 0)),
                pl.BlockSpec((1, M), lambda i: (0, 0))]
    args = [x, w, b2]
    kern = _linear_kernel
    if residual is not None:
        in_specs.append(pl.BlockSpec((bn, M), lambda i: (i, 0)))
        args.append(residual)
        kern = _linear_add_kernel
    return pl.pallas_call(
        kern,
        out_shape=jax.ShapeDtypeStruct((N, M), jnp.float32),
        grid=(G,),
        in_specs=in_specs,
        out_specs=pl.BlockSpec((bn, M), lambda i: (i, 0)),
        compiler_params=pltpu.CompilerParams(dimension_semantics=("parallel",)),
    )(*args)


def _gcn_kernel(x_ref, m_ref, w_ref, b_ref, o_ref):
    """Fused GCN block: grouped LayerNorm + (A-folded) graph conv + residual.

    x_ref: [N, V*C]; m_ref: [V*C, V*C] block-diagonal group-mean matrix;
    w_ref: [V*C, V*C] = diag(tile(gamma)) @ (sum_k W1x1 A); b_ref: [1, V*C]."""
    x = x_ref[...]
    m = m_ref[...]
    mu = jnp.dot(x, m, preferred_element_type=jnp.float32)          # per-vertex mean
    ex2 = jnp.dot(x * x, m, preferred_element_type=jnp.float32)     # per-vertex E[x^2]
    var = ex2 - mu * mu
    z = (x - mu) * jax.lax.rsqrt(var + 1e-5)
    y = jnp.dot(z, w_ref[...], preferred_element_type=jnp.float32) + b_ref[...]
    o_ref[...] = (x + y).astype(o_ref.dtype)


def gcn_block(x, p):
    N, VC = x.shape
    G = _row_grid(N)
    bn = N // G
    return pl.pallas_call(
        _gcn_kernel,
        out_shape=jax.ShapeDtypeStruct((N, VC), jnp.float32),
        grid=(G,),
        in_specs=[pl.BlockSpec((bn, VC), lambda i: (i, 0)),
                  pl.BlockSpec((VC, VC), lambda i: (0, 0)),
                  pl.BlockSpec((VC, VC), lambda i: (0, 0)),
                  pl.BlockSpec((1, VC), lambda i: (0, 0))],
        out_specs=pl.BlockSpec((bn, VC), lambda i: (i, 0)),
        compiler_params=pltpu.CompilerParams(dimension_semantics=("parallel",)),
    )(x, p["gmean"], p["w"], p["b"])


def _ln_ff_kernel(x_ref, g_ref, b_ref, w1_ref, b1_ref, w2_ref, b2_ref, o_ref):
    """Fused FeedForward block: LN -> W1 -> SquaredReLU -> W2 -> +residual."""
    x = x_ref[...]
    z = _ln(x, g_ref[...], b_ref[...])
    h = jnp.dot(z, w1_ref[...], preferred_element_type=jnp.float32) + b1_ref[...]
    h = jnp.maximum(h, 0.0)
    h = h * h                                                        # SquaredReLU
    y = jnp.dot(h, w2_ref[...], preferred_element_type=jnp.float32) + b2_ref[...]
    o_ref[...] = (x + y).astype(o_ref.dtype)


def ff_block(x, p):
    N, D = x.shape
    H = p["w1"].shape[1]
    G = _row_grid(N)
    bn = N // G
    return pl.pallas_call(
        _ln_ff_kernel,
        out_shape=jax.ShapeDtypeStruct((N, D), jnp.float32),
        grid=(G,),
        in_specs=[pl.BlockSpec((bn, D), lambda i: (i, 0)),
                  pl.BlockSpec((1, D), lambda i: (0, 0)),
                  pl.BlockSpec((1, D), lambda i: (0, 0)),
                  pl.BlockSpec((D, H), lambda i: (0, 0)),
                  pl.BlockSpec((1, H), lambda i: (0, 0)),
                  pl.BlockSpec((H, D), lambda i: (0, 0)),
                  pl.BlockSpec((1, D), lambda i: (0, 0))],
        out_specs=pl.BlockSpec((bn, D), lambda i: (i, 0)),
        compiler_params=pltpu.CompilerParams(dimension_semantics=("parallel",)),
    )(x, p["g"], p["b"], p["w1"], p["b1"], p["w2"], p["b2"])


def _ln_qkv_dwconv_kernel(x_ref, g_ref, b_ref, w_ref, bias_ref, cw_ref, cb_ref,
                          o_ref, pad_ref, *, batch):
    """Fused: LayerNorm + [D,3D] QKV projection + causal depthwise conv (k=3).

    Rows are (t, b) with t major, so the previous time step is `batch` rows up.
    Taps: y[t] = cw0*x[t-2] + cw1*x[t-1] + cw2*x[t] + cb  (zero-padded past)."""
    x = x_ref[...]
    z = _ln(x, g_ref[...], b_ref[...])
    qkv = jnp.dot(z, w_ref[...], preferred_element_type=jnp.float32) + bias_ref[...]
    SB, D3 = qkv.shape
    B = batch
    pad_ref[pl.ds(0, 2 * B), :] = jnp.zeros((2 * B, D3), jnp.float32)   # causal pad
    pad_ref[pl.ds(2 * B, SB), :] = qkv
    cw = cw_ref[...]
    y = (cw[0:1, :] * pad_ref[pl.ds(0, SB), :]          # x_{t-2}
         + cw[1:2, :] * pad_ref[pl.ds(B, SB), :]        # x_{t-1}
         + cw[2:3, :] * pad_ref[pl.ds(2 * B, SB), :]    # x_t
         + cb_ref[...])
    o_ref[...] = y.astype(o_ref.dtype)


def ln_qkv_dwconv(x, p, batch):
    SB, D = x.shape
    D3 = p["w_qkv"].shape[1]
    return pl.pallas_call(
        functools.partial(_ln_qkv_dwconv_kernel, batch=batch),
        out_shape=jax.ShapeDtypeStruct((SB, D3), jnp.float32),
        grid=(1,),
        in_specs=[pl.BlockSpec((SB, D), lambda i: (0, 0)),
                  pl.BlockSpec((1, D), lambda i: (0, 0)),
                  pl.BlockSpec((1, D), lambda i: (0, 0)),
                  pl.BlockSpec((D, D3), lambda i: (0, 0)),
                  pl.BlockSpec((1, D3), lambda i: (0, 0)),
                  pl.BlockSpec((3, D3), lambda i: (0, 0)),
                  pl.BlockSpec((1, D3), lambda i: (0, 0))],
        out_specs=pl.BlockSpec((SB, D3), lambda i: (0, 0)),
        scratch_shapes=[pltpu.VMEM((SB + 2 * batch, D3), jnp.float32)],
        compiler_params=pltpu.CompilerParams(dimension_semantics=("arbitrary",)),
    )(x, p["ln_g"], p["ln_b"], p["w_qkv"], p["b_qkv"], p["cw"], p["cb"])


def _attention_kernel(q_ref, k_ref, v_ref, o_ref, *, scale):
    """Batched softmax(q k^T * scale) v over a block of (batch*heads)."""
    q = q_ref[...]
    k = k_ref[...]
    v = v_ref[...]
    s = jnp.einsum("bqd,bkd->bqk", q, k, preferred_element_type=jnp.float32) * scale
    m = jnp.max(s, axis=-1, keepdims=True)
    p = jnp.exp(s - m)
    inv = pl.reciprocal(jnp.sum(p, axis=-1, keepdims=True), approx=True)  # EUP
    o = jnp.einsum("bqk,bkd->bqd", p, v, preferred_element_type=jnp.float32)
    o_ref[...] = (o * inv).astype(o_ref.dtype)


def attention(q, k, v, scale):
    BH, S, Dk = q.shape
    G = 2 if BH % 2 == 0 else 1
    bb = BH // G
    return pl.pallas_call(
        functools.partial(_attention_kernel, scale=scale),
        out_shape=jax.ShapeDtypeStruct((BH, S, Dk), jnp.float32),
        grid=(G,),
        in_specs=[pl.BlockSpec((bb, S, Dk), lambda i: (i, 0, 0))] * 3,
        out_specs=pl.BlockSpec((bb, S, Dk), lambda i: (i, 0, 0)),
        compiler_params=pltpu.CompilerParams(dimension_semantics=("parallel",)),
    )(q, k, v)


# --------------------------- model building blocks ---------------------------

def mha_block(p, x, seq, batch, heads):
    """Pre-norm MultiDConvHeadAttention with residual.  x: [seq*batch, D]."""
    SB, D = x.shape
    Dk = D // heads
    qkv = ln_qkv_dwconv(x, p, batch)                              # [S*B, 3D]
    qkv = qkv.reshape(seq, batch, 3, heads, Dk)
    qkv = qkv.transpose(2, 1, 3, 0, 4).reshape(3, batch * heads, seq, Dk)
    o = attention(qkv[0], qkv[1], qkv[2], 1.0 / math.sqrt(Dk))    # [BH, S, Dk]
    o = o.reshape(batch, heads, seq, Dk).transpose(2, 0, 1, 3).reshape(SB, D)
    return linear(o, p["w_o"], p["b_o"], residual=x)              # out proj + residual


def positional_encoding(seq_len, d_model):
    pos = jnp.arange(seq_len, dtype=jnp.float32)[:, None]
    i = jnp.arange(0, d_model, 2, dtype=jnp.float32)
    div = jnp.exp(-math.log(10000.0) * i / d_model)
    pe = jnp.zeros((seq_len, d_model), jnp.float32)
    pe = pe.at[:, 0::2].set(jnp.sin(pos * div))
    pe = pe.at[:, 1::2].set(jnp.cos(pos * div))
    return pe                                                     # [S, d_model]


def prepare_params(params, A, *, heads, n_vertices, d_model):
    """Fold module parameters into the fused-kernel form:
       * concat Q/K/V weights, tile depthwise-conv taps over heads & projections;
       * fold A and LayerNorm gamma/beta into the GCN 1x1-conv weight;
       * fold per-vertex emb_x / out Linears into block-diagonal matmuls."""
    V = n_vertices
    C = d_model // V
    K = A.shape[0]
    eye_v = jnp.eye(V, dtype=jnp.float32)
    gmean = jnp.kron(eye_v, jnp.full((C, C), 1.0 / C, jnp.float32))

    def prep_mha(mha, ln):
        w_qkv = jnp.concatenate([mha["q"]["w"], mha["k"]["w"], mha["v"]["w"]], axis=1)
        b_qkv = jnp.concatenate([mha["q"]["b"], mha["k"]["b"], mha["v"]["b"]])
        cw = jnp.concatenate([jnp.tile(mha[n]["cw"].T, (1, heads))
                              for n in ("q", "k", "v")], axis=1)          # [3, 3D]
        cb = jnp.concatenate([jnp.tile(mha[n]["cb"], heads)
                              for n in ("q", "k", "v")])                  # [3D]
        return {"ln_g": ln["g"].reshape(1, d_model),
                "ln_b": ln["b"].reshape(1, d_model),
                "w_qkv": w_qkv, "b_qkv": b_qkv.reshape(1, -1),
                "cw": cw, "cb": cb.reshape(1, -1),
                "w_o": mha["o"]["w"], "b_o": mha["o"]["b"]}

    def prep_ff(ff, ln):
        return {"g": ln["g"].reshape(1, d_model), "b": ln["b"].reshape(1, d_model),
                "w1": ff["w1"], "b1": ff["b1"].reshape(1, -1),
                "w2": ff["w2"], "b2": ff["b2"].reshape(1, -1)}

    def prep_gcn(gcn, ln):
        w3 = gcn["w"].reshape(C, K, C)                                    # [C, k, C']
        bmat = jnp.einsum("kvw,ckd->vcwd", A, w3).reshape(V * C, V * C)
        b_fold = jnp.einsum("kvw,kd->wd", A, gcn["b"].reshape(K, C)).reshape(V * C)
        g_t = jnp.tile(ln["g"], V)
        beta_t = jnp.tile(ln["b"], V)
        return {"gmean": gmean,
                "w": g_t[:, None] * bmat,
                "b": (beta_t @ bmat + b_fold).reshape(1, V * C)}

    layers = []
    for lp in params["layers"]:
        d = {"gcn": prep_gcn(lp["gcn"], lp["norm_gcn"]),
             "self_attn": prep_mha(lp["self_attn"], lp["norm_self_attn"]),
             "self_attn_mem": prep_mha(lp["self_attn_mem"], lp["norm_self_attn_mem"]),
             "cross_attn": prep_mha(lp["cross_attn"], lp["norm_cross_attn"]),
             "ff": prep_ff(lp["ff"], lp["norm_ff"])}
        if "ff_mem" in lp:
            d["ff_mem"] = prep_ff(lp["ff_mem"], lp["norm_ff_mem"])
        layers.append(d)

    return {"emb_x": {"w": jnp.kron(eye_v, params["emb_x"]["w"]),
                      "b": jnp.tile(params["emb_x"]["b"], V)},
            "emb_mem": {"w": params["emb_mem"]["w"], "b": params["emb_mem"]["b"]},
            "out": {"w": jnp.kron(eye_v, params["out"]["w"]),
                    "b": jnp.tile(params["out"]["b"], V)},
            "layers": layers}


def cross_attention_gcn_forward(params, x, memory, A, *, heads, n_vertices):
    """CrossAttentionGCN.forward.  x: [T,B,d_x], memory: [Tm,B,d_memory]."""
    T, B, d_x = x.shape
    Tm, _, d_mem = memory.shape
    d_model = params["emb_mem"]["w"].shape[1]
    prep = prepare_params(params, A, heads=heads, n_vertices=n_vertices,
                          d_model=d_model)

    pe = positional_encoding(T + Tm, d_model)
    pe_x = jnp.broadcast_to(pe[:T, None, :], (T, B, d_model)).reshape(T * B, d_model)
    pe_m = jnp.broadcast_to(pe[T:, None, :], (Tm, B, d_model)).reshape(Tm * B, d_model)

    # per-vertex emb_x (block-diag) / emb_mem; positional encoding fused as residual
    xf = linear(x.reshape(T * B, d_x), prep["emb_x"]["w"], prep["emb_x"]["b"],
                residual=pe_x)
    mf = linear(memory.reshape(Tm * B, d_mem), prep["emb_mem"]["w"],
                prep["emb_mem"]["b"], residual=pe_m)

    for lp in prep["layers"]:
        xf = gcn_block(xf, lp["gcn"])                                  # norm_gcn + GCN + res
        xf = mha_block(lp["self_attn"], xf, T, B, heads)               # self-attn + res
        mf = mha_block(lp["self_attn_mem"], mf, Tm, B, heads)          # mem self-attn + res
        h = jnp.concatenate([xf.reshape(T, B, d_model),
                             mf.reshape(Tm, B, d_model)], axis=0)
        h = mha_block(lp["cross_attn"], h.reshape((T + Tm) * B, d_model),
                      T + Tm, B, heads)                                # cross-attn + res
        h = h.reshape(T + Tm, B, d_model)
        xf = h[:T].reshape(T * B, d_model)
        mf = h[T:].reshape(Tm * B, d_model)
        xf = ff_block(xf, lp["ff"])                                    # FF + res
        if "ff_mem" in lp:
            mf = ff_block(mf, lp["ff_mem"])

    out = linear(xf, prep["out"]["w"], prep["out"]["b"])               # per-vertex out Linear
    return out.reshape(T, B, -1)


# -------------------------------- parameters ---------------------------------

def _xavier(key, shape):
    lim = math.sqrt(6.0 / (shape[0] + shape[1]))
    return jax.random.uniform(key, shape, jnp.float32, -lim, lim)


def _ln_params(d):
    return {"g": jnp.ones((d,), jnp.float32), "b": jnp.zeros((d,), jnp.float32)}


def _init_mha(key, d_model, heads):
    d_k = d_model // heads
    ks = jax.random.split(key, 7)

    def proj(k1, k2):
        return {"w": _xavier(k1, (d_model, d_model)),
                "b": jnp.zeros((d_model,), jnp.float32),
                "cw": 0.3 * jax.random.normal(k2, (d_k, 3), jnp.float32),
                "cb": jnp.zeros((d_k,), jnp.float32)}

    return {"q": proj(ks[0], ks[1]), "k": proj(ks[2], ks[3]), "v": proj(ks[4], ks[5]),
            "o": {"w": _xavier(ks[6], (d_model, d_model)),
                  "b": jnp.zeros((d_model,), jnp.float32)}}


def _init_ff(key, d_model, d_ff):
    k1, k2 = jax.random.split(key)
    return {"w1": _xavier(k1, (d_model, d_ff)), "b1": jnp.zeros((d_ff,), jnp.float32),
            "w2": _xavier(k2, (d_ff, d_model)), "b2": jnp.zeros((d_model,), jnp.float32)}


def _init_layer(key, d_model, V, K, heads, d_ff, with_ff_mem):
    C = d_model // V
    ks = jax.random.split(key, 6)
    p = {"norm_gcn": _ln_params(C),
         "gcn": {"w": _xavier(ks[0], (C, K * C)),
                 "b": jnp.zeros((K * C,), jnp.float32)},
         "norm_self_attn": _ln_params(d_model),
         "self_attn": _init_mha(ks[1], d_model, heads),
         "norm_self_attn_mem": _ln_params(d_model),
         "self_attn_mem": _init_mha(ks[2], d_model, heads),
         "norm_cross_attn": _ln_params(d_model),
         "cross_attn": _init_mha(ks[3], d_model, heads),
         "norm_ff": _ln_params(d_model), "ff": _init_ff(ks[4], d_model, d_ff)}
    if with_ff_mem:
        p["norm_ff_mem"] = _ln_params(d_model)
        p["ff_mem"] = _init_ff(ks[5], d_model, d_ff)
    return p


def init_params(key, *, d_x, d_memory, d_model, d_out, heads, n_layers, V, K, d_ff):
    ks = jax.random.split(key, 3 + n_layers)
    layers = []
    for i in range(n_layers):
        # All layers except the last one have a memory feed-forward branch.
        layers.append(_init_layer(ks[3 + i], d_model, V, K, heads, d_ff,
                                  with_ff_mem=(i != n_layers - 1)))
    return {"emb_x": {"w": _xavier(ks[0], (d_x // V, d_model // V)),
                      "b": jnp.zeros((d_model // V,), jnp.float32)},
            "emb_mem": {"w": _xavier(ks[1], (d_memory, d_model)),
                        "b": jnp.zeros((d_model,), jnp.float32)},
            "layers": layers,
            "out": {"w": _xavier(ks[2], (d_model // V, d_out // V)),
                    "b": jnp.zeros((d_out // V,), jnp.float32)}}


def build_graph_A(V):
    # TODO(synk): Graph('beat', 'spatial') adjacency definition is not available;
    # use a deterministic ring graph with 3 spatial partitions (self/fwd/bwd).
    I = jnp.eye(V, dtype=jnp.float32)
    fwd = jnp.roll(I, 1, axis=1)
    bwd = jnp.roll(I, -1, axis=1)
    return jnp.stack([I, fwd, bwd], axis=0)   # [K=3, V, V]


# ----------------------------------- main ------------------------------------

if __name__ == "__main__":
    T, Tm, B = 8, 8, 2
    d_x, d_memory, d_model, heads, n_layers = 32, 16, 32, 4, 2
    V = 4                         # n_vertices (from the synthetic graph)
    K = 3                         # n_graphs = A.shape[0]
    d_ff = 4 * d_model            # TODO(synk): FeedForward hidden size not given; assume 4*d_model
    d_out = d_model

    key = jax.random.PRNGKey(0)
    k_x, k_m, k_p = jax.random.split(key, 3)
    x = jax.random.normal(k_x, (T, B, d_x), jnp.float32)
    memory = jax.random.normal(k_m, (Tm, B, d_memory), jnp.float32)

    A = build_graph_A(V)
    params = init_params(k_p, d_x=d_x, d_memory=d_memory, d_model=d_model,
                         d_out=d_out, heads=heads, n_layers=n_layers,
                         V=V, K=K, d_ff=d_ff)

    fwd = jax.jit(functools.partial(cross_attention_gcn_forward,
                                    heads=heads, n_vertices=V))
    out = fwd(params, x, memory, A)
    out = jax.block_until_ready(out)
    assert out.shape == (T, B, d_out), out.shape
    assert bool(jnp.all(jnp.isfinite(out)))
    print("KERNEL_OK")
</pallas_src>

<mosaic_0001>
module attributes {stable_mosaic.version = 11 : i64} {
  func.func @_linear_add_kernel(%arg0: i32, %arg1: memref<8x16xf32, #tpu.memory_space<vmem>>, %arg2: memref<16x32xf32, #tpu.memory_space<vmem>>, %arg3: memref<1x32xf32, #tpu.memory_space<vmem>>, %arg4: memref<8x32xf32, #tpu.memory_space<vmem>>, %arg5: memref<8x32xf32, #tpu.memory_space<vmem>>) attributes {dimension_semantics = [#tpu.dimension_semantics<parallel>], iteration_bounds = array<i64: 2>, scalar_prefetch = 0 : i64, scratch_operands = 0 : i64, tpu.core_type = #tpu.core_type<tc>, window_params = [{transform_indices = @transform_0, window_bounds = array<i64: 8, 16>}, {pipeline_mode = #tpu.pipeline_mode<synchronous>, transform_indices = @transform_1, window_bounds = array<i64: 16, 32>}, {pipeline_mode = #tpu.pipeline_mode<synchronous>, transform_indices = @transform_2, window_bounds = array<i64: 1, 32>}, {transform_indices = @transform_3, window_bounds = array<i64: 8, 32>}, {transform_indices = @transform_4, window_bounds = array<i64: 8, 32>}]} {
    %c0 = arith.constant 0 : index
    %c0_0 = arith.constant 0 : index
    %0 = vector.load %arg1[%c0, %c0_0] : memref<8x16xf32, #tpu.memory_space<vmem>>, vector<8x16xf32>
    %c0_1 = arith.constant 0 : index
    %c0_2 = arith.constant 0 : index
    %1 = vector.load %arg2[%c0_1, %c0_2] : memref<16x32xf32, #tpu.memory_space<vmem>>, vector<16x32xf32>
    %cst = arith.constant dense<0.000000e+00> : vector<8x32xf32>
    %2 = tpu.matmul %0, %1, %cst {dimension_numbers = #tpu.dot_dimension_numbers<[1], [0], [0], [1], [0, 0, 1, 1], [], []>} : vector<8x16xf32>, vector<16x32xf32>, vector<8x32xf32> -> vector<8x32xf32>
    %c0_3 = arith.constant 0 : index
    %c0_4 = arith.constant 0 : index
    %3 = vector.load %arg3[%c0_3, %c0_4] : memref<1x32xf32, #tpu.memory_space<vmem>>, vector<1x32xf32>
    %4 = vector.broadcast %3 : vector<1x32xf32> to vector<8x32xf32>
    %5 = arith.addf %2, %4 : vector<8x32xf32>
    %c0_5 = arith.constant 0 : index
    %c0_6 = arith.constant 0 : index
    %6 = vector.load %arg4[%c0_5, %c0_6] : memref<8x32xf32, #tpu.memory_space<vmem>>, vector<8x32xf32>
    %7 = arith.addf %6, %5 : vector<8x32xf32>
    %c0_7 = arith.constant 0 : index
    %c0_8 = arith.constant 0 : index
    %8 = vector.load %arg5[%c0_7, %c0_8] : memref<8x32xf32, #tpu.memory_space<vmem>>, vector<8x32xf32>
    tpu.vector_store %arg5[%c0_7, %c0_8], %7 {strides = array<i32>} : memref<8x32xf32, #tpu.memory_space<vmem>>, vector<8x32xf32>,
    return
  }
  func.func @transform_0(%arg0: i32) -> (i32, i32) {
    %c0_i32 = arith.constant 0 : i32
    %c0_i32_0 = arith.constant 0 : i32
    return %arg0, %c0_i32 : i32, i32
  }
  func.func @transform_1(%arg0: i32) -> (i32, i32) {
    %c0_i32 = arith.constant 0 : i32
    %c0_i32_0 = arith.constant 0 : i32
    %c0_i32_1 = arith.constant 0 : i32
    return %c0_i32, %c0_i32_0 : i32, i32
  }
  func.func @transform_2(%arg0: i32) -> (i32, i32) {
    %c0_i32 = arith.constant 0 : i32
    %c0_i32_0 = arith.constant 0 : i32
    %c0_i32_1 = arith.constant 0 : i32
    return %c0_i32, %c0_i32_0 : i32, i32
  }
  func.func @transform_3(%arg0: i32) -> (i32, i32) {
    %c0_i32 = arith.constant 0 : i32
    %c0_i32_0 = arith.constant 0 : i32
    return %arg0, %c0_i32 : i32, i32
  }
  func.func @transform_4(%arg0: i32) -> (i32, i32) {
    %c0_i32 = arith.constant 0 : i32
    %c0_i32_0 = arith.constant 0 : i32
    return %arg0, %c0_i32 : i32, i32
  }
}

module attributes {stable_mosaic.version = 11 : i64} {
  func.func @_ln_qkv_dwconv_kernel(%arg0: i32, %arg1: memref<16x32xf32, #tpu.memory_space<vmem>>, %arg2: memref<1x32xf32, #tpu.memory_space<vmem>>, %arg3: memref<1x32xf32, #tpu.memory_space<vmem>>, %arg4: memref<32x96xf32, #tpu.memory_space<vmem>>, %arg5: memref<1x96xf32, #tpu.memory_space<vmem>>, %arg6: memref<3x96xf32, #tpu.memory_space<vmem>>, %arg7: memref<1x96xf32, #tpu.memory_space<vmem>>, %arg8: memref<16x96xf32, #tpu.memory_space<vmem>>, %arg9: memref<20x96xf32, #tpu.memory_space<vmem>>) attributes {dimension_semantics = [#tpu.dimension_semantics<arbitrary>], iteration_bounds = array<i64: 1>, scalar_prefetch = 0 : i64, scratch_operands = 1 : i64, tpu.core_type = #tpu.core_type<tc>, window_params = [{pipeline_mode = #tpu.pipeline_mode<synchronous>, transform_indices = @transform_0, window_bounds = array<i64: 16, 32>}, {pipeline_mode = #tpu.pipeline_mode<synchronous>, transform_indices = @transform_1, window_bounds = array<i64: 1, 32>}, {pipeline_mode = #tpu.pipeline_mode<synchronous>, transform_indices = @transform_2, window_bounds = array<i64: 1, 32>}, {pipeline_mode = #tpu.pipeline_mode<synchronous>, transform_indices = @transform_3, window_bounds = array<i64: 32, 96>}, {pipeline_mode = #tpu.pipeline_mode<synchronous>, transform_indices = @transform_4, window_bounds = array<i64: 1, 96>}, {pipeline_mode = #tpu.pipeline_mode<synchronous>, transform_indices = @transform_5, window_bounds = array<i64: 3, 96>}, {pipeline_mode = #tpu.pipeline_mode<synchronous>, transform_indices = @transform_6, window_bounds = array<i64: 1, 96>}, {pipeline_mode = #tpu.pipeline_mode<synchronous>, transform_indices = @transform_7, window_bounds = array<i64: 16, 96>}]} {
    %c0 = arith.constant 0 : index
    %c0_0 = arith.constant 0 : index
    %0 = vector.load %arg1[%c0, %c0_0] : memref<16x32xf32, #tpu.memory_space<vmem>>, vector<16x32xf32>
    %c0_1 = arith.constant 0 : index
    %c0_2 = arith.constant 0 : index
    %1 = vector.load %arg2[%c0_1, %c0_2] : memref<1x32xf32, #tpu.memory_space<vmem>>, vector<1x32xf32>
    %c0_3 = arith.constant 0 : index
    %c0_4 = arith.constant 0 : index
    %2 = vector.load %arg3[%c0_3, %c0_4] : memref<1x32xf32, #tpu.memory_space<vmem>>, vector<1x32xf32>
    %cst = arith.constant dense<0.000000e+00> : vector<16xf32>
    %3 = vector.multi_reduction <add>, %0, %cst [1] : vector<16x32xf32> to vector<16xf32>
    %4 = vector.shape_cast %3 : vector<16xf32> to vector<16x1xf32>
    %cst_5 = arith.constant 3.200000e+01 : f32
    %5 = vector.broadcast %cst_5 : f32 to vector<16x1xf32>
    %6 = arith.divf %4, %5 : vector<16x1xf32>
    %7 = vector.broadcast %6 : vector<16x1xf32> to vector<16x32xf32>
    %8 = arith.subf %0, %7 : vector<16x32xf32>
    %9 = arith.mulf %8, %8 : vector<16x32xf32>
    %cst_6 = arith.constant dense<0.000000e+00> : vector<16xf32>
    %10 = vector.multi_reduction <add>, %9, %cst_6 [1] : vector<16x32xf32> to vector<16xf32>
    %11 = vector.shape_cast %10 : vector<16xf32> to vector<16x1xf32>
    %cst_7 = arith.constant 3.200000e+01 : f32
    %12 = vector.broadcast %cst_7 : f32 to vector<16x1xf32>
    %13 = arith.divf %11, %12 : vector<16x1xf32>
    %14 = vector.broadcast %6 : vector<16x1xf32> to vector<16x32xf32>
    %15 = arith.subf %0, %14 : vector<16x32xf32>
    %cst_8 = arith.constant 9.99999974E-6 : f32
    %16 = vector.broadcast %cst_8 : f32 to vector<16x1xf32>
    %17 = arith.addf %13, %16 : vector<16x1xf32>
    %18 = math.rsqrt %17 : vector<16x1xf32>
    %19 = vector.broadcast %18 : vector<16x1xf32> to vector<16x32xf32>
    %20 = arith.mulf %15, %19 : vector<16x32xf32>
    %21 = vector.broadcast %1 : vector<1x32xf32> to vector<16x32xf32>
    %22 = arith.mulf %20, %21 : vector<16x32xf32>
    %23 = vector.broadcast %2 : vector<1x32xf32> to vector<16x32xf32>
    %24 = arith.addf %22, %23 : vector<16x32xf32>
    %c0_9 = arith.constant 0 : index
    %c0_10 = arith.constant 0 : index
    %25 = vector.load %arg4[%c0_9, %c0_10] : memref<32x96xf32, #tpu.memory_space<vmem>>, vector<32x96xf32>
    %cst_11 = arith.constant dense<0.000000e+00> : vector<16x96xf32>
    %26 = tpu.matmul %24, %25, %cst_11 {dimension_numbers = #tpu.dot_dimension_numbers<[1], [0], [0], [1], [0, 0, 1, 1], [], []>} : vector<16x32xf32>, vector<32x96xf32>, vector<16x96xf32> -> vector<16x96xf32>
    %c0_12 = arith.constant 0 : index
    %c0_13 = arith.constant 0 : index
    %27 = vector.load %arg5[%c0_12, %c0_13] : memref<1x96xf32, #tpu.memory_space<vmem>>, vector<1x96xf32>
    %28 = vector.broadcast %27 : vector<1x96xf32> to vector<16x96xf32>
    %29 = arith.addf %26, %28 : vector<16x96xf32>
    %cst_14 = arith.constant 0.000000e+00 : f32
    %30 = vector.broadcast %cst_14 : f32 to vector<4x96xf32>
    %c0_15 = arith.constant 0 : index
    %c0_16 = arith.constant 0 : index
    %31 = vector.load %arg9[%c0_15, %c0_16] : memref<20x96xf32, #tpu.memory_space<vmem>>, vector<4x96xf32>
    tpu.vector_store %arg9[%c0_15, %c0_16], %30 {strides = array<i32>} : memref<20x96xf32, #tpu.memory_space<vmem>>, vector<4x96xf32>,
    %c4 = arith.constant 4 : index
    %c0_17 = arith.constant 0 : index
    %32 = vector.load %arg9[%c4, %c0_17] : memref<20x96xf32, #tpu.memory_space<vmem>>, vector<16x96xf32>
    tpu.vector_store %arg9[%c4, %c0_17], %29 {strides = array<i32>} : memref<20x96xf32, #tpu.memory_space<vmem>>, vector<16x96xf32>,
    %c0_18 = arith.constant 0 : index
    %c0_19 = arith.constant 0 : index
    %33 = vector.load %arg6[%c0_18, %c0_19] : memref<3x96xf32, #tpu.memory_space<vmem>>, vector<3x96xf32>
    %34 = vector.extract_strided_slice %33 {offsets = [0, 0], sizes = [1, 96], strides = [1, 1]} : vector<3x96xf32> to vector<1x96xf32>
    %c0_20 = arith.constant 0 : index
    %c0_21 = arith.constant 0 : index
    %35 = vector.load %arg9[%c0_20, %c0_21] : memref<20x96xf32, #tpu.memory_space<vmem>>, vector<16x96xf32>
    %36 = vector.broadcast %34 : vector<1x96xf32> to vector<16x96xf32>
    %37 = arith.mulf %36, %35 : vector<16x96xf32>
    %38 = vector.extract_strided_slice %33 {offsets = [1, 0], sizes = [1, 96], strides = [1, 1]} : vector<3x96xf32> to vector<1x96xf32>
    %c2 = arith.constant 2 : index
    %c0_22 = arith.constant 0 : index
    %39 = vector.load %arg9[%c2, %c0_22] : memref<20x96xf32, #tpu.memory_space<vmem>>, vector<16x96xf32>
    %40 = vector.broadcast %38 : vector<1x96xf32> to vector<16x96xf32>
    %41 = arith.mulf %40, %39 : vector<16x96xf32>
    %42 = arith.addf %37, %41 : vector<16x96xf32>
    %43 = vector.extract_strided_slice %33 {offsets = [2, 0], sizes = [1, 96], strides = [1, 1]} : vector<3x96xf32> to vector<1x96xf32>
    %c4_23 = arith.constant 4 : index
    %c0_24 = arith.constant 0 : index
    %44 = vector.load %arg9[%c4_23, %c0_24] : memref<20x96xf32, #tpu.memory_space<vmem>>, vector<16x96xf32>
    %45 = vector.broadcast %43 : vector<1x96xf32> to vector<16x96xf32>
    %46 = arith.mulf %45, %44 : vector<16x96xf32>
    %47 = arith.addf %42, %46 : vector<16x96xf32>
    %c0_25 = arith.constant 0 : index
    %c0_26 = arith.constant 0 : index
    %48 = vector.load %arg7[%c0_25, %c0_26] : memref<1x96xf32, #tpu.memory_space<vmem>>, vector<1x96xf32>
    %49 = vector.broadcast %48 : vector<1x96xf32> to vector<16x96xf32>
    %50 = arith.addf %47, %49 : vector<16x96xf32>
    %c0_27 = arith.constant 0 : index
    %c0_28 = arith.constant 0 : index
    %51 = vector.load %arg8[%c0_27, %c0_28] : memref<16x96xf32, #tpu.memory_space<vmem>>, vector<16x96xf32>
    tpu.vector_store %arg8[%c0_27, %c0_28], %50 {strides = array<i32>} : memref<16x96xf32, #tpu.memory_space<vmem>>, vector<16x96xf32>,
    return
  }
  func.func @transform_0(%arg0: i32) -> (i32, i32) {
    %c0_i32 = arith.constant 0 : i32
    %c0_i32_0 = arith.constant 0 : i32
    %c0_i32_1 = arith.constant 0 : i32
    return %c0_i32, %c0_i32_0 : i32, i32
  }
  func.func @transform_1(%arg0: i32) -> (i32, i32) {
    %c0_i32 = arith.constant 0 : i32
    %c0_i32_0 = arith.constant 0 : i32
    %c0_i32_1 = arith.constant 0 : i32
    return %c0_i32, %c0_i32_0 : i32, i32
  }
  func.func @transform_2(%arg0: i32) -> (i32, i32) {
    %c0_i32 = arith.constant 0 : i32
    %c0_i32_0 = arith.constant 0 : i32
    %c0_i32_1 = arith.constant 0 : i32
    return %c0_i32, %c0_i32_0 : i32, i32
  }
  func.func @transform_3(%arg0: i32) -> (i32, i32) {
    %c0_i32 = arith.constant 0 : i32
    %c0_i32_0 = arith.constant 0 : i32
    %c0_i32_1 = arith.constant 0 : i32
    return %c0_i32, %c0_i32_0 : i32, i32
  }
  func.func @transform_4(%arg0: i32) -> (i32, i32) {
    %c0_i32 = arith.constant 0 : i32
    %c0_i32_0 = arith.constant 0 : i32
    %c0_i32_1 = arith.constant 0 : i32
    return %c0_i32, %c0_i32_0 : i32, i32
  }
  func.func @transform_5(%arg0: i32) -> (i32, i32) {
    %c0_i32 = arith.constant 0 : i32
    %c0_i32_0 = arith.constant 0 : i32
    %c0_i32_1 = arith.constant 0 : i32
    return %c0_i32, %c0_i32_0 : i32, i32
  }
  func.func @transform_6(%arg0: i32) -> (i32, i32) {
    %c0_i32 = arith.constant 0 : i32
    %c0_i32_0 = arith.constant 0 : i32
    %c0_i32_1 = arith.constant 0 : i32
    return %c0_i32, %c0_i32_0 : i32, i32
  }
  func.func @transform_7(%arg0: i32) -> (i32, i32) {
    %c0_i32 = arith.constant 0 : i32
    %c0_i32_0 = arith.constant 0 : i32
    %c0_i32_1 = arith.constant 0 : i32
    return %c0_i32, %c0_i32_0 : i32, i32
  }
}

module attributes {stable_mosaic.version = 11 : i64} {
  func.func @_attention_kernel(%arg0: i32, %arg1: memref<4x8x8xf32, #tpu.memory_space<vmem>>, %arg2: memref<4x8x8xf32, #tpu.memory_space<vmem>>, %arg3: memref<4x8x8xf32, #tpu.memory_space<vmem>>, %arg4: memref<4x8x8xf32, #tpu.memory_space<vmem>>) attributes {dimension_semantics = [#tpu.dimension_semantics<parallel>], iteration_bounds = array<i64: 2>, scalar_prefetch = 0 : i64, scratch_operands = 0 : i64, tpu.core_type = #tpu.core_type<tc>, window_params = [{transform_indices = @transform_0, window_bounds = array<i64: 4, 8, 8>}, {transform_indices = @transform_1, window_bounds = array<i64: 4, 8, 8>}, {transform_indices = @transform_2, window_bounds = array<i64: 4, 8, 8>}, {transform_indices = @transform_3, window_bounds = array<i64: 4, 8, 8>}]} {
    %c0 = arith.constant 0 : index
    %c0_0 = arith.constant 0 : index
    %c0_1 = arith.constant 0 : index
    %0 = vector.load %arg1[%c0, %c0_0, %c0_1] : memref<4x8x8xf32, #tpu.memory_space<vmem>>, vector<4x8x8xf32>
    %c0_2 = arith.constant 0 : index
    %c0_3 = arith.constant 0 : index
    %c0_4 = arith.constant 0 : index
    %1 = vector.load %arg2[%c0_2, %c0_3, %c0_4] : memref<4x8x8xf32, #tpu.memory_space<vmem>>, vector<4x8x8xf32>
    %c0_5 = arith.constant 0 : index
    %c0_6 = arith.constant 0 : index
    %c0_7 = arith.constant 0 : index
    %2 = vector.load %arg3[%c0_5, %c0_6, %c0_7] : memref<4x8x8xf32, #tpu.memory_space<vmem>>, vector<4x8x8xf32>
    "tpu.trace_start"() <{level = 10 : i32, message = "bqd,bkd->bqk"}> : () -> ()
    %cst = arith.constant dense<0.000000e+00> : vector<4x8x8xf32>
    %3 = tpu.matmul %0, %1, %cst {dimension_numbers = #tpu.dot_dimension_numbers<[2], [2], [1], [1], [0, 0, 0, 1, 1, 1], [0], [0]>} : vector<4x8x8xf32>, vector<4x8x8xf32>, vector<4x8x8xf32> -> vector<4x8x8xf32>
    "tpu.trace_stop"() : () -> ()
    %cst_8 = arith.constant 0.353553385 : f32
    %4 = vector.broadcast %cst_8 : f32 to vector<4x8x8xf32>
    %5 = arith.mulf %3, %4 : vector<4x8x8xf32>
    %cst_9 = arith.constant dense<0xFF800000> : vector<4x8xf32>
    %6 = vector.multi_reduction <maximumf>, %5, %cst_9 [2] : vector<4x8x8xf32> to vector<4x8xf32>
    %7 = vector.shape_cast %6 : vector<4x8xf32> to vector<4x8x1xf32>
    %8 = vector.broadcast %7 : vector<4x8x1xf32> to vector<4x8x8xf32>
    %9 = arith.subf %5, %8 : vector<4x8x8xf32>
    %10 = math.exp %9 : vector<4x8x8xf32>
    %cst_10 = arith.constant dense<0.000000e+00> : vector<4x8xf32>
    %11 = vector.multi_reduction <add>, %10, %cst_10 [2] : vector<4x8x8xf32> to vector<4x8xf32>
    %12 = vector.shape_cast %11 : vector<4x8xf32> to vector<4x8x1xf32>
    %13 = tpu.reciprocal %12 {approx = true} : vector<4x8x1xf32> -> vector<4x8x1xf32>
    "tpu.trace_start"() <{level = 10 : i32, message = "bqk,bkd->bqd"}> : () -> ()
    %cst_11 = arith.constant dense<0.000000e+00> : vector<4x8x8xf32>
    %14 = tpu.matmul %10, %2, %cst_11 {dimension_numbers = #tpu.dot_dimension_numbers<[2], [1], [1], [2], [0, 0, 0, 1, 1, 2], [0], [0]>} : vector<4x8x8xf32>, vector<4x8x8xf32>, vector<4x8x8xf32> -> vector<4x8x8xf32>
    "tpu.trace_stop"() : () -> ()
    %15 = vector.broadcast %13 : vector<4x8x1xf32> to vector<4x8x8xf32>
    %16 = arith.mulf %14, %15 : vector<4x8x8xf32>
    %c0_12 = arith.constant 0 : index
    %c0_13 = arith.constant 0 : index
    %c0_14 = arith.constant 0 : index
    %17 = vector.load %arg4[%c0_12, %c0_13, %c0_14] : memref<4x8x8xf32, #tpu.memory_space<vmem>>, vector<4x8x8xf32>
    tpu.vector_store %arg4[%c0_12, %c0_13, %c0_14], %16 {strides = array<i32>} : memref<4x8x8xf32, #tpu.memory_space<vmem>>, vector<4x8x8xf32>,
    return
  }
  func.func @transform_0(%arg0: i32) -> (i32, i32, i32) {
    %c0_i32 = arith.constant 0 : i32
    %c0_i32_0 = arith.constant 0 : i32
    %c0_i32_1 = arith.constant 0 : i32
    return %arg0, %c0_i32, %c0_i32_0 : i32, i32, i32
  }
  func.func @transform_1(%arg0: i32) -> (i32, i32, i32) {
    %c0_i32 = arith.constant 0 : i32
    %c0_i32_0 = arith.constant 0 : i32
    %c0_i32_1 = arith.constant 0 : i32
    return %arg0, %c0_i32, %c0_i32_0 : i32, i32, i32
  }
  func.func @transform_2(%arg0: i32) -> (i32, i32, i32) {
    %c0_i32 = arith.constant 0 : i32
    %c0_i32_0 = arith.constant 0 : i32
    %c0_i32_1 = arith.constant 0 : i32
    return %arg0, %c0_i32, %c0_i32_0 : i32, i32, i32
  }
  func.func @transform_3(%arg0: i32) -> (i32, i32, i32) {
    %c0_i32 = arith.constant 0 : i32
    %c0_i32_0 = arith.constant 0 : i32
    %c0_i32_1 = arith.constant 0 : i32
    return %arg0, %c0_i32, %c0_i32_0 : i32, i32, i32
  }
}

module attributes {stable_mosaic.version = 11 : i64} {
  func.func @_linear_add_kernel(%arg0: i32, %arg1: memref<8x32xf32, #tpu.memory_space<vmem>>, %arg2: memref<32x32xf32, #tpu.memory_space<vmem>>, %arg3: memref<1x32xf32, #tpu.memory_space<vmem>>, %arg4: memref<8x32xf32, #tpu.memory_space<vmem>>, %arg5: memref<8x32xf32, #tpu.memory_space<vmem>>) attributes {dimension_semantics = [#tpu.dimension_semantics<parallel>], iteration_bounds = array<i64: 2>, scalar_prefetch = 0 : i64, scratch_operands = 0 : i64, tpu.core_type = #tpu.core_type<tc>, window_params = [{transform_indices = @transform_0, window_bounds = array<i64: 8, 32>}, {pipeline_mode = #tpu.pipeline_mode<synchronous>, transform_indices = @transform_1, window_bounds = array<i64: 32, 32>}, {pipeline_mode = #tpu.pipeline_mode<synchronous>, transform_indices = @transform_2, window_bounds = array<i64: 1, 32>}, {transform_indices = @transform_3, window_bounds = array<i64: 8, 32>}, {transform_indices = @transform_4, window_bounds = array<i64: 8, 32>}]} {
    %c0 = arith.constant 0 : index
    %c0_0 = arith.constant 0 : index
    %0 = vector.load %arg1[%c0, %c0_0] : memref<8x32xf32, #tpu.memory_space<vmem>>, vector<8x32xf32>
    %c0_1 = arith.constant 0 : index
    %c0_2 = arith.constant 0 : index
    %1 = vector.load %arg2[%c0_1, %c0_2] : memref<32x32xf32, #tpu.memory_space<vmem>>, vector<32x32xf32>
    %cst = arith.constant dense<0.000000e+00> : vector<8x32xf32>
    %2 = tpu.matmul %0, %1, %cst {dimension_numbers = #tpu.dot_dimension_numbers<[1], [0], [0], [1], [0, 0, 1, 1], [], []>} : vector<8x32xf32>, vector<32x32xf32>, vector<8x32xf32> -> vector<8x32xf32>
    %c0_3 = arith.constant 0 : index
    %c0_4 = arith.constant 0 : index
    %3 = vector.load %arg3[%c0_3, %c0_4] : memref<1x32xf32, #tpu.memory_space<vmem>>, vector<1x32xf32>
    %4 = vector.broadcast %3 : vector<1x32xf32> to vector<8x32xf32>
    %5 = arith.addf %2, %4 : vector<8x32xf32>
    %c0_5 = arith.constant 0 : index
    %c0_6 = arith.constant 0 : index
    %6 = vector.load %arg4[%c0_5, %c0_6] : memref<8x32xf32, #tpu.memory_space<vmem>>, vector<8x32xf32>
    %7 = arith.addf %6, %5 : vector<8x32xf32>
    %c0_7 = arith.constant 0 : index
    %c0_8 = arith.constant 0 : index
    %8 = vector.load %arg5[%c0_7, %c0_8] : memref<8x32xf32, #tpu.memory_space<vmem>>, vector<8x32xf32>
    tpu.vector_store %arg5[%c0_7, %c0_8], %7 {strides = array<i32>} : memref<8x32xf32, #tpu.memory_space<vmem>>, vector<8x32xf32>,
    return
  }
  func.func @transform_0(%arg0: i32) -> (i32, i32) {
    %c0_i32 = arith.constant 0 : i32
    %c0_i32_0 = arith.constant 0 : i32
    return %arg0, %c0_i32 : i32, i32
  }
  func.func @transform_1(%arg0: i32) -> (i32, i32) {
    %c0_i32 = arith.constant 0 : i32
    %c0_i32_0 = arith.constant 0 : i32
    %c0_i32_1 = arith.constant 0 : i32
    return %c0_i32, %c0_i32_0 : i32, i32
  }
  func.func @transform_2(%arg0: i32) -> (i32, i32) {
    %c0_i32 = arith.constant 0 : i32
    %c0_i32_0 = arith.constant 0 : i32
    %c0_i32_1 = arith.constant 0 : i32
    return %c0_i32, %c0_i32_0 : i32, i32
  }
  func.func @transform_3(%arg0: i32) -> (i32, i32) {
    %c0_i32 = arith.constant 0 : i32
    %c0_i32_0 = arith.constant 0 : i32
    return %arg0, %c0_i32 : i32, i32
  }
  func.func @transform_4(%arg0: i32) -> (i32, i32) {
    %c0_i32 = arith.constant 0 : i32
    %c0_i32_0 = arith.constant 0 : i32
    return %arg0, %c0_i32 : i32, i32
  }
}

module attributes {stable_mosaic.version = 11 : i64} {
  func.func @_ln_qkv_dwconv_kernel(%arg0: i32, %arg1: memref<32x32xf32, #tpu.memory_space<vmem>>, %arg2: memref<1x32xf32, #tpu.memory_space<vmem>>, %arg3: memref<1x32xf32, #tpu.memory_space<vmem>>, %arg4: memref<32x96xf32, #tpu.memory_space<vmem>>, %arg5: memref<1x96xf32, #tpu.memory_space<vmem>>, %arg6: memref<3x96xf32, #tpu.memory_space<vmem>>, %arg7: memref<1x96xf32, #tpu.memory_space<vmem>>, %arg8: memref<32x96xf32, #tpu.memory_space<vmem>>, %arg9: memref<36x96xf32, #tpu.memory_space<vmem>>) attributes {dimension_semantics = [#tpu.dimension_semantics<arbitrary>], iteration_bounds = array<i64: 1>, scalar_prefetch = 0 : i64, scratch_operands = 1 : i64, tpu.core_type = #tpu.core_type<tc>, window_params = [{pipeline_mode = #tpu.pipeline_mode<synchronous>, transform_indices = @transform_0, window_bounds = array<i64: 32, 32>}, {pipeline_mode = #tpu.pipeline_mode<synchronous>, transform_indices = @transform_1, window_bounds = array<i64: 1, 32>}, {pipeline_mode = #tpu.pipeline_mode<synchronous>, transform_indices = @transform_2, window_bounds = array<i64: 1, 32>}, {pipeline_mode = #tpu.pipeline_mode<synchronous>, transform_indices = @transform_3, window_bounds = array<i64: 32, 96>}, {pipeline_mode = #tpu.pipeline_mode<synchronous>, transform_indices = @transform_4, window_bounds = array<i64: 1, 96>}, {pipeline_mode = #tpu.pipeline_mode<synchronous>, transform_indices = @transform_5, window_bounds = array<i64: 3, 96>}, {pipeline_mode = #tpu.pipeline_mode<synchronous>, transform_indices = @transform_6, window_bounds = array<i64: 1, 96>}, {pipeline_mode = #tpu.pipeline_mode<synchronous>, transform_indices = @transform_7, window_bounds = array<i64: 32, 96>}]} {
    %c0 = arith.constant 0 : index
    %c0_0 = arith.constant 0 : index
    %0 = vector.load %arg1[%c0, %c0_0] : memref<32x32xf32, #tpu.memory_space<vmem>>, vector<32x32xf32>
    %c0_1 = arith.constant 0 : index
    %c0_2 = arith.constant 0 : index
    %1 = vector.load %arg2[%c0_1, %c0_2] : memref<1x32xf32, #tpu.memory_space<vmem>>, vector<1x32xf32>
    %c0_3 = arith.constant 0 : index
    %c0_4 = arith.constant 0 : index
    %2 = vector.load %arg3[%c0_3, %c0_4] : memref<1x32xf32, #tpu.memory_space<vmem>>, vector<1x32xf32>
    %cst = arith.constant dense<0.000000e+00> : vector<32xf32>
    %3 = vector.multi_reduction <add>, %0, %cst [1] : vector<32x32xf32> to vector<32xf32>
    %4 = vector.shape_cast %3 : vector<32xf32> to vector<32x1xf32>
    %cst_5 = arith.constant 3.200000e+01 : f32
    %5 = vector.broadcast %cst_5 : f32 to vector<32x1xf32>
    %6 = arith.divf %4, %5 : vector<32x1xf32>
    %7 = vector.broadcast %6 : vector<32x1xf32> to vector<32x32xf32>
    %8 = arith.subf %0, %7 : vector<32x32xf32>
    %9 = arith.mulf %8, %8 : vector<32x32xf32>
    %cst_6 = arith.constant dense<0.000000e+00> : vector<32xf32>
    %10 = vector.multi_reduction <add>, %9, %cst_6 [1] : vector<32x32xf32> to vector<32xf32>
    %11 = vector.shape_cast %10 : vector<32xf32> to vector<32x1xf32>
    %cst_7 = arith.constant 3.200000e+01 : f32
    %12 = vector.broadcast %cst_7 : f32 to vector<32x1xf32>
    %13 = arith.divf %11, %12 : vector<32x1xf32>
    %14 = vector.broadcast %6 : vector<32x1xf32> to vector<32x32xf32>
    %15 = arith.subf %0, %14 : vector<32x32xf32>
    %cst_8 = arith.constant 9.99999974E-6 : f32
    %16 = vector.broadcast %cst_8 : f32 to vector<32x1xf32>
    %17 = arith.addf %13, %16 : vector<32x1xf32>
    %18 = math.rsqrt %17 : vector<32x1xf32>
    %19 = vector.broadcast %18 : vector<32x1xf32> to vector<32x32xf32>
    %20 = arith.mulf %15, %19 : vector<32x32xf32>
    %21 = vector.broadcast %1 : vector<1x32xf32> to vector<32x32xf32>
    %22 = arith.mulf %20, %21 : vector<32x32xf32>
    %23 = vector.broadcast %2 : vector<1x32xf32> to vector<32x32xf32>
    %24 = arith.addf %22, %23 : vector<32x32xf32>
    %c0_9 = arith.constant 0 : index
    %c0_10 = arith.constant 0 : index
    %25 = vector.load %arg4[%c0_9, %c0_10] : memref<32x96xf32, #tpu.memory_space<vmem>>, vector<32x96xf32>
    %cst_11 = arith.constant dense<0.000000e+00> : vector<32x96xf32>
    %26 = tpu.matmul %24, %25, %cst_11 {dimension_numbers = #tpu.dot_dimension_numbers<[1], [0], [0], [1], [0, 0, 1, 1], [], []>} : vector<32x32xf32>, vector<32x96xf32>, vector<32x96xf32> -> vector<32x96xf32>
    %c0_12 = arith.constant 0 : index
    %c0_13 = arith.constant 0 : index
    %27 = vector.load %arg5[%c0_12, %c0_13] : memref<1x96xf32, #tpu.memory_space<vmem>>, vector<1x96xf32>
    %28 = vector.broadcast %27 : vector<1x96xf32> to vector<32x96xf32>
    %29 = arith.addf %26, %28 : vector<32x96xf32>
    %cst_14 = arith.constant 0.000000e+00 : f32
    %30 = vector.broadcast %cst_14 : f32 to vector<4x96xf32>
    %c0_15 = arith.constant 0 : index
    %c0_16 = arith.constant 0 : index
    %31 = vector.load %arg9[%c0_15, %c0_16] : memref<36x96xf32, #tpu.memory_space<vmem>>, vector<4x96xf32>
    tpu.vector_store %arg9[%c0_15, %c0_16], %30 {strides = array<i32>} : memref<36x96xf32, #tpu.memory_space<vmem>>, vector<4x96xf32>,
    %c4 = arith.constant 4 : index
    %c0_17 = arith.constant 0 : index
    %32 = vector.load %arg9[%c4, %c0_17] : memref<36x96xf32, #tpu.memory_space<vmem>>, vector<32x96xf32>
    tpu.vector_store %arg9[%c4, %c0_17], %29 {strides = array<i32>} : memref<36x96xf32, #tpu.memory_space<vmem>>, vector<32x96xf32>,
    %c0_18 = arith.constant 0 : index
    %c0_19 = arith.constant 0 : index
    %33 = vector.load %arg6[%c0_18, %c0_19] : memref<3x96xf32, #tpu.memory_space<vmem>>, vector<3x96xf32>
    %34 = vector.extract_strided_slice %33 {offsets = [0, 0], sizes = [1, 96], strides = [1, 1]} : vector<3x96xf32> to vector<1x96xf32>
    %c0_20 = arith.constant 0 : index
    %c0_21 = arith.constant 0 : index
    %35 = vector.load %arg9[%c0_20, %c0_21] : memref<36x96xf32, #tpu.memory_space<vmem>>, vector<32x96xf32>
    %36 = vector.broadcast %34 : vector<1x96xf32> to vector<32x96xf32>
    %37 = arith.mulf %36, %35 : vector<32x96xf32>
    %38 = vector.extract_strided_slice %33 {offsets = [1, 0], sizes = [1, 96], strides = [1, 1]} : vector<3x96xf32> to vector<1x96xf32>
    %c2 = arith.constant 2 : index
    %c0_22 = arith.constant 0 : index
    %39 = vector.load %arg9[%c2, %c0_22] : memref<36x96xf32, #tpu.memory_space<vmem>>, vector<32x96xf32>
    %40 = vector.broadcast %38 : vector<1x96xf32> to vector<32x96xf32>
    %41 = arith.mulf %40, %39 : vector<32x96xf32>
    %42 = arith.addf %37, %41 : vector<32x96xf32>
    %43 = vector.extract_strided_slice %33 {offsets = [2, 0], sizes = [1, 96], strides = [1, 1]} : vector<3x96xf32> to vector<1x96xf32>
    %c4_23 = arith.constant 4 : index
    %c0_24 = arith.constant 0 : index
    %44 = vector.load %arg9[%c4_23, %c0_24] : memref<36x96xf32, #tpu.memory_space<vmem>>, vector<32x96xf32>
    %45 = vector.broadcast %43 : vector<1x96xf32> to vector<32x96xf32>
    %46 = arith.mulf %45, %44 : vector<32x96xf32>
    %47 = arith.addf %42, %46 : vector<32x96xf32>
    %c0_25 = arith.constant 0 : index
    %c0_26 = arith.constant 0 : index
    %48 = vector.load %arg7[%c0_25, %c0_26] : memref<1x96xf32, #tpu.memory_space<vmem>>, vector<1x96xf32>
    %49 = vector.broadcast %48 : vector<1x96xf32> to vector<32x96xf32>
    %50 = arith.addf %47, %49 : vector<32x96xf32>
    %c0_27 = arith.constant 0 : index
    %c0_28 = arith.constant 0 : index
    %51 = vector.load %arg8[%c0_27, %c0_28] : memref<32x96xf32, #tpu.memory_space<vmem>>, vector<32x96xf32>
    tpu.vector_store %arg8[%c0_27, %c0_28], %50 {strides = array<i32>} : memref<32x96xf32, #tpu.memory_space<vmem>>, vector<32x96xf32>,
    return
  }
  func.func @transform_0(%arg0: i32) -> (i32, i32) {
    %c0_i32 = arith.constant 0 : i32
    %c0_i32_0 = arith.constant 0 : i32
    %c0_i32_1 = arith.constant 0 : i32
    return %c0_i32, %c0_i32_0 : i32, i32
  }
  func.func @transform_1(%arg0: i32) -> (i32, i32) {
    %c0_i32 = arith.constant 0 : i32
    %c0_i32_0 = arith.constant 0 : i32
    %c0_i32_1 = arith.constant 0 : i32
    return %c0_i32, %c0_i32_0 : i32, i32
  }
  func.func @transform_2(%arg0: i32) -> (i32, i32) {
    %c0_i32 = arith.constant 0 : i32
    %c0_i32_0 = arith.constant 0 : i32
    %c0_i32_1 = arith.constant 0 : i32
    return %c0_i32, %c0_i32_0 : i32, i32
  }
  func.func @transform_3(%arg0: i32) -> (i32, i32) {
    %c0_i32 = arith.constant 0 : i32
    %c0_i32_0 = arith.constant 0 : i32
    %c0_i32_1 = arith.constant 0 : i32
    return %c0_i32, %c0_i32_0 : i32, i32
  }
  func.func @transform_4(%arg0: i32) -> (i32, i32) {
    %c0_i32 = arith.constant 0 : i32
    %c0_i32_0 = arith.constant 0 : i32
    %c0_i32_1 = arith.constant 0 : i32
    return %c0_i32, %c0_i32_0 : i32, i32
  }
  func.func @transform_5(%arg0: i32) -> (i32, i32) {
    %c0_i32 = arith.constant 0 : i32
    %c0_i32_0 = arith.constant 0 : i32
    %c0_i32_1 = arith.constant 0 : i32
    return %c0_i32, %c0_i32_0 : i32, i32
  }
  func.func @transform_6(%arg0: i32) -> (i32, i32) {
    %c0_i32 = arith.constant 0 : i32
    %c0_i32_0 = arith.constant 0 : i32
    %c0_i32_1 = arith.constant 0 : i32
    return %c0_i32, %c0_i32_0 : i32, i32
  }
  func.func @transform_7(%arg0: i32) -> (i32, i32) {
    %c0_i32 = arith.constant 0 : i32
    %c0_i32_0 = arith.constant 0 : i32
    %c0_i32_1 = arith.constant 0 : i32
    return %c0_i32, %c0_i32_0 : i32, i32
  }
}

module attributes {stable_mosaic.version = 11 : i64} {
  func.func @_gcn_kernel(%arg0: i32, %arg1: memref<8x32xf32, #tpu.memory_space<vmem>>, %arg2: memref<32x32xf32, #tpu.memory_space<vmem>>, %arg3: memref<32x32xf32, #tpu.memory_space<vmem>>, %arg4: memref<1x32xf32, #tpu.memory_space<vmem>>, %arg5: memref<8x32xf32, #tpu.memory_space<vmem>>) attributes {dimension_semantics = [#tpu.dimension_semantics<parallel>], iteration_bounds = array<i64: 2>, scalar_prefetch = 0 : i64, scratch_operands = 0 : i64, tpu.core_type = #tpu.core_type<tc>, window_params = [{transform_indices = @transform_0, window_bounds = array<i64: 8, 32>}, {pipeline_mode = #tpu.pipeline_mode<synchronous>, transform_indices = @transform_1, window_bounds = array<i64: 32, 32>}, {pipeline_mode = #tpu.pipeline_mode<synchronous>, transform_indices = @transform_2, window_bounds = array<i64: 32, 32>}, {pipeline_mode = #tpu.pipeline_mode<synchronous>, transform_indices = @transform_3, window_bounds = array<i64: 1, 32>}, {transform_indices = @transform_4, window_bounds = array<i64: 8, 32>}]} {
    %c0 = arith.constant 0 : index
    %c0_0 = arith.constant 0 : index
    %0 = vector.load %arg1[%c0, %c0_0] : memref<8x32xf32, #tpu.memory_space<vmem>>, vector<8x32xf32>
    %c0_1 = arith.constant 0 : index
    %c0_2 = arith.constant 0 : index
    %1 = vector.load %arg2[%c0_1, %c0_2] : memref<32x32xf32, #tpu.memory_space<vmem>>, vector<32x32xf32>
    %cst = arith.constant dense<0.000000e+00> : vector<8x32xf32>
    %2 = tpu.matmul %0, %1, %cst {dimension_numbers = #tpu.dot_dimension_numbers<[1], [0], [0], [1], [0, 0, 1, 1], [], []>} : vector<8x32xf32>, vector<32x32xf32>, vector<8x32xf32> -> vector<8x32xf32>
    %3 = arith.mulf %0, %0 : vector<8x32xf32>
    %cst_3 = arith.constant dense<0.000000e+00> : vector<8x32xf32>
    %4 = tpu.matmul %3, %1, %cst_3 {dimension_numbers = #tpu.dot_dimension_numbers<[1], [0], [0], [1], [0, 0, 1, 1], [], []>} : vector<8x32xf32>, vector<32x32xf32>, vector<8x32xf32> -> vector<8x32xf32>
    %5 = arith.mulf %2, %2 : vector<8x32xf32>
    %6 = arith.subf %4, %5 : vector<8x32xf32>
    %7 = arith.subf %0, %2 : vector<8x32xf32>
    %cst_4 = arith.constant 9.99999974E-6 : f32
    %8 = vector.broadcast %cst_4 : f32 to vector<8x32xf32>
    %9 = arith.addf %6, %8 : vector<8x32xf32>
    %10 = math.rsqrt %9 : vector<8x32xf32>
    %11 = arith.mulf %7, %10 : vector<8x32xf32>
    %c0_5 = arith.constant 0 : index
    %c0_6 = arith.constant 0 : index
    %12 = vector.load %arg3[%c0_5, %c0_6] : memref<32x32xf32, #tpu.memory_space<vmem>>, vector<32x32xf32>
    %cst_7 = arith.constant dense<0.000000e+00> : vector<8x32xf32>
    %13 = tpu.matmul %11, %12, %cst_7 {dimension_numbers = #tpu.dot_dimension_numbers<[1], [0], [0], [1], [0, 0, 1, 1], [], []>} : vector<8x32xf32>, vector<32x32xf32>, vector<8x32xf32> -> vector<8x32xf32>
    %c0_8 = arith.constant 0 : index
    %c0_9 = arith.constant 0 : index
    %14 = vector.load %arg4[%c0_8, %c0_9] : memref<1x32xf32, #tpu.memory_space<vmem>>, vector<1x32xf32>
    %15 = vector.broadcast %14 : vector<1x32xf32> to vector<8x32xf32>
    %16 = arith.addf %13, %15 : vector<8x32xf32>
    %17 = arith.addf %0, %16 : vector<8x32xf32>
    %c0_10 = arith.constant 0 : index
    %c0_11 = arith.constant 0 : index
    %18 = vector.load %arg5[%c0_10, %c0_11] : memref<8x32xf32, #tpu.memory_space<vmem>>, vector<8x32xf32>
    tpu.vector_store %arg5[%c0_10, %c0_11], %17 {strides = array<i32>} : memref<8x32xf32, #tpu.memory_space<vmem>>, vector<8x32xf32>,
    return
  }
  func.func @transform_0(%arg0: i32) -> (i32, i32) {
    %c0_i32 = arith.constant 0 : i32
    %c0_i32_0 = arith.constant 0 : i32
    return %arg0, %c0_i32 : i32, i32
  }
  func.func @transform_1(%arg0: i32) -> (i32, i32) {
    %c0_i32 = arith.constant 0 : i32
    %c0_i32_0 = arith.constant 0 : i32
    %c0_i32_1 = arith.constant 0 : i32
    return %c0_i32, %c0_i32_0 : i32, i32
  }
  func.func @transform_2(%arg0: i32) -> (i32, i32) {
    %c0_i32 = arith.constant 0 : i32
    %c0_i32_0 = arith.constant 0 : i32
    %c0_i32_1 = arith.constant 0 : i32
    return %c0_i32, %c0_i32_0 : i32, i32
  }
  func.func @transform_3(%arg0: i32) -> (i32, i32) {
    %c0_i32 = arith.constant 0 : i32
    %c0_i32_0 = arith.constant 0 : i32
    %c0_i32_1 = arith.constant 0 : i32
    return %c0_i32, %c0_i32_0 : i32, i32
  }
  func.func @transform_4(%arg0: i32) -> (i32, i32) {
    %c0_i32 = arith.constant 0 : i32
    %c0_i32_0 = arith.constant 0 : i32
    return %arg0, %c0_i32 : i32, i32
  }
}

module attributes {stable_mosaic.version = 11 : i64} {
  func.func @_attention_kernel(%arg0: i32, %arg1: memref<4x16x8xf32, #tpu.memory_space<vmem>>, %arg2: memref<4x16x8xf32, #tpu.memory_space<vmem>>, %arg3: memref<4x16x8xf32, #tpu.memory_space<vmem>>, %arg4: memref<4x16x8xf32, #tpu.memory_space<vmem>>) attributes {dimension_semantics = [#tpu.dimension_semantics<parallel>], iteration_bounds = array<i64: 2>, scalar_prefetch = 0 : i64, scratch_operands = 0 : i64, tpu.core_type = #tpu.core_type<tc>, window_params = [{transform_indices = @transform_0, window_bounds = array<i64: 4, 16, 8>}, {transform_indices = @transform_1, window_bounds = array<i64: 4, 16, 8>}, {transform_indices = @transform_2, window_bounds = array<i64: 4, 16, 8>}, {transform_indices = @transform_3, window_bounds = array<i64: 4, 16, 8>}]} {
    %c0 = arith.constant 0 : index
    %c0_0 = arith.constant 0 : index
    %c0_1 = arith.constant 0 : index
    %0 = vector.load %arg1[%c0, %c0_0, %c0_1] : memref<4x16x8xf32, #tpu.memory_space<vmem>>, vector<4x16x8xf32>
    %c0_2 = arith.constant 0 : index
    %c0_3 = arith.constant 0 : index
    %c0_4 = arith.constant 0 : index
    %1 = vector.load %arg2[%c0_2, %c0_3, %c0_4] : memref<4x16x8xf32, #tpu.memory_space<vmem>>, vector<4x16x8xf32>
    %c0_5 = arith.constant 0 : index
    %c0_6 = arith.constant 0 : index
    %c0_7 = arith.constant 0 : index
    %2 = vector.load %arg3[%c0_5, %c0_6, %c0_7] : memref<4x16x8xf32, #tpu.memory_space<vmem>>, vector<4x16x8xf32>
    "tpu.trace_start"() <{level = 10 : i32, message = "bqd,bkd->bqk"}> : () -> ()
    %cst = arith.constant dense<0.000000e+00> : vector<4x16x16xf32>
    %3 = tpu.matmul %0, %1, %cst {dimension_numbers = #tpu.dot_dimension_numbers<[2], [2], [1], [1], [0, 0, 0, 1, 1, 1], [0], [0]>} : vector<4x16x8xf32>, vector<4x16x8xf32>, vector<4x16x16xf32> -> vector<4x16x16xf32>
    "tpu.trace_stop"() : () -> ()
    %cst_8 = arith.constant 0.353553385 : f32
    %4 = vector.broadcast %cst_8 : f32 to vector<4x16x16xf32>
    %5 = arith.mulf %3, %4 : vector<4x16x16xf32>
    %cst_9 = arith.constant dense<0xFF800000> : vector<4x16xf32>
    %6 = vector.multi_reduction <maximumf>, %5, %cst_9 [2] : vector<4x16x16xf32> to vector<4x16xf32>
    %7 = vector.shape_cast %6 : vector<4x16xf32> to vector<4x16x1xf32>
    %8 = vector.broadcast %7 : vector<4x16x1xf32> to vector<4x16x16xf32>
    %9 = arith.subf %5, %8 : vector<4x16x16xf32>
    %10 = math.exp %9 : vector<4x16x16xf32>
    %cst_10 = arith.constant dense<0.000000e+00> : vector<4x16xf32>
    %11 = vector.multi_reduction <add>, %10, %cst_10 [2] : vector<4x16x16xf32> to vector<4x16xf32>
    %12 = vector.shape_cast %11 : vector<4x16xf32> to vector<4x16x1xf32>
    %13 = tpu.reciprocal %12 {approx = true} : vector<4x16x1xf32> -> vector<4x16x1xf32>
    "tpu.trace_start"() <{level = 10 : i32, message = "bqk,bkd->bqd"}> : () -> ()
    %cst_11 = arith.constant dense<0.000000e+00> : vector<4x16x8xf32>
    %14 = tpu.matmul %10, %2, %cst_11 {dimension_numbers = #tpu.dot_dimension_numbers<[2], [1], [1], [2], [0, 0, 0, 1, 1, 2], [0], [0]>} : vector<4x16x16xf32>, vector<4x16x8xf32>, vector<4x16x8xf32> -> vector<4x16x8xf32>
    "tpu.trace_stop"() : () -> ()
    %15 = vector.broadcast %13 : vector<4x16x1xf32> to vector<4x16x8xf32>
    %16 = arith.mulf %14, %15 : vector<4x16x8xf32>
    %c0_12 = arith.constant 0 : index
    %c0_13 = arith.constant 0 : index
    %c0_14 = arith.constant 0 : index
    %17 = vector.load %arg4[%c0_12, %c0_13, %c0_14] : memref<4x16x8xf32, #tpu.memory_space<vmem>>, vector<4x16x8xf32>
    tpu.vector_store %arg4[%c0_12, %c0_13, %c0_14], %16 {strides = array<i32>} : memref<4x16x8xf32, #tpu.memory_space<vmem>>, vector<4x16x8xf32>,
    return
  }
  func.func @transform_0(%arg0: i32) -> (i32, i32, i32) {
    %c0_i32 = arith.constant 0 : i32
    %c0_i32_0 = arith.constant 0 : i32
    %c0_i32_1 = arith.constant 0 : i32
    return %arg0, %c0_i32, %c0_i32_0 : i32, i32, i32
  }
  func.func @transform_1(%arg0: i32) -> (i32, i32, i32) {
    %c0_i32 = arith.constant 0 : i32
    %c0_i32_0 = arith.constant 0 : i32
    %c0_i32_1 = arith.constant 0 : i32
    return %arg0, %c0_i32, %c0_i32_0 : i32, i32, i32
  }
  func.func @transform_2(%arg0: i32) -> (i32, i32, i32) {
    %c0_i32 = arith.constant 0 : i32
    %c0_i32_0 = arith.constant 0 : i32
    %c0_i32_1 = arith.constant 0 : i32
    return %arg0, %c0_i32, %c0_i32_0 : i32, i32, i32
  }
  func.func @transform_3(%arg0: i32) -> (i32, i32, i32) {
    %c0_i32 = arith.constant 0 : i32
    %c0_i32_0 = arith.constant 0 : i32
    %c0_i32_1 = arith.constant 0 : i32
    return %arg0, %c0_i32, %c0_i32_0 : i32, i32, i32
  }
}

module attributes {stable_mosaic.version = 11 : i64} {
  func.func @_linear_add_kernel(%arg0: i32, %arg1: memref<16x32xf32, #tpu.memory_space<vmem>>, %arg2: memref<32x32xf32, #tpu.memory_space<vmem>>, %arg3: memref<1x32xf32, #tpu.memory_space<vmem>>, %arg4: memref<16x32xf32, #tpu.memory_space<vmem>>, %arg5: memref<16x32xf32, #tpu.memory_space<vmem>>) attributes {dimension_semantics = [#tpu.dimension_semantics<parallel>], iteration_bounds = array<i64: 2>, scalar_prefetch = 0 : i64, scratch_operands = 0 : i64, tpu.core_type = #tpu.core_type<tc>, window_params = [{transform_indices = @transform_0, window_bounds = array<i64: 16, 32>}, {pipeline_mode = #tpu.pipeline_mode<synchronous>, transform_indices = @transform_1, window_bounds = array<i64: 32, 32>}, {pipeline_mode = #tpu.pipeline_mode<synchronous>, transform_indices = @transform_2, window_bounds = array<i64: 1, 32>}, {transform_indices = @transform_3, window_bounds = array<i64: 16, 32>}, {transform_indices = @transform_4, window_bounds = array<i64: 16, 32>}]} {
    %c0 = arith.constant 0 : index
    %c0_0 = arith.constant 0 : index
    %0 = vector.load %arg1[%c0, %c0_0] : memref<16x32xf32, #tpu.memory_space<vmem>>, vector<16x32xf32>
    %c0_1 = arith.constant 0 : index
    %c0_2 = arith.constant 0 : index
    %1 = vector.load %arg2[%c0_1, %c0_2] : memref<32x32xf32, #tpu.memory_space<vmem>>, vector<32x32xf32>
    %cst = arith.constant dense<0.000000e+00> : vector<16x32xf32>
    %2 = tpu.matmul %0, %1, %cst {dimension_numbers = #tpu.dot_dimension_numbers<[1], [0], [0], [1], [0, 0, 1, 1], [], []>} : vector<16x32xf32>, vector<32x32xf32>, vector<16x32xf32> -> vector<16x32xf32>
    %c0_3 = arith.constant 0 : index
    %c0_4 = arith.constant 0 : index
    %3 = vector.load %arg3[%c0_3, %c0_4] : memref<1x32xf32, #tpu.memory_space<vmem>>, vector<1x32xf32>
    %4 = vector.broadcast %3 : vector<1x32xf32> to vector<16x32xf32>
    %5 = arith.addf %2, %4 : vector<16x32xf32>
    %c0_5 = arith.constant 0 : index
    %c0_6 = arith.constant 0 : index
    %6 = vector.load %arg4[%c0_5, %c0_6] : memref<16x32xf32, #tpu.memory_space<vmem>>, vector<16x32xf32>
    %7 = arith.addf %6, %5 : vector<16x32xf32>
    %c0_7 = arith.constant 0 : index
    %c0_8 = arith.constant 0 : index
    %8 = vector.load %arg5[%c0_7, %c0_8] : memref<16x32xf32, #tpu.memory_space<vmem>>, vector<16x32xf32>
    tpu.vector_store %arg5[%c0_7, %c0_8], %7 {strides = array<i32>} : memref<16x32xf32, #tpu.memory_space<vmem>>, vector<16x32xf32>,
    return
  }
  func.func @transform_0(%arg0: i32) -> (i32, i32) {
    %c0_i32 = arith.constant 0 : i32
    %c0_i32_0 = arith.constant 0 : i32
    return %arg0, %c0_i32 : i32, i32
  }
  func.func @transform_1(%arg0: i32) -> (i32, i32) {
    %c0_i32 = arith.constant 0 : i32
    %c0_i32_0 = arith.constant 0 : i32
    %c0_i32_1 = arith.constant 0 : i32
    return %c0_i32, %c0_i32_0 : i32, i32
  }
  func.func @transform_2(%arg0: i32) -> (i32, i32) {
    %c0_i32 = arith.constant 0 : i32
    %c0_i32_0 = arith.constant 0 : i32
    %c0_i32_1 = arith.constant 0 : i32
    return %c0_i32, %c0_i32_0 : i32, i32
  }
  func.func @transform_3(%arg0: i32) -> (i32, i32) {
    %c0_i32 = arith.constant 0 : i32
    %c0_i32_0 = arith.constant 0 : i32
    return %arg0, %c0_i32 : i32, i32
  }
  func.func @transform_4(%arg0: i32) -> (i32, i32) {
    %c0_i32 = arith.constant 0 : i32
    %c0_i32_0 = arith.constant 0 : i32
    return %arg0, %c0_i32 : i32, i32
  }
}

module attributes {stable_mosaic.version = 11 : i64} {
  func.func @_ln_ff_kernel(%arg0: i32, %arg1: memref<8x32xf32, #tpu.memory_space<vmem>>, %arg2: memref<1x32xf32, #tpu.memory_space<vmem>>, %arg3: memref<1x32xf32, #tpu.memory_space<vmem>>, %arg4: memref<32x128xf32, #tpu.memory_space<vmem>>, %arg5: memref<1x128xf32, #tpu.memory_space<vmem>>, %arg6: memref<128x32xf32, #tpu.memory_space<vmem>>, %arg7: memref<1x32xf32, #tpu.memory_space<vmem>>, %arg8: memref<8x32xf32, #tpu.memory_space<vmem>>) attributes {dimension_semantics = [#tpu.dimension_semantics<parallel>], iteration_bounds = array<i64: 2>, scalar_prefetch = 0 : i64, scratch_operands = 0 : i64, tpu.core_type = #tpu.core_type<tc>, window_params = [{transform_indices = @transform_0, window_bounds = array<i64: 8, 32>}, {pipeline_mode = #tpu.pipeline_mode<synchronous>, transform_indices = @transform_1, window_bounds = array<i64: 1, 32>}, {pipeline_mode = #tpu.pipeline_mode<synchronous>, transform_indices = @transform_2, window_bounds = array<i64: 1, 32>}, {pipeline_mode = #tpu.pipeline_mode<synchronous>, transform_indices = @transform_3, window_bounds = array<i64: 32, 128>}, {pipeline_mode = #tpu.pipeline_mode<synchronous>, transform_indices = @transform_4, window_bounds = array<i64: 1, 128>}, {pipeline_mode = #tpu.pipeline_mode<synchronous>, transform_indices = @transform_5, window_bounds = array<i64: 128, 32>}, {pipeline_mode = #tpu.pipeline_mode<synchronous>, transform_indices = @transform_6, window_bounds = array<i64: 1, 32>}, {transform_indices = @transform_7, window_bounds = array<i64: 8, 32>}]} {
    %c0 = arith.constant 0 : index
    %c0_0 = arith.constant 0 : index
    %0 = vector.load %arg1[%c0, %c0_0] : memref<8x32xf32, #tpu.memory_space<vmem>>, vector<8x32xf32>
    %c0_1 = arith.constant 0 : index
    %c0_2 = arith.constant 0 : index
    %1 = vector.load %arg2[%c0_1, %c0_2] : memref<1x32xf32, #tpu.memory_space<vmem>>, vector<1x32xf32>
    %c0_3 = arith.constant 0 : index
    %c0_4 = arith.constant 0 : index
    %2 = vector.load %arg3[%c0_3, %c0_4] : memref<1x32xf32, #tpu.memory_space<vmem>>, vector<1x32xf32>
    %cst = arith.constant dense<0.000000e+00> : vector<8xf32>
    %3 = vector.multi_reduction <add>, %0, %cst [1] : vector<8x32xf32> to vector<8xf32>
    %4 = vector.shape_cast %3 : vector<8xf32> to vector<8x1xf32>
    %cst_5 = arith.constant 3.200000e+01 : f32
    %5 = vector.broadcast %cst_5 : f32 to vector<8x1xf32>
    %6 = arith.divf %4, %5 : vector<8x1xf32>
    %7 = vector.broadcast %6 : vector<8x1xf32> to vector<8x32xf32>
    %8 = arith.subf %0, %7 : vector<8x32xf32>
    %9 = arith.mulf %8, %8 : vector<8x32xf32>
    %cst_6 = arith.constant dense<0.000000e+00> : vector<8xf32>
    %10 = vector.multi_reduction <add>, %9, %cst_6 [1] : vector<8x32xf32> to vector<8xf32>
    %11 = vector.shape_cast %10 : vector<8xf32> to vector<8x1xf32>
    %cst_7 = arith.constant 3.200000e+01 : f32
    %12 = vector.broadcast %cst_7 : f32 to vector<8x1xf32>
    %13 = arith.divf %11, %12 : vector<8x1xf32>
    %14 = vector.broadcast %6 : vector<8x1xf32> to vector<8x32xf32>
    %15 = arith.subf %0, %14 : vector<8x32xf32>
    %cst_8 = arith.constant 9.99999974E-6 : f32
    %16 = vector.broadcast %cst_8 : f32 to vector<8x1xf32>
    %17 = arith.addf %13, %16 : vector<8x1xf32>
    %18 = math.rsqrt %17 : vector<8x1xf32>
    %19 = vector.broadcast %18 : vector<8x1xf32> to vector<8x32xf32>
    %20 = arith.mulf %15, %19 : vector<8x32xf32>
    %21 = vector.broadcast %1 : vector<1x32xf32> to vector<8x32xf32>
    %22 = arith.mulf %20, %21 : vector<8x32xf32>
    %23 = vector.broadcast %2 : vector<1x32xf32> to vector<8x32xf32>
    %24 = arith.addf %22, %23 : vector<8x32xf32>
    %c0_9 = arith.constant 0 : index
    %c0_10 = arith.constant 0 : index
    %25 = vector.load %arg4[%c0_9, %c0_10] : memref<32x128xf32, #tpu.memory_space<vmem>>, vector<32x128xf32>
    %cst_11 = arith.constant dense<0.000000e+00> : vector<8x128xf32>
    %26 = tpu.matmul %24, %25, %cst_11 {dimension_numbers = #tpu.dot_dimension_numbers<[1], [0], [0], [1], [0, 0, 1, 1], [], []>} : vector<8x32xf32>, vector<32x128xf32>, vector<8x128xf32> -> vector<8x128xf32>
    %c0_12 = arith.constant 0 : index
    %c0_13 = arith.constant 0 : index
    %27 = vector.load %arg5[%c0_12, %c0_13] : memref<1x128xf32, #tpu.memory_space<vmem>>, vector<1x128xf32>
    %28 = vector.broadcast %27 : vector<1x128xf32> to vector<8x128xf32>
    %29 = arith.addf %26, %28 : vector<8x128xf32>
    %cst_14 = arith.constant 0.000000e+00 : f32
    %30 = vector.broadcast %cst_14 : f32 to vector<8x128xf32>
    %31 = arith.maximumf %29, %30 : vector<8x128xf32>
    %32 = arith.mulf %31, %31 : vector<8x128xf32>
    %c0_15 = arith.constant 0 : index
    %c0_16 = arith.constant 0 : index
    %33 = vector.load %arg6[%c0_15, %c0_16] : memref<128x32xf32, #tpu.memory_space<vmem>>, vector<128x32xf32>
    %cst_17 = arith.constant dense<0.000000e+00> : vector<8x32xf32>
    %34 = tpu.matmul %32, %33, %cst_17 {dimension_numbers = #tpu.dot_dimension_numbers<[1], [0], [0], [1], [0, 0, 1, 1], [], []>} : vector<8x128xf32>, vector<128x32xf32>, vector<8x32xf32> -> vector<8x32xf32>
    %c0_18 = arith.constant 0 : index
    %c0_19 = arith.constant 0 : index
    %35 = vector.load %arg7[%c0_18, %c0_19] : memref<1x32xf32, #tpu.memory_space<vmem>>, vector<1x32xf32>
    %36 = vector.broadcast %35 : vector<1x32xf32> to vector<8x32xf32>
    %37 = arith.addf %34, %36 : vector<8x32xf32>
    %38 = arith.addf %0, %37 : vector<8x32xf32>
    %c0_20 = arith.constant 0 : index
    %c0_21 = arith.constant 0 : index
    %39 = vector.load %arg8[%c0_20, %c0_21] : memref<8x32xf32, #tpu.memory_space<vmem>>, vector<8x32xf32>
    tpu.vector_store %arg8[%c0_20, %c0_21], %38 {strides = array<i32>} : memref<8x32xf32, #tpu.memory_space<vmem>>, vector<8x32xf32>,
    return
  }
  func.func @transform_0(%arg0: i32) -> (i32, i32) {
    %c0_i32 = arith.constant 0 : i32
    %c0_i32_0 = arith.constant 0 : i32
    return %arg0, %c0_i32 : i32, i32
  }
  func.func @transform_1(%arg0: i32) -> (i32, i32) {
    %c0_i32 = arith.constant 0 : i32
    %c0_i32_0 = arith.constant 0 : i32
    %c0_i32_1 = arith.constant 0 : i32
    return %c0_i32, %c0_i32_0 : i32, i32
  }
  func.func @transform_2(%arg0: i32) -> (i32, i32) {
    %c0_i32 = arith.constant 0 : i32
    %c0_i32_0 = arith.constant 0 : i32
    %c0_i32_1 = arith.constant 0 : i32
    return %c0_i32, %c0_i32_0 : i32, i32
  }
  func.func @transform_3(%arg0: i32) -> (i32, i32) {
    %c0_i32 = arith.constant 0 : i32
    %c0_i32_0 = arith.constant 0 : i32
    %c0_i32_1 = arith.constant 0 : i32
    return %c0_i32, %c0_i32_0 : i32, i32
  }
  func.func @transform_4(%arg0: i32) -> (i32, i32) {
    %c0_i32 = arith.constant 0 : i32
    %c0_i32_0 = arith.constant 0 : i32
    %c0_i32_1 = arith.constant 0 : i32
    return %c0_i32, %c0_i32_0 : i32, i32
  }
  func.func @transform_5(%arg0: i32) -> (i32, i32) {
    %c0_i32 = arith.constant 0 : i32
    %c0_i32_0 = arith.constant 0 : i32
    %c0_i32_1 = arith.constant 0 : i32
    return %c0_i32, %c0_i32_0 : i32, i32
  }
  func.func @transform_6(%arg0: i32) -> (i32, i32) {
    %c0_i32 = arith.constant 0 : i32
    %c0_i32_0 = arith.constant 0 : i32
    %c0_i32_1 = arith.constant 0 : i32
    return %c0_i32, %c0_i32_0 : i32, i32
  }
  func.func @transform_7(%arg0: i32) -> (i32, i32) {
    %c0_i32 = arith.constant 0 : i32
    %c0_i32_0 = arith.constant 0 : i32
    return %arg0, %c0_i32 : i32, i32
  }
}

module attributes {stable_mosaic.version = 11 : i64} {
  func.func @_linear_kernel(%arg0: i32, %arg1: memref<8x32xf32, #tpu.memory_space<vmem>>, %arg2: memref<32x32xf32, #tpu.memory_space<vmem>>, %arg3: memref<1x32xf32, #tpu.memory_space<vmem>>, %arg4: memref<8x32xf32, #tpu.memory_space<vmem>>) attributes {dimension_semantics = [#tpu.dimension_semantics<parallel>], iteration_bounds = array<i64: 2>, scalar_prefetch = 0 : i64, scratch_operands = 0 : i64, tpu.core_type = #tpu.core_type<tc>, window_params = [{transform_indices = @transform_0, window_bounds = array<i64: 8, 32>}, {pipeline_mode = #tpu.pipeline_mode<synchronous>, transform_indices = @transform_1, window_bounds = array<i64: 32, 32>}, {pipeline_mode = #tpu.pipeline_mode<synchronous>, transform_indices = @transform_2, window_bounds = array<i64: 1, 32>}, {transform_indices = @transform_3, window_bounds = array<i64: 8, 32>}]} {
    %c0 = arith.constant 0 : index
    %c0_0 = arith.constant 0 : index
    %0 = vector.load %arg1[%c0, %c0_0] : memref<8x32xf32, #tpu.memory_space<vmem>>, vector<8x32xf32>
    %c0_1 = arith.constant 0 : index
    %c0_2 = arith.constant 0 : index
    %1 = vector.load %arg2[%c0_1, %c0_2] : memref<32x32xf32, #tpu.memory_space<vmem>>, vector<32x32xf32>
    %cst = arith.constant dense<0.000000e+00> : vector<8x32xf32>
    %2 = tpu.matmul %0, %1, %cst {dimension_numbers = #tpu.dot_dimension_numbers<[1], [0], [0], [1], [0, 0, 1, 1], [], []>} : vector<8x32xf32>, vector<32x32xf32>, vector<8x32xf32> -> vector<8x32xf32>
    %c0_3 = arith.constant 0 : index
    %c0_4 = arith.constant 0 : index
    %3 = vector.load %arg3[%c0_3, %c0_4] : memref<1x32xf32, #tpu.memory_space<vmem>>, vector<1x32xf32>
    %4 = vector.broadcast %3 : vector<1x32xf32> to vector<8x32xf32>
    %5 = arith.addf %2, %4 : vector<8x32xf32>
    %c0_5 = arith.constant 0 : index
    %c0_6 = arith.constant 0 : index
    %6 = vector.load %arg4[%c0_5, %c0_6] : memref<8x32xf32, #tpu.memory_space<vmem>>, vector<8x32xf32>
    tpu.vector_store %arg4[%c0_5, %c0_6], %5 {strides = array<i32>} : memref<8x32xf32, #tpu.memory_space<vmem>>, vector<8x32xf32>,
    return
  }
  func.func @transform_0(%arg0: i32) -> (i32, i32) {
    %c0_i32 = arith.constant 0 : i32
    %c0_i32_0 = arith.constant 0 : i32
    return %arg0, %c0_i32 : i32, i32
  }
  func.func @transform_1(%arg0: i32) -> (i32, i32) {
    %c0_i32 = arith.constant 0 : i32
    %c0_i32_0 = arith.constant 0 : i32
    %c0_i32_1 = arith.constant 0 : i32
    return %c0_i32, %c0_i32_0 : i32, i32
  }
  func.func @transform_2(%arg0: i32) -> (i32, i32) {
    %c0_i32 = arith.constant 0 : i32
    %c0_i32_0 = arith.constant 0 : i32
    %c0_i32_1 = arith.constant 0 : i32
    return %c0_i32, %c0_i32_0 : i32, i32
  }
  func.func @transform_3(%arg0: i32) -> (i32, i32) {
    %c0_i32 = arith.constant 0 : i32
    %c0_i32_0 = arith.constant 0 : i32
    return %arg0, %c0_i32 : i32, i32
  }
}

</mosaic_0001>

<llo_original>
// kernel: tile.278
$region0: #{tile.278}
  #allocation0 [shape = 's32[1]{0}', space=sflag, size = 0x4, scoped, tag = 'scoped memory for tile.278']
  %s0 = inlined_call_operand.vmem [shape: f32[8], index: 0, kind: input, shape index: {}]
  %s1 = inlined_call_operand.vmem [shape: f32[4,8], index: 1, kind: output, shape index: {}]
  // Predicated region
  $region2: #{tile.278} parent=0 // pred_check
    _
  $region3: #{tile.278} parent=0 // pred_check_branch
    %3 = sbr.rel (0) target = $region5
  $region4: #{tile.278} parent=0 // pred_region
    _
  $region5: #{tile.278} parent=0 // pred_fallthru
    _
  %v4 = vld [vmem:[%s0] ss:$0 sm:$0xff]
  %5 = vst [vmem:[%s1] sm:$0xf] %v4

// kernel: tile.279
$region0: #{tile.279}
  %s0 = inlined_call_operand.vmem [shape: f32[4,8], index: 0, kind: input, shape index: {}]
  %s1 = inlined_call_operand.vmem [shape: f32[32], index: 1, kind: output, shape index: {}]
  $region1: #{tile.279} parent=0
    #allocation0 [shape = 'u8[4096]{0}', space=vmem, size = 0x1000, scoped, tag = 'scoped mem for output reshape']
    #allocation1 [shape = 'u8[4096]{0}', space=vmem, size = 0x1000, scoped, tag = 'scoped mem for input reshape']
    %s3 = sshll.u32 1, 4
    %s4 = ssub.s32 %s3, 1
    %v5 = vld [vmem:[%s0] sm:%s4]
    %6 = vst [vmem:[#allocation1] sm:%s4] %v5
    %v7 = vld [vmem:[#allocation1] sm:$0x1]
    %vm8 = vcmask 64512
    %9 = vst.msk [vmem:[#allocation0] sm:$0x1] %vm8, %v7
    %s10 = scalar_lea.vmem [#allocation1], 3
    %v11 = vld [vmem:[%s10] sm:$0x1]
    %12 = vrot.lane.b32.xlu0 %v11, 24
    %v13 = vpop.permute.xlu0 %12
    %vm14 = vcmask 261312
    %15 = vst.msk [vmem:[#allocation0] sm:$0x1] %vm14, %v13
    %s16 = scalar_lea.vmem [#allocation1], 2
    %v17 = vld [vmem:[%s16] sm:$0x1]
    %18 = vrot.lane.b32.xlu0 %v17, 16
    %v19 = vpop.permute.xlu0 %18
    %vm20 = vcmask 195712
    %21 = vst.msk [vmem:[#allocation0] sm:$0x1] %vm20, %v19
    %s22 = scalar_lea.vmem [#allocation1], 1
    %v23 = vld [vmem:[%s22] sm:$0x1]
    %24 = vrot.lane.b32.xlu0 %v23, 8
    %v25 = vpop.permute.xlu0 %24
    %vm26 = vcmask 130112
    %27 = vst.msk [vmem:[#allocation0] sm:$0x1] %vm26, %v25
    %s29 = sshll.u32 1, 1
    %s30 = ssub.s32 %s29, 1
    %v32 = vld [vmem:[#allocation0] sm:%s30]
    %s33 = sshll.u32 1, 1
    %s34 = ssub.s32 %s33, 1
    %35 = vst [vmem:[%s1] sm:%s34] %v32

// kernel: tile.264
$region0: #{tile.264}
  %s0 = inlined_call_operand.vmem [shape: f32[3,4,8], index: 0, kind: input, shape index: {}]
  %s1 = inlined_call_operand.vmem [shape: f32[3,32], index: 1, kind: output, shape index: {}]
  $region1: #{tile.264} parent=0
    #allocation0 [shape = 'u8[4096]{0}', space=vmem, size = 0x1000, scoped, tag = 'scoped mem for output reshape']
    #allocation1 [shape = 'u8[12288]{0}', space=vmem, size = 0x3000, scoped, tag = 'scoped mem for input reshape']
    %s3 = sshll.u32 1, 4
    %s4 = ssub.s32 %s3, 1
    %s5 = smul.addr 4, 2
    %s6 = scalar_lea.vmem %s0, %s5
    %v7 = vld [vmem:[%s6] sm:%s4]
    %s8 = scalar_lea.vmem [#allocation1], 16
    %9 = vst [vmem:[%s8] sm:%s4] %v7
    %s10 = scalar_lea.vmem %s0, 4
    %v11 = vld [vmem:[%s10] sm:%s4]
    %s12 = scalar_lea.vmem [#allocation1], 8
    %13 = vst [vmem:[%s12] sm:%s4] %v11
    %v14 = vld [vmem:[%s0] sm:%s4]
    %15 = vst [vmem:[#allocation1] sm:%s4] %v14
    %v16 = vld [vmem:[#allocation1] ss:$8 sm:$0x7]
    %vm17 = vcmask 64512
    %18 = vst.msk [vmem:[#allocation0] sm:$0x7] %vm17, %v16
    %s19 = scalar_lea.vmem [#allocation1], 3
    %v20 = vld [vmem:[%s19] ss:$8 sm:$0x7]
    %21 = vrot.lane.b32.xlu0 %v20, 24
    %v22 = vpop.permute.xlu0 %21
    %vm23 = vcmask 261312
    %24 = vst.msk [vmem:[#allocation0] sm:$0x7] %vm23, %v22
    %s25 = scalar_lea.vmem [#allocation1], 2
    %v26 = vld [vmem:[%s25] ss:$8 sm:$0x7]
    %27 = vrot.lane.b32.xlu0 %v26, 16
    %v28 = vpop.permute.xlu0 %27
    %vm29 = vcmask 195712
    %30 = vst.msk [vmem:[#allocation0] sm:$0x7] %vm29, %v28
    %s31 = scalar_lea.vmem [#allocation1], 1
    %v32 = vld [vmem:[%s31] ss:$8 sm:$0x7]
    %33 = vrot.lane.b32.xlu0 %v32, 8
    %v34 = vpop.permute.xlu0 %33
    %vm35 = vcmask 130112
    %36 = vst.msk [vmem:[#allocation0] sm:$0x7] %vm35, %v34
    %s38 = sshll.u32 1, 4
    %s39 = ssub.s32 %s38, 1
    %v41 = vld [vmem:[#allocation0] sm:%s39]
    %s42 = sshll.u32 1, 4
    %s43 = ssub.s32 %s42, 1
    %44 = vst [vmem:[%s1] sm:%s43] %v41

// kernel: cross_attention_gcn_forward.27
$region0: #{cross_attention_gcn_forward.27}
  #allocation0 [shape = 'u32[]', space=smem, size = 0x4, offset = 0x4, fixed_abs, tag = 'smem constant byte address 0x4 - core index']
  #allocation1 [shape = 'u32[144,128]{1,0:T(1,128)}', space=vmem, size = 0x12000, scoped, tag = 'internal scratch']
  %s0 = inlined_call_operand.vmem [shape: f32[16,16], index: 0, kind: input, shape index: {}]
  %s1 = inlined_call_operand.vmem [shape: f32[16,32], index: 1, kind: input, shape index: {}]
  %s2 = inlined_call_operand.vmem [shape: f32[1,32], index: 2, kind: input, shape index: {}]
  %s3 = inlined_call_operand.vmem [shape: f32[16,32], index: 3, kind: input, shape index: {}]
  %s4 = inlined_call_operand.vmem [shape: f32[16,32], index: 4, kind: output, shape index: {}]
  %s5 = sld [smem:[#allocation0]]
  $region49: #{cross_attention_gcn_forward.27} parent=0
    _
  %s7 = ssub.s32 1, %s5
  %s8 = scalar_select 0, %s7, %s5
  loop: start=0, step=1, limit=4
  $region2: #{cross_attention_gcn_forward.27} parent=0 // loop_pre_header
    _
  $region3: #{cross_attention_gcn_forward.27} parent=0 // loop_header
    %s10 = sphi 0, %s14
    %p11 = scmp.ge.s32.totalorder %s10, 4
    %s20 = sphi 0, %s22
    %s23 = sphi 0, %s20
    %s24 = sphi 0, %s23
    %s40 = sphi 0, %s24
    %s44 = sphi 0, %s44
    %s46 = sphi 0, %s44
    %s47 = sphi 0, %s46
    %s61 = sphi 0, %s47
    %s65 = sphi 0, %s65
    %s67 = sphi 0, %s65
    %s68 = sphi 0, %s67
    %s82 = sphi 0, %s68
    %s88 = sphi 0, %s90
    %s91 = sphi 0, %s88
    %s92 = sphi 0, %s91
    %s108 = sphi 0, %s92
    %s114 = sphi 0, %s116
    %s117 = sphi 0, %s114
    %s118 = sphi 0, %s117
    %s134 = sphi 0, %s118
  $region4: #{cross_attention_gcn_forward.27} parent=0 // loop_header_branch
    %13 = sbr.rel (%p11) target = $region8
  $region5: #{cross_attention_gcn_forward.27} parent=0 // loop_body
    %s15 = ssub.s32 %s10, 1
    %s16 = ssub.s32 %s10, 2
    %s17 = sadd.s32 %s10, 1
    %s18 = ssub.s32 %s10, %s17
    %p19 = scmp.eq.s32.totalorder %s18, 0
    %s21 = sadd.s32 %s20, 1
    %s22 = scalar_select %p19, %s20, %s21
    %p25 = pneg %p19
    %p26 = scmp.eq.s32.totalorder %s10, 1
    %p27 = por %p25, %p26
    %p28 = scmp.ne.s32.totalorder %s20, %s23
    %p29 = scmp.eq.s32.totalorder %s10, 0
    %p30 = por %p28, %p29
    %p31 = scmp.ne.s32.totalorder %s20, %s23
    %p32 = scmp.eq.s32.totalorder %s15, 1
    %p33 = por %p31, %p32
    %p34 = scmp.ne.s32.totalorder %s23, %s24
    %p35 = scmp.eq.s32.totalorder %s15, 0
    %p36 = por %p34, %p35
    %p37 = scmp.ne.s32.totalorder %s23, %s24
    %p38 = scmp.eq.s32.totalorder %s16, 1
    %p39 = por %p37, %p38
    %p41 = scmp.ne.s32.totalorder %s24, %s40
    %p42 = scmp.eq.s32.totalorder %s16, 0
    %p43 = por %p41, %p42
    %s45 = sadd.s32 %s44, 1
    %p48 = scmp.eq.s32.totalorder %s10, 1
    %p49 = scmp.ne.s32.totalorder %s44, %s46
    %p50 = scmp.eq.s32.totalorder %s10, 0
    %p51 = por %p49, %p50
    %p52 = scmp.ne.s32.totalorder %s44, %s46
    %p53 = scmp.eq.s32.totalorder %s15, 1
    %p54 = por %p52, %p53
    %p55 = scmp.ne.s32.totalorder %s46, %s47
    %p56 = scmp.eq.s32.totalorder %s15, 0
    %p57 = por %p55, %p56
    %p58 = scmp.ne.s32.totalorder %s46, %s47
    %p59 = scmp.eq.s32.totalorder %s16, 1
    %p60 = por %p58, %p59
    %p62 = scmp.ne.s32.totalorder %s47, %s61
    %p63 = scmp.eq.s32.totalorder %s16, 0
    %p64 = por %p62, %p63
    %s66 = sadd.s32 %s65, 1
    %p69 = scmp.eq.s32.totalorder %s10, 1
    %p70 = scmp.ne.s32.totalorder %s65, %s67
    %p71 = scmp.eq.s32.totalorder %s10, 0
    %p72 = por %p70, %p71
    %p73 = scmp.ne.s32.totalorder %s65, %s67
    %p74 = scmp.eq.s32.totalorder %s15, 1
    %p75 = por %p73, %p74
    %p76 = scmp.ne.s32.totalorder %s67, %s68
    %p77 = scmp.eq.s32.totalorder %s15, 0
    %p78 = por %p76, %p77
    %p79 = scmp.ne.s32.totalorder %s67, %s68
    %p80 = scmp.eq.s32.totalorder %s16, 1
    %p81 = por %p79, %p80
    %p83 = scmp.ne.s32.totalorder %s68, %s82
    %p84 = scmp.eq.s32.totalorder %s16, 0
    %p85 = por %p83, %p84
    %s86 = ssub.s32 %s10, %s17
    %p87 = scmp.eq.s32.totalorder %s86, 0
    %s89 = sadd.s32 %s88, 1
    %s90 = scalar_select %p87, %s88, %s89
    %p93 = pneg %p87
    %p94 = scmp.eq.s32.totalorder %s10, 1
    %p95 = por %p93, %p94
    %p96 = scmp.ne.s32.totalorder %s88, %s91
    %p97 = scmp.eq.s32.totalorder %s10, 0
    %p98 = por %p96, %p97
    %p99 = scmp.ne.s32.totalorder %s88, %s91
    %p100 = scmp.eq.s32.totalorder %s15, 1
    %p101 = por %p99, %p100
    %p102 = scmp.ne.s32.totalorder %s91, %s92
    %p103 = scmp.eq.s32.totalorder %s15, 0
    %p104 = por %p102, %p103
    %p105 = scmp.ne.s32.totalorder %s91, %s92
    %p106 = scmp.eq.s32.totalorder %s16, 1
    %p107 = por %p105, %p106
    %p109 = scmp.ne.s32.totalorder %s92, %s108
    %p110 = scmp.eq.s32.totalorder %s16, 0
    %p111 = por %p109, %p110
    %s112 = ssub.s32 %s10, %s17
    %p113 = scmp.eq.s32.totalorder %s112, 0
    %s115 = sadd.s32 %s114, 1
    %s116 = scalar_select %p113, %s114, %s115
    %p119 = pneg %p113
    %p120 = scmp.eq.s32.totalorder %s10, 1
    %p121 = por %p119, %p120
    %p122 = scmp.ne.s32.totalorder %s114, %s117
    %p123 = scmp.eq.s32.totalorder %s10, 0
    %p124 = por %p122, %p123
    %p125 = scmp.ne.s32.totalorder %s114, %s117
    %p126 = scmp.eq.s32.totalorder %s15, 1
    %p127 = por %p125, %p126
    %p128 = scmp.ne.s32.totalorder %s117, %s118
    %p129 = scmp.eq.s32.totalorder %s15, 0
    %p130 = por %p128, %p129
    %p131 = scmp.ne.s32.totalorder %s117, %s118
    %p132 = scmp.eq.s32.totalorder %s16, 1
    %p133 = por %p131, %p132
    %p135 = scmp.ne.s32.totalorder %s118, %s134
    %p136 = scmp.eq.s32.totalorder %s16, 0
    %p137 = por %p135, %p136
    %p138 = scmp.le.s32.totalorder 1, %s10
    %p139 = scmp.lt.s32.totalorder %s10, 3
    %p140 = pnand %p138, %p139
    %p141 = pneg %p140
    // Predicated region
    $region9: #{cross_attention_gcn_forward.27} parent=5 // pred_check
      _
    $region10: #{cross_attention_gcn_forward.27} parent=5 // pred_check_branch
      %143 = sbr.rel (%p140) target = $region12
    $region11: #{cross_attention_gcn_forward.27} parent=5 // pred_region
      %s144 = ssub.s32 %s10, 1
      // Predicated region
      $region13: #{cross_attention_gcn_forward.27} parent=11 // pred_check
        %p145 = pneg %p57
      $region14: #{cross_attention_gcn_forward.27} parent=11 // pred_check_branch
        %147 = sbr.rel (%p145) target = $region16
      $region15: #{cross_attention_gcn_forward.27} parent=11 // pred_region
        _
      $region16: #{cross_attention_gcn_forward.27} parent=11 // pred_fallthru
        _
      // Predicated region
      $region17: #{cross_attention_gcn_forward.27} parent=11 // pred_check
        %p148 = pneg %p78
      $region18: #{cross_attention_gcn_forward.27} parent=11 // pred_check_branch
        %150 = sbr.rel (%p148) target = $region20
      $region19: #{cross_attention_gcn_forward.27} parent=11 // pred_region
        _
      $region20: #{cross_attention_gcn_forward.27} parent=11 // pred_fallthru
        _
    $region12: #{cross_attention_gcn_forward.27} parent=5 // pred_fallthru
      _
    %p151 = scmp.lt.s32.totalorder %s10, 2
    // Predicated region
    $region21: #{cross_attention_gcn_forward.27} parent=5 // pred_check
      %p152 = pneg %p151
    $region22: #{cross_attention_gcn_forward.27} parent=5 // pred_check_branch
      %154 = sbr.rel (%p152) target = $region24
    $region23: #{cross_attention_gcn_forward.27} parent=5 // pred_region
      // Predicated region
      $region25: #{cross_attention_gcn_forward.27} parent=23 // pred_check
        %p155 = pneg %p30
      $region26: #{cross_attention_gcn_forward.27} parent=23 // pred_check_branch
        %157 = sbr.rel (%p155) target = $region28
      $region27: #{cross_attention_gcn_forward.27} parent=23 // pred_region
        %p158 = scmp.lt.s32.totalorder %s10, 1
        %s159 = scalar_select %p158, %s10, 1
        %s160 = smul.addr %s159, 8
        %s161 = scalar_lea.vmem %s0, %s160
      $region28: #{cross_attention_gcn_forward.27} parent=23 // pred_fallthru
        _
      // Predicated region
      $region29: #{cross_attention_gcn_forward.27} parent=23 // pred_check
        %p162 = pneg %p98
      $region30: #{cross_attention_gcn_forward.27} parent=23 // pred_check_branch
        %164 = sbr.rel (%p162) target = $region32
      $region31: #{cross_attention_gcn_forward.27} parent=23 // pred_region
        %p165 = scmp.lt.s32.totalorder %s10, 1
        %s166 = scalar_select %p165, %s10, 1
        %s167 = smul.addr %s166, 8
        %s168 = scalar_lea.vmem %s3, %s167
      $region32: #{cross_attention_gcn_forward.27} parent=23 // pred_fallthru
        _
    $region24: #{cross_attention_gcn_forward.27} parent=5 // pred_fallthru
      _
    %p169 = scmp.le.s32.totalorder 1, %s10
    %p170 = scmp.lt.s32.totalorder %s10, 3
    %p171 = pnand %p169, %p170
    %p172 = pneg %p171
    // Predicated region
    $region33: #{cross_attention_gcn_forward.27} parent=5 // pred_check
      _
    $region34: #{cross_attention_gcn_forward.27} parent=5 // pred_check_branch
      %174 = sbr.rel (%p171) target = $region36
    $region35: #{cross_attention_gcn_forward.27} parent=5 // pred_region
      %s175 = ssub.s32 %s10, 1
      %p176 = scmp.lt.s32.totalorder %s15, 1
      %s177 = scalar_select %p176, %s15, 1
      %s178 = smul.addr %s177, 8
      %s179 = scalar_lea.vmem %s0, %s178
      %p180 = pneg %p36
      %p181 = pneg %p33
      %p182 = pneg %p57
      %p183 = pneg %p54
      %p184 = pneg %p78
      %p185 = pneg %p75
      %p186 = scmp.lt.s32.totalorder %s15, 1
      %s187 = scalar_select %p186, %s15, 1
      %s188 = smul.addr %s187, 8
      %s189 = scalar_lea.vmem %s3, %s188
      %p190 = pneg %p104
      %p191 = pneg %p101
      %p192 = pneg %p130
      %p193 = pneg %p127
      %p194 = scmp.lt.s32.totalorder %s15, 1
      %s195 = scalar_select %p194, %s15, 1
      %s196 = smul.addr %s195, 8
      %s197 = scalar_lea.vmem %s4, %s196
      %p198 = scmp.lt.s32.totalorder %s15, 1
      %s199 = scalar_select %p198, %s15, 1
      %s200 = smul.addr %s199, 8
      %s201 = scalar_lea.vmem %s0, %s200
      %p202 = scmp.lt.s32.totalorder %s15, 1
      %s203 = scalar_select %p202, %s15, 1
      %s204 = smul.addr %s203, 8
      %s205 = scalar_lea.vmem %s3, %s204
      %p206 = scmp.lt.s32.totalorder %s15, 1
      %s207 = scalar_select %p206, %s15, 1
      %s208 = smul.addr %s207, 8
      %s209 = scalar_lea.vmem %s4, %s208
      %v210 = vld [vmem:[%s201] sm:$0xff]
      %v211 = vld [vmem:[%s1] sm:$0xff]
      %v212 = vld [vmem:[%s1 + $0x8] sm:$0xff]
      %v213 = vld [vmem:[%s2] sm:$0x1]
      %v215 = vlaneseq
      %v216 = vshrl.u32 %v215, 7
      %v217 = vsub.s32 0, %v216
      %v218 = vrot.slane %v213, %v217
      %vm220 = vcmask 130048
      %v222 = vsel %vm220, %v210, 0
      %224 = vmatprep.subr.mxu0 0.0
      %225 = vmatpush1.msra.mxu0 0.0
      %226 = vmatprep.subr.mxu0 0.0
      %227 = vmatpush1.msra.mxu0 0.0
      %228 = vmatprep.subr.mxu0 0.0
      %229 = vmatpush1.msra.mxu0 0.0
      %230 = vmatprep.subr.mxu0 0.0
      %231 = vmatpush1.msra.mxu0 0.0
      %232 = vmatprep.subr.mxu0 0.0
      %233 = vmatpush1.msra.mxu0 0.0
      %234 = vmatprep.subr.mxu0 0.0
      %235 = vmatpush1.msra.mxu0 0.0
      %236 = vmatprep.subr.mxu0 0.0
      %237 = vmatpush1.msra.mxu0 0.0
      %238 = vmatprep.subr.mxu0 0.0
      %239 = vmatpush1.msra.mxu0 0.0
      %240 = vmatprep.subr.mxu0 0.0
      %241 = vmatpush1.msra.mxu0 0.0
      %242 = vmatprep.subr.mxu0 0.0
      %243 = vmatpush1.msra.mxu0 0.0
      %244 = vmatprep.subr.mxu0 0.0
      %245 = vmatpush1.msra.mxu0 0.0
      %246 = vmatprep.subr.mxu0 0.0
      %247 = vmatpush1.msra.mxu0 0.0
      %248 = vmatprep.subr.mxu0 0.0
      %249 = vmatpush1.msra.mxu0 0.0
      %250 = vmatprep.subr.mxu0 0.0
      %251 = vmatpush1.msra.mxu0 0.0
      %252 = vmatprep.subr.mxu0 0.0
      %253 = vmatpush1.msra.mxu0 %v212
      %254 = vmatprep.subr.mxu0 0.0
      %255 = vmatpush1.msra.mxu0 %v211
      %256 = vmatprep.subr.mxu0 0.0
      %257 = vmatpush2.msra.mxu0 0.0
      %258 = vmatprep.subr.mxu0 0.0
      %259 = vmatpush2.msra.mxu0 0.0
      %260 = vmatprep.subr.mxu0 0.0
      %261 = vmatpush2.msra.mxu0 0.0
      %262 = vmatprep.subr.mxu0 0.0
      %263 = vmatpush2.msra.mxu0 0.0
      %264 = vmatprep.subr.mxu0 0.0
      %265 = vmatpush2.msra.mxu0 0.0
      %266 = vmatprep.subr.mxu0 0.0
      %267 = vmatpush2.msra.mxu0 0.0
      %268 = vmatprep.subr.mxu0 0.0
      %269 = vmatpush2.msra.mxu0 0.0
      %270 = vmatprep.subr.mxu0 0.0
      %271 = vmatpush2.msra.mxu0 0.0
      %272 = vmatprep.subr.mxu0 0.0
      %273 = vmatpush2.msra.mxu0 0.0
      %274 = vmatprep.subr.mxu0 0.0
      %275 = vmatpush2.msra.mxu0 0.0
      %276 = vmatprep.subr.mxu0 0.0
      %277 = vmatpush2.msra.mxu0 0.0
      %278 = vmatprep.subr.mxu0 0.0
      %279 = vmatpush2.msra.mxu0 0.0
      %280 = vmatprep.subr.mxu0 0.0
      %281 = vmatpush2.msra.mxu0 0.0
      %282 = vmatprep.subr.mxu0 0.0
      %283 = vmatpush2.msra.mxu0 0.0
      %284 = vmatprep.subr.mxu0 0.0
      %285 = vmatpush2.msra.mxu0 0.0
      %286 = vmatprep.subr.mxu0 0.0
      %287 = vmatpush2.msra.mxu0 0.0
      %288 = vmatprep.mubr.f32.mxu0 0.0
      %289 = vmatmul.mubr.f32.gmra.mxu0 %v222
      %v290 = vpop.f32.mrf.mxu0
      %v291 = vadd.f32 %v218, %v290
      %v292 = vpop.f32.mrf.mxu0
      %293 = vdwg.mxu0
      %v294 = vld [vmem:[%s205] sm:$0xff]
      %v295 = vadd.f32 %v294, %v291
      %vm296 = vcmask 261120
      %297 = vst.msk [vmem:[%s209] sm:$0xff] %vm296, %v295
      %p298 = scmp.lt.s32.totalorder %s15, 1
      %s299 = scalar_select %p298, %s15, 1
      %s300 = smul.addr %s299, 8
      %s301 = scalar_lea.vmem %s4, %s300
      // Predicated region
      $region37: #{cross_attention_gcn_forward.27} parent=35 // pred_check
        %p302 = pneg %p127
      $region38: #{cross_attention_gcn_forward.27} parent=35 // pred_check_branch
        %304 = sbr.rel (%p302) target = $region40
      $region39: #{cross_attention_gcn_forward.27} parent=35 // pred_region
        _
      $region40: #{cross_attention_gcn_forward.27} parent=35 // pred_fallthru
        _
    $region36: #{cross_attention_gcn_forward.27} parent=5 // pred_fallthru
      _
    %p305 = scmp.le.s32.totalorder 2, %s10
    // Predicated region
    $region41: #{cross_attention_gcn_forward.27} parent=5 // pred_check
      %p306 = pneg %p305
    $region42: #{cross_attention_gcn_forward.27} parent=5 // pred_check_branch
      %308 = sbr.rel (%p306) target = $region44
    $region43: #{cross_attention_gcn_forward.27} parent=5 // pred_region
      %s309 = ssub.s32 %s10, 2
      // Predicated region
      $region45: #{cross_attention_gcn_forward.27} parent=43 // pred_check
        %p310 = pneg %p133
      $region46: #{cross_attention_gcn_forward.27} parent=43 // pred_check_branch
        %312 = sbr.rel (%p310) target = $region48
      $region47: #{cross_attention_gcn_forward.27} parent=43 // pred_region
        %p313 = scmp.lt.s32.totalorder %s16, 1
        %s314 = scalar_select %p313, %s16, 1
        %s315 = smul.addr %s314, 8
        %s316 = scalar_lea.vmem %s4, %s315
      $region48: #{cross_attention_gcn_forward.27} parent=43 // pred_fallthru
        _
    $region44: #{cross_attention_gcn_forward.27} parent=5 // pred_fallthru
      _
  $region6: #{cross_attention_gcn_forward.27} parent=0 // loop_footer
    %s14 = sadd.s32 1, %s10
  $region7: #{cross_attention_gcn_forward.27} parent=0 // loop_footer_branch
    %9 = sbr.rel target = $region3
  $region8: #{cross_attention_gcn_forward.27} parent=0 // loop_exit
    _

// kernel: cross_attention_gcn_forward.32
$region0: #{cross_attention_gcn_forward.32}
  #allocation0 [shape = 'u32[]', space=smem, size = 0x4, offset = 0x4, fixed_abs, tag = 'smem constant byte address 0x4 - core index']
  #allocation1 [shape = 'u32[144,128]{1,0:T(1,128)}', space=vmem, size = 0x12000, scoped, tag = 'internal scratch']
  #allocation2 [shape = 'f32[20,96]{1,0:T(8,128)}', space=vmem, size = 0x3000, scoped, tag = 'scratch operand']
  %s0 = inlined_call_operand.vmem [shape: f32[16,32], index: 0, kind: input, shape index: {}]
  %s1 = inlined_call_operand.vmem [shape: f32[1,32], index: 1, kind: input, shape index: {}]
  %s2 = inlined_call_operand.vmem [shape: f32[1,32], index: 2, kind: input, shape index: {}]
  %s3 = inlined_call_operand.vmem [shape: f32[32,96], index: 3, kind: input, shape index: {}]
  %s4 = inlined_call_operand.vmem [shape: f32[1,96], index: 4, kind: input, shape index: {}]
  %s5 = inlined_call_operand.vmem [shape: f32[3,96], index: 5, kind: input, shape index: {}]
  %s6 = inlined_call_operand.vmem [shape: f32[1,96], index: 6, kind: input, shape index: {}]
  %s7 = inlined_call_operand.vmem [shape: f32[16,96], index: 7, kind: output, shape index: {}]
  %s8 = sld [smem:[#allocation0]]
  $region38: #{cross_attention_gcn_forward.32} parent=0
    _
  %s10 = ssub.s32 1, %s8
  %s11 = scalar_select 0, %s10, %s8
  // Predicated region
  $region2: #{cross_attention_gcn_forward.32} parent=0 // pred_check
    _
  $region3: #{cross_attention_gcn_forward.32} parent=0 // pred_check_branch
    %13 = sbr.rel (0) target = $region5
  $region4: #{cross_attention_gcn_forward.32} parent=0 // pred_region
    _
  $region5: #{cross_attention_gcn_forward.32} parent=0 // pred_fallthru
    _
  // Predicated region
  $region6: #{cross_attention_gcn_forward.32} parent=0 // pred_check
    _
  $region7: #{cross_attention_gcn_forward.32} parent=0 // pred_check_branch
    %15 = sbr.rel (0) target = $region9
  $region8: #{cross_attention_gcn_forward.32} parent=0 // pred_region
    _
  $region9: #{cross_attention_gcn_forward.32} parent=0 // pred_fallthru
    _
  // Predicated region
  $region10: #{cross_attention_gcn_forward.32} parent=0 // pred_check
    _
  $region11: #{cross_attention_gcn_forward.32} parent=0 // pred_check_branch
    %17 = sbr.rel (0) target = $region13
  $region12: #{cross_attention_gcn_forward.32} parent=0 // pred_region
    _
  $region13: #{cross_attention_gcn_forward.32} parent=0 // pred_fallthru
    _
  // Predicated region
  $region14: #{cross_attention_gcn_forward.32} parent=0 // pred_check
    _
  $region15: #{cross_attention_gcn_forward.32} parent=0 // pred_check_branch
    %19 = sbr.rel (0) target = $region17
  $region16: #{cross_attention_gcn_forward.32} parent=0 // pred_region
    _
  $region17: #{cross_attention_gcn_forward.32} parent=0 // pred_fallthru
    _
  // Predicated region
  $region18: #{cross_attention_gcn_forward.32} parent=0 // pred_check
    _
  $region19: #{cross_attention_gcn_forward.32} parent=0 // pred_check_branch
    %21 = sbr.rel (0) target = $region21
  $region20: #{cross_attention_gcn_forward.32} parent=0 // pred_region
    _
  $region21: #{cross_attention_gcn_forward.32} parent=0 // pred_fallthru
    _
  // Predicated region
  $region22: #{cross_attention_gcn_forward.32} parent=0 // pred_check
    _
  $region23: #{cross_attention_gcn_forward.32} parent=0 // pred_check_branch
    %23 = sbr.rel (0) target = $region25
  $region24: #{cross_attention_gcn_forward.32} parent=0 // pred_region
    _
  $region25: #{cross_attention_gcn_forward.32} parent=0 // pred_fallthru
    _
  // Predicated region
  $region26: #{cross_attention_gcn_forward.32} parent=0 // pred_check
    _
  $region27: #{cross_attention_gcn_forward.32} parent=0 // pred_check_branch
    %25 = sbr.rel (0) target = $region29
  $region28: #{cross_attention_gcn_forward.32} parent=0 // pred_region
    _
  $region29: #{cross_attention_gcn_forward.32} parent=0 // pred_fallthru
    _
  %v26 = vld [vmem:[%s0] sm:$0xff]
  %v27 = vld [vmem:[%s0 + $0x8] sm:$0xff]
  %v28 = vld [vmem:[%s1] sm:$0x1]
  %v29 = vld [vmem:[%s2] sm:$0x1]
  %vm30 = vcmask 261120
  %v31 = vsel %vm30, %v26, 0.0
  %32 = vadd.xlane.f32.xlu0 %v31
  %v33 = vpop.xlane.xlu0 %32
  %v34 = vsel %vm30, %v27, 0.0
  %35 = vadd.xlane.f32.xlu0 %v34
  %v36 = vpop.xlane.xlu0 %35
  %v37 = vrcp.pop 32.0
  %v38 = vmul.f32 %v33, %v37
  %v39 = vmul.f32 %v36, %v37
  %v40 = vsub.f32 %v26, %v38
  %v41 = vsub.f32 %v27, %v39
  %v42 = vmul.f32 %v40, %v40
  %v43 = vmul.f32 %v41, %v41
  %v44 = vsel %vm30, %v42, 0.0
  %45 = vadd.xlane.f32.xlu0 %v44
  %v46 = vpop.xlane.xlu0 %45
  %v47 = vsel %vm30, %v43, 0.0
  %48 = vadd.xlane.f32.xlu0 %v47
  %v49 = vpop.xlane.xlu0 %48
  %v50 = vmul.f32 %v46, %v37
  %v51 = vmul.f32 %v49, %v37
  %v52 = vadd.f32 %v50, 1e-05
  %v53 = vadd.f32 %v51, 1e-05
  %v54 = vrsqrt.pop %v52
  %v55 = vrsqrt.pop %v53
  %v56 = vmul.f32 %v40, %v54
  %v57 = vmul.f32 %v41, %v55
  %v59 = vlaneseq
  %v60 = vshrl.u32 %v59, 7
  %v61 = vsub.s32 0, %v60
  %v62 = vrot.slane %v28, %v61
  %v64 = vmul.f32 %v56, %v62
  %v65 = vmul.f32 %v57, %v62
  %v67 = vlaneseq
  %v68 = vshrl.u32 %v67, 7
  %v69 = vsub.s32 0, %v68
  %v70 = vrot.slane %v29, %v69
  %v72 = vadd.f32 %v64, %v70
  %v73 = vadd.f32 %v65, %v70
  %v74 = vld [vmem:[%s3] sm:$0xff]
  %v75 = vld [vmem:[%s3 + $0x8] sm:$0xff]
  %v76 = vld [vmem:[%s3 + $0x10] sm:$0xff]
  %v77 = vld [vmem:[%s3 + $0x18] sm:$0xff]
  %v78 = vld [vmem:[%s4] sm:$0x1]
  %v80 = vlaneseq
  %v81 = vshrl.u32 %v80, 7
  %v82 = vsub.s32 0, %v81
  %v83 = vrot.slane %v78, %v82
  %v86 = vsel %vm30, %v72, 0
  %v89 = vsel %vm30, %v73, 0
  %91 = vmatprep.subr.mxu0 0.0
  %92 = vmatpush1.msra.mxu0 0.0
  %93 = vmatprep.subr.mxu0 0.0
  %94 = vmatpush1.msra.mxu0 0.0
  %95 = vmatprep.subr.mxu0 0.0
  %96 = vmatpush1.msra.mxu0 0.0
  %97 = vmatprep.subr.mxu0 0.0
  %98 = vmatpush1.msra.mxu0 0.0
  %99 = vmatprep.subr.mxu0 0.0
  %100 = vmatpush1.msra.mxu0 0.0
  %101 = vmatprep.subr.mxu0 0.0
  %102 = vmatpush1.msra.mxu0 0.0
  %103 = vmatprep.subr.mxu0 0.0
  %104 = vmatpush1.msra.mxu0 0.0
  %105 = vmatprep.subr.mxu0 0.0
  %106 = vmatpush1.msra.mxu0 0.0
  %107 = vmatprep.subr.mxu0 0.0
  %108 = vmatpush1.msra.mxu0 0.0
  %109 = vmatprep.subr.mxu0 0.0
  %110 = vmatpush1.msra.mxu0 0.0
  %111 = vmatprep.subr.mxu0 0.0
  %112 = vmatpush1.msra.mxu0 0.0
  %113 = vmatprep.subr.mxu0 0.0
  %114 = vmatpush1.msra.mxu0 0.0
  %115 = vmatprep.subr.mxu0 0.0
  %116 = vmatpush1.msra.mxu0 %v77
  %117 = vmatprep.subr.mxu0 0.0
  %118 = vmatpush1.msra.mxu0 %v76
  %119 = vmatprep.subr.mxu0 0.0
  %120 = vmatpush1.msra.mxu0 %v75
  %121 = vmatprep.subr.mxu0 0.0
  %122 = vmatpush1.msra.mxu0 %v74
  %123 = vmatprep.subr.mxu0 0.0
  %124 = vmatpush2.msra.mxu0 0.0
  %125 = vmatprep.subr.mxu0 0.0
  %126 = vmatpush2.msra.mxu0 0.0
  %127 = vmatprep.subr.mxu0 0.0
  %128 = vmatpush2.msra.mxu0 0.0
  %129 = vmatprep.subr.mxu0 0.0
  %130 = vmatpush2.msra.mxu0 0.0
  %131 = vmatprep.subr.mxu0 0.0
  %132 = vmatpush2.msra.mxu0 0.0
  %133 = vmatprep.subr.mxu0 0.0
  %134 = vmatpush2.msra.mxu0 0.0
  %135 = vmatprep.subr.mxu0 0.0
  %136 = vmatpush2.msra.mxu0 0.0
  %137 = vmatprep.subr.mxu0 0.0
  %138 = vmatpush2.msra.mxu0 0.0
  %139 = vmatprep.subr.mxu0 0.0
  %140 = vmatpush2.msra.mxu0 0.0
  %141 = vmatprep.subr.mxu0 0.0
  %142 = vmatpush2.msra.mxu0 0.0
  %143 = vmatprep.subr.mxu0 0.0
  %144 = vmatpush2.msra.mxu0 0.0
  %145 = vmatprep.subr.mxu0 0.0
  %146 = vmatpush2.msra.mxu0 0.0
  %147 = vmatprep.subr.mxu0 0.0
  %148 = vmatpush2.msra.mxu0 0.0
  %149 = vmatprep.subr.mxu0 0.0
  %150 = vmatpush2.msra.mxu0 0.0
  %151 = vmatprep.subr.mxu0 0.0
  %152 = vmatpush2.msra.mxu0 0.0
  %153 = vmatprep.subr.mxu0 0.0
  %154 = vmatpush2.msra.mxu0 0.0
  %155 = vmatprep.mubr.f32.mxu0 0.0
  %156 = vmatmul.mubr.f32.gmra.mxu0 %v86
  %v157 = vpop.f32.mrf.mxu0
  %v158 = vadd.f32 %v83, %v157
  %v159 = vpop.f32.mrf.mxu0
  %160 = vmatprep.mubr.f32.mxu0 0.0
  %161 = vmatmul.mubr.f32.gmra.mxu0 %v89
  %v162 = vpop.f32.mrf.mxu0
  %v163 = vadd.f32 %v83, %v162
  %v164 = vpop.f32.mrf.mxu0
  %165 = vdwg.mxu0
  %vm166 = vcmask 781312
  %167 = vst.msk [vmem:[#allocation2] sm:$0xf] %vm166, 0.0
  %vm168 = vcmask 785408
  %169 = vst.msk [vmem:[#allocation2 + $0x4] sm:$0xff] %vm168, %v158
  %170 = vst.msk [vmem:[#allocation2 + $0xc] sm:$0xff] %vm168, %v163
  %v171 = vld [vmem:[%s5] sm:$0x7]
  %v172 = vld [vmem:[#allocation2] sm:$0xff]
  %v173 = vld [vmem:[#allocation2 + $0x8] sm:$0xff]
  %v174 = vlaneseq
  %v175 = vshrl.u32 %v174, 7
  %v176 = vsub.s32 0, %v175
  %v177 = vrot.slane %v171, %v176
  %v178 = vmul.f32 %v177, %v172
  %v179 = vmul.f32 %v177, %v173
  %v180 = vld [vmem:[#allocation2 + $0x2] sm:$0xff]
  %v181 = vld [vmem:[#allocation2 + $0xa] sm:$0xff]
  %v182 = vlaneseq
  %v183 = vshrl.u32 %v182, 7
  %v184 = vsub.s32 1, %v183
  %v185 = vrot.slane %v171, %v184
  %v186 = vmul.f32 %v185, %v180
  %v187 = vmul.f32 %v185, %v181
  %v188 = vadd.f32 %v178, %v186
  %v189 = vadd.f32 %v179, %v187
  %v190 = vld [vmem:[#allocation2 + $0x4] sm:$0xff]
  %v191 = vld [vmem:[#allocation2 + $0xc] sm:$0xff]
  %v192 = vlaneseq
  %v193 = vshrl.u32 %v192, 7
  %v194 = vsub.s32 2, %v193
  %v195 = vrot.slane %v171, %v194
  %v196 = vmul.f32 %v195, %v190
  %v197 = vmul.f32 %v195, %v191
  %v198 = vadd.f32 %v188, %v196
  %v199 = vadd.f32 %v189, %v197
  %v200 = vld [vmem:[%s6] sm:$0x1]
  %v202 = vlaneseq
  %v203 = vshrl.u32 %v202, 7
  %v204 = vsub.s32 0, %v203
  %v205 = vrot.slane %v200, %v204
  %v207 = vadd.f32 %v198, %v205
  %v208 = vadd.f32 %v199, %v205
  %209 = vst.msk [vmem:[%s7] sm:$0xff] %vm168, %v207
  %210 = vst.msk [vmem:[%s7 + $0x8] sm:$0xff] %vm168, %v208
  // Predicated region
  $region30: #{cross_attention_gcn_forward.32} parent=0 // pred_check
    _
  $region31: #{cross_attention_gcn_forward.32} parent=0 // pred_check_branch
    %212 = sbr.rel (0) target = $region33
  $region32: #{cross_attention_gcn_forward.32} parent=0 // pred_region
    _
  $region33: #{cross_attention_gcn_forward.32} parent=0 // pred_fallthru
    _
  // Predicated region
  $region34: #{cross_attention_gcn_forward.32} parent=0 // pred_check
    _
  $region35: #{cross_attention_gcn_forward.32} parent=0 // pred_check_branch
    %214 = sbr.rel (0) target = $region37
  $region36: #{cross_attention_gcn_forward.32} parent=0 // pred_region
    _
  $region37: #{cross_attention_gcn_forward.32} parent=0 // pred_fallthru
    _

// kernel: tile.418
$region0: #{tile.418}
  %s0 = inlined_call_operand.vmem [shape: f32[4,8], index: 0, kind: input, shape index: {}]
  %s1 = inlined_call_operand.vmem [shape: f32[1,32], index: 1, kind: output, shape index: {}]
  $region1: #{tile.418} parent=0
    #allocation0 [shape = 'u8[4096]{0}', space=vmem, size = 0x1000, scoped, tag = 'scoped mem for output reshape']
    #allocation1 [shape = 'u8[4096]{0}', space=vmem, size = 0x1000, scoped, tag = 'scoped mem for input reshape']
    %s3 = sshll.u32 1, 4
    %s4 = ssub.s32 %s3, 1
    %v5 = vld [vmem:[%s0] sm:%s4]
    %6 = vst [vmem:[#allocation1] sm:%s4] %v5
    %v7 = vld [vmem:[#allocation1] sm:$0x1]
    %vm8 = vcmask 64512
    %9 = vst.msk [vmem:[#allocation0] sm:$0x1] %vm8, %v7
    %s10 = scalar_lea.vmem [#allocation1], 3
    %v11 = vld [vmem:[%s10] sm:$0x1]
    %12 = vrot.lane.b32.xlu0 %v11, 24
    %v13 = vpop.permute.xlu0 %12
    %vm14 = vcmask 261312
    %15 = vst.msk [vmem:[#allocation0] sm:$0x1] %vm14, %v13
    %s16 = scalar_lea.vmem [#allocation1], 2
    %v17 = vld [vmem:[%s16] sm:$0x1]
    %18 = vrot.lane.b32.xlu0 %v17, 16
    %v19 = vpop.permute.xlu0 %18
    %vm20 = vcmask 195712
    %21 = vst.msk [vmem:[#allocation0] sm:$0x1] %vm20, %v19
    %s22 = scalar_lea.vmem [#allocation1], 1
    %v23 = vld [vmem:[%s22] sm:$0x1]
    %24 = vrot.lane.b32.xlu0 %v23, 8
    %v25 = vpop.permute.xlu0 %24
    %vm26 = vcmask 130112
    %27 = vst.msk [vmem:[#allocation0] sm:$0x1] %vm26, %v25
    %s29 = sshll.u32 1, 1
    %s30 = ssub.s32 %s29, 1
    %v32 = vld [vmem:[#allocation0] sm:%s30]
    %s33 = sshll.u32 1, 1
    %s34 = ssub.s32 %s33, 1
    %35 = vst [vmem:[%s1] sm:%s34] %v32

// kernel: cross_attention_gcn_forward.33
$region0: #{cross_attention_gcn_forward.33}
  #allocation0 [shape = 'u32[]', space=smem, size = 0x4, offset = 0x4, fixed_abs, tag = 'smem constant byte address 0x4 - core index']
  #allocation1 [shape = 'u32[144,128]{1,0:T(1,128)}', space=vmem, size = 0x12000, scoped, tag = 'internal scratch']
  %s0 = inlined_call_operand.vmem [shape: f32[8,8,8], index: 0, kind: input, shape index: {}]
  %s1 = inlined_call_operand.vmem [shape: f32[8,8,8], index: 1, kind: input, shape index: {}]
  %s2 = inlined_call_operand.vmem [shape: f32[8,8,8], index: 2, kind: input, shape index: {}]
  %s3 = inlined_call_operand.vmem [shape: f32[8,8,8], index: 3, kind: output, shape index: {}]
  %s4 = sld [smem:[#allocation0]]
  $region45: #{cross_attention_gcn_forward.33} parent=0
    _
  %s6 = ssub.s32 1, %s4
  %s7 = scalar_select 0, %s6, %s4
  loop: start=0, step=1, limit=4
  $region2: #{cross_attention_gcn_forward.33} parent=0 // loop_pre_header
    _
  $region3: #{cross_attention_gcn_forward.33} parent=0 // loop_header
    %s9 = sphi 0, %s13
    %p10 = scmp.ge.s32.totalorder %s9, 4
    %s19 = sphi 0, %s21
    %s22 = sphi 0, %s19
    %s23 = sphi 0, %s22
    %s39 = sphi 0, %s23
    %s45 = sphi 0, %s47
    %s48 = sphi 0, %s45
    %s49 = sphi 0, %s48
    %s65 = sphi 0, %s49
    %s71 = sphi 0, %s73
    %s74 = sphi 0, %s71
    %s75 = sphi 0, %s74
    %s91 = sphi 0, %s75
    %s97 = sphi 0, %s99
    %s100 = sphi 0, %s97
    %s101 = sphi 0, %s100
    %s117 = sphi 0, %s101
  $region4: #{cross_attention_gcn_forward.33} parent=0 // loop_header_branch
    %12 = sbr.rel (%p10) target = $region8
  $region5: #{cross_attention_gcn_forward.33} parent=0 // loop_body
    %s14 = ssub.s32 %s9, 1
    %s15 = ssub.s32 %s9, 2
    %s16 = sadd.s32 %s9, 1
    %s17 = ssub.s32 %s9, %s16
    %p18 = scmp.eq.s32.totalorder %s17, 0
    %s20 = sadd.s32 %s19, 1
    %s21 = scalar_select %p18, %s19, %s20
    %p24 = pneg %p18
    %p25 = scmp.eq.s32.totalorder %s9, 1
    %p26 = por %p24, %p25
    %p27 = scmp.ne.s32.totalorder %s19, %s22
    %p28 = scmp.eq.s32.totalorder %s9, 0
    %p29 = por %p27, %p28
    %p30 = scmp.ne.s32.totalorder %s19, %s22
    %p31 = scmp.eq.s32.totalorder %s14, 1
    %p32 = por %p30, %p31
    %p33 = scmp.ne.s32.totalorder %s22, %s23
    %p34 = scmp.eq.s32.totalorder %s14, 0
    %p35 = por %p33, %p34
    %p36 = scmp.ne.s32.totalorder %s22, %s23
    %p37 = scmp.eq.s32.totalorder %s15, 1
    %p38 = por %p36, %p37
    %p40 = scmp.ne.s32.totalorder %s23, %s39
    %p41 = scmp.eq.s32.totalorder %s15, 0
    %p42 = por %p40, %p41
    %s43 = ssub.s32 %s9, %s16
    %p44 = scmp.eq.s32.totalorder %s43, 0
    %s46 = sadd.s32 %s45, 1
    %s47 = scalar_select %p44, %s45, %s46
    %p50 = pneg %p44
    %p51 = scmp.eq.s32.totalorder %s9, 1
    %p52 = por %p50, %p51
    %p53 = scmp.ne.s32.totalorder %s45, %s48
    %p54 = scmp.eq.s32.totalorder %s9, 0
    %p55 = por %p53, %p54
    %p56 = scmp.ne.s32.totalorder %s45, %s48
    %p57 = scmp.eq.s32.totalorder %s14, 1
    %p58 = por %p56, %p57
    %p59 = scmp.ne.s32.totalorder %s48, %s49
    %p60 = scmp.eq.s32.totalorder %s14, 0
    %p61 = por %p59, %p60
    %p62 = scmp.ne.s32.totalorder %s48, %s49
    %p63 = scmp.eq.s32.totalorder %s15, 1
    %p64 = por %p62, %p63
    %p66 = scmp.ne.s32.totalorder %s49, %s65
    %p67 = scmp.eq.s32.totalorder %s15, 0
    %p68 = por %p66, %p67
    %s69 = ssub.s32 %s9, %s16
    %p70 = scmp.eq.s32.totalorder %s69, 0
    %s72 = sadd.s32 %s71, 1
    %s73 = scalar_select %p70, %s71, %s72
    %p76 = pneg %p70
    %p77 = scmp.eq.s32.totalorder %s9, 1
    %p78 = por %p76, %p77
    %p79 = scmp.ne.s32.totalorder %s71, %s74
    %p80 = scmp.eq.s32.totalorder %s9, 0
    %p81 = por %p79, %p80
    %p82 = scmp.ne.s32.totalorder %s71, %s74
    %p83 = scmp.eq.s32.totalorder %s14, 1
    %p84 = por %p82, %p83
    %p85 = scmp.ne.s32.totalorder %s74, %s75
    %p86 = scmp.eq.s32.totalorder %s14, 0
    %p87 = por %p85, %p86
    %p88 = scmp.ne.s32.totalorder %s74, %s75
    %p89 = scmp.eq.s32.totalorder %s15, 1
    %p90 = por %p88, %p89
    %p92 = scmp.ne.s32.totalorder %s75, %s91
    %p93 = scmp.eq.s32.totalorder %s15, 0
    %p94 = por %p92, %p93
    %s95 = ssub.s32 %s9, %s16
    %p96 = scmp.eq.s32.totalorder %s95, 0
    %s98 = sadd.s32 %s97, 1
    %s99 = scalar_select %p96, %s97, %s98
    %p102 = pneg %p96
    %p103 = scmp.eq.s32.totalorder %s9, 1
    %p104 = por %p102, %p103
    %p105 = scmp.ne.s32.totalorder %s97, %s100
    %p106 = scmp.eq.s32.totalorder %s9, 0
    %p107 = por %p105, %p106
    %p108 = scmp.ne.s32.totalorder %s97, %s100
    %p109 = scmp.eq.s32.totalorder %s14, 1
    %p110 = por %p108, %p109
    %p111 = scmp.ne.s32.totalorder %s100, %s101
    %p112 = scmp.eq.s32.totalorder %s14, 0
    %p113 = por %p111, %p112
    %p114 = scmp.ne.s32.totalorder %s100, %s101
    %p115 = scmp.eq.s32.totalorder %s15, 1
    %p116 = por %p114, %p115
    %p118 = scmp.ne.s32.totalorder %s101, %s117
    %p119 = scmp.eq.s32.totalorder %s15, 0
    %p120 = por %p118, %p119
    %p121 = scmp.le.s32.totalorder 1, %s9
    %p122 = scmp.lt.s32.totalorder %s9, 3
    %p123 = pnand %p121, %p122
    %p124 = pneg %p123
    // Predicated region
    $region9: #{cross_attention_gcn_forward.33} parent=5 // pred_check
      _
    $region10: #{cross_attention_gcn_forward.33} parent=5 // pred_check_branch
      %126 = sbr.rel (%p123) target = $region12
    $region11: #{cross_attention_gcn_forward.33} parent=5 // pred_region
      %s127 = ssub.s32 %s9, 1
    $region12: #{cross_attention_gcn_forward.33} parent=5 // pred_fallthru
      _
    %p128 = scmp.lt.s32.totalorder %s9, 2
    // Predicated region
    $region13: #{cross_attention_gcn_forward.33} parent=5 // pred_check
      %p129 = pneg %p128
    $region14: #{cross_attention_gcn_forward.33} parent=5 // pred_check_branch
      %131 = sbr.rel (%p129) target = $region16
    $region15: #{cross_attention_gcn_forward.33} parent=5 // pred_region
      // Predicated region
      $region17: #{cross_attention_gcn_forward.33} parent=15 // pred_check
        %p132 = pneg %p29
      $region18: #{cross_attention_gcn_forward.33} parent=15 // pred_check_branch
        %134 = sbr.rel (%p132) target = $region20
      $region19: #{cross_attention_gcn_forward.33} parent=15 // pred_region
        %s135 = smul.u32 4, %s9
        %p136 = scmp.lt.s32.totalorder %s135, 7
        %s137 = scalar_select %p136, %s135, 7
        %s138 = smul.addr %s137, 8
        %s139 = scalar_lea.vmem %s0, %s138
        %s140 = smul.u32 4, %s9
      $region20: #{cross_attention_gcn_forward.33} parent=15 // pred_fallthru
        _
      // Predicated region
      $region21: #{cross_attention_gcn_forward.33} parent=15 // pred_check
        %p141 = pneg %p55
      $region22: #{cross_attention_gcn_forward.33} parent=15 // pred_check_branch
        %143 = sbr.rel (%p141) target = $region24
      $region23: #{cross_attention_gcn_forward.33} parent=15 // pred_region
        %s144 = smul.u32 4, %s9
        %p145 = scmp.lt.s32.totalorder %s144, 7
        %s146 = scalar_select %p145, %s144, 7
        %s147 = smul.addr %s146, 8
        %s148 = scalar_lea.vmem %s1, %s147
        %s149 = smul.u32 4, %s9
      $region24: #{cross_attention_gcn_forward.33} parent=15 // pred_fallthru
        _
      // Predicated region
      $region25: #{cross_attention_gcn_forward.33} parent=15 // pred_check
        %p150 = pneg %p81
      $region26: #{cross_attention_gcn_forward.33} parent=15 // pred_check_branch
        %152 = sbr.rel (%p150) target = $region28
      $region27: #{cross_attention_gcn_forward.33} parent=15 // pred_region
        %s153 = smul.u32 4, %s9
        %p154 = scmp.lt.s32.totalorder %s153, 7
        %s155 = scalar_select %p154, %s153, 7
        %s156 = smul.addr %s155, 8
        %s157 = scalar_lea.vmem %s2, %s156
        %s158 = smul.u32 4, %s9
      $region28: #{cross_attention_gcn_forward.33} parent=15 // pred_fallthru
        _
    $region16: #{cross_attention_gcn_forward.33} parent=5 // pred_fallthru
      _
    %p159 = scmp.le.s32.totalorder 1, %s9
    %p160 = scmp.lt.s32.totalorder %s9, 3
    %p161 = pnand %p159, %p160
    %p162 = pneg %p161
    // Predicated region
    $region29: #{cross_attention_gcn_forward.33} parent=5 // pred_check
      _
    $region30: #{cross_attention_gcn_forward.33} parent=5 // pred_check_branch
      %164 = sbr.rel (%p161) target = $region32
    $region31: #{cross_attention_gcn_forward.33} parent=5 // pred_region
      %s165 = ssub.s32 %s9, 1
      %s166 = smul.u32 4, %s14
      %p167 = scmp.lt.s32.totalorder %s166, 7
      %s168 = scalar_select %p167, %s166, 7
      %s169 = smul.addr %s168, 8
      %s170 = scalar_lea.vmem %s0, %s169
      %p171 = pneg %p35
      %p172 = pneg %p32
      %s173 = smul.u32 4, %s14
      %p174 = scmp.lt.s32.totalorder %s173, 7
      %s175 = scalar_select %p174, %s173, 7
      %s176 = smul.addr %s175, 8
      %s177 = scalar_lea.vmem %s1, %s176
      %p178 = pneg %p61
      %p179 = pneg %p58
      %s180 = smul.u32 4, %s14
      %p181 = scmp.lt.s32.totalorder %s180, 7
      %s182 = scalar_select %p181, %s180, 7
      %s183 = smul.addr %s182, 8
      %s184 = scalar_lea.vmem %s2, %s183
      %p185 = pneg %p87
      %p186 = pneg %p84
      %p187 = pneg %p113
      %p188 = pneg %p110
      %s189 = smul.u32 4, %s14
      %p190 = scmp.lt.s32.totalorder %s189, 7
      %s191 = scalar_select %p190, %s189, 7
      %s192 = smul.addr %s191, 8
      %s193 = scalar_lea.vmem %s3, %s192
      %s194 = smul.u32 4, %s14
      %p195 = scmp.lt.s32.totalorder %s194, 7
      %s196 = scalar_select %p195, %s194, 7
      %s197 = smul.addr %s196, 8
      %s198 = scalar_lea.vmem %s0, %s197
      %s199 = smul.u32 4, %s14
      %s200 = smul.u32 4, %s14
      %p201 = scmp.lt.s32.totalorder %s200, 7
      %s202 = scalar_select %p201, %s200, 7
      %s203 = smul.addr %s202, 8
      %s204 = scalar_lea.vmem %s1, %s203
      %s205 = smul.u32 4, %s14
      %s206 = smul.u32 4, %s14
      %p207 = scmp.lt.s32.totalorder %s206, 7
      %s208 = scalar_select %p207, %s206, 7
      %s209 = smul.addr %s208, 8
      %s210 = scalar_lea.vmem %s2, %s209
      %s211 = smul.u32 4, %s14
      %s212 = smul.u32 4, %s14
      %p213 = scmp.lt.s32.totalorder %s212, 7
      %s214 = scalar_select %p213, %s212, 7
      %s215 = smul.addr %s214, 8
      %s216 = scalar_lea.vmem %s3, %s215
      %s217 = smul.u32 4, %s14
      %v218 = vld [vmem:[%s198] sm:$0xff]
      %v219 = vld [vmem:[%s198 + $0x8] sm:$0xff]
      %v220 = vld [vmem:[%s198 + $0x10] sm:$0xff]
      %v221 = vld [vmem:[%s198 + $0x18] sm:$0xff]
      %v222 = vld [vmem:[%s204] sm:$0xff]
      %v223 = vld [vmem:[%s204 + $0x8] sm:$0xff]
      %v224 = vld [vmem:[%s204 + $0x10] sm:$0xff]
      %v225 = vld [vmem:[%s204 + $0x18] sm:$0xff]
      %v226 = vld [vmem:[%s210] sm:$0xff]
      %v227 = vld [vmem:[%s210 + $0x8] sm:$0xff]
      %v228 = vld [vmem:[%s210 + $0x10] sm:$0xff]
      %v229 = vld [vmem:[%s210 + $0x18] sm:$0xff]
      %vm230 = vcmask 64512
      %v232 = vsel %vm230, %v218, 0
      %v235 = vsel %vm230, %v222, 0
      %237 = vmatprep.subr.mxu0 0.0
      %238 = vmatpush1.xpose.msra.mxu0 0.0
      %239 = vmatprep.subr.mxu0 0.0
      %240 = vmatpush1.xpose.msra.mxu0 0.0
      %241 = vmatprep.subr.mxu0 0.0
      %242 = vmatpush1.xpose.msra.mxu0 0.0
      %243 = vmatprep.subr.mxu0 0.0
      %244 = vmatpush1.xpose.msra.mxu0 0.0
      %245 = vmatprep.subr.mxu0 0.0
      %246 = vmatpush1.xpose.msra.mxu0 0.0
      %247 = vmatprep.subr.mxu0 0.0
      %248 = vmatpush1.xpose.msra.mxu0 0.0
      %249 = vmatprep.subr.mxu0 0.0
      %250 = vmatpush1.xpose.msra.mxu0 0.0
      %251 = vmatprep.subr.mxu0 0.0
      %252 = vmatpush1.xpose.msra.mxu0 0.0
      %253 = vmatprep.subr.mxu0 0.0
      %254 = vmatpush1.xpose.msra.mxu0 0.0
      %255 = vmatprep.subr.mxu0 0.0
      %256 = vmatpush1.xpose.msra.mxu0 0.0
      %257 = vmatprep.subr.mxu0 0.0
      %258 = vmatpush1.xpose.msra.mxu0 0.0
      %259 = vmatprep.subr.mxu0 0.0
      %260 = vmatpush1.xpose.msra.mxu0 0.0
      %261 = vmatprep.subr.mxu0 0.0
      %262 = vmatpush1.xpose.msra.mxu0 0.0
      %263 = vmatprep.subr.mxu0 0.0
      %264 = vmatpush1.xpose.msra.mxu0 0.0
      %265 = vmatprep.subr.mxu0 0.0
      %266 = vmatpush1.xpose.msra.mxu0 0.0
      %267 = vmatprep.subr.mxu0 0.0
      %268 = vmatpush1.xpose.msra.mxu0 %v235
      %269 = vmatprep.subr.mxu0 0.0
      %270 = vmatpush2.xpose.msra.mxu0 0.0
      %271 = vmatprep.subr.mxu0 0.0
      %272 = vmatpush2.xpose.msra.mxu0 0.0
      %273 = vmatprep.subr.mxu0 0.0
      %274 = vmatpush2.xpose.msra.mxu0 0.0
      %275 = vmatprep.subr.mxu0 0.0
      %276 = vmatpush2.xpose.msra.mxu0 0.0
      %277 = vmatprep.subr.mxu0 0.0
      %278 = vmatpush2.xpose.msra.mxu0 0.0
      %279 = vmatprep.subr.mxu0 0.0
      %280 = vmatpush2.xpose.msra.mxu0 0.0
      %281 = vmatprep.subr.mxu0 0.0
      %282 = vmatpush2.xpose.msra.mxu0 0.0
      %283 = vmatprep.subr.mxu0 0.0
      %284 = vmatpush2.xpose.msra.mxu0 0.0
      %285 = vmatprep.subr.mxu0 0.0
      %286 = vmatpush2.xpose.msra.mxu0 0.0
      %287 = vmatprep.subr.mxu0 0.0
      %288 = vmatpush2.xpose.msra.mxu0 0.0
      %289 = vmatprep.subr.mxu0 0.0
      %290 = vmatpush2.xpose.msra.mxu0 0.0
      %291 = vmatprep.subr.mxu0 0.0
      %292 = vmatpush2.xpose.msra.mxu0 0.0
      %293 = vmatprep.subr.mxu0 0.0
      %294 = vmatpush2.xpose.msra.mxu0 0.0
      %295 = vmatprep.subr.mxu0 0.0
      %296 = vmatpush2.xpose.msra.mxu0 0.0
      %297 = vmatprep.subr.mxu0 0.0
      %298 = vmatpush2.xpose.msra.mxu0 0.0
      %299 = vmatprep.subr.mxu0 0.0
      %300 = vmatpush2.xpose.msra.mxu0 0.0
      %301 = vmatprep.mubr.f32.mxu0 0.0
      %302 = vmatmul.mubr.f32.gmra.mxu0 %v232
      %v303 = vpop.f32.mrf.mxu0
      %v304 = vadd.f32 0.0, %v303
      %v305 = vpop.f32.mrf.mxu0
      %306 = vdwg.mxu0
      %v308 = vsel %vm230, %v219, 0
      %v311 = vsel %vm230, %v223, 0
      %313 = vmatprep.subr.mxu0 0.0
      %314 = vmatpush1.xpose.msra.mxu0 0.0
      %315 = vmatprep.subr.mxu0 0.0
      %316 = vmatpush1.xpose.msra.mxu0 0.0
      %317 = vmatprep.subr.mxu0 0.0
      %318 = vmatpush1.xpose.msra.mxu0 0.0
      %319 = vmatprep.subr.mxu0 0.0
      %320 = vmatpush1.xpose.msra.mxu0 0.0
      %321 = vmatprep.subr.mxu0 0.0
      %322 = vmatpush1.xpose.msra.mxu0 0.0
      %323 = vmatprep.subr.mxu0 0.0
      %324 = vmatpush1.xpose.msra.mxu0 0.0
      %325 = vmatprep.subr.mxu0 0.0
      %326 = vmatpush1.xpose.msra.mxu0 0.0
      %327 = vmatprep.subr.mxu0 0.0
      %328 = vmatpush1.xpose.msra.mxu0 0.0
      %329 = vmatprep.subr.mxu0 0.0
      %330 = vmatpush1.xpose.msra.mxu0 0.0
      %331 = vmatprep.subr.mxu0 0.0
      %332 = vmatpush1.xpose.msra.mxu0 0.0
      %333 = vmatprep.subr.mxu0 0.0
      %334 = vmatpush1.xpose.msra.mxu0 0.0
      %335 = vmatprep.subr.mxu0 0.0
      %336 = vmatpush1.xpose.msra.mxu0 0.0
      %337 = vmatprep.subr.mxu0 0.0
      %338 = vmatpush1.xpose.msra.mxu0 0.0
      %339 = vmatprep.subr.mxu0 0.0
      %340 = vmatpush1.xpose.msra.mxu0 0.0
      %341 = vmatprep.subr.mxu0 0.0
      %342 = vmatpush1.xpose.msra.mxu0 0.0
      %343 = vmatprep.subr.mxu0 0.0
      %344 = vmatpush1.xpose.msra.mxu0 %v311
      %345 = vmatprep.subr.mxu0 0.0
      %346 = vmatpush2.xpose.msra.mxu0 0.0
      %347 = vmatprep.subr.mxu0 0.0
      %348 = vmatpush2.xpose.msra.mxu0 0.0
      %349 = vmatprep.subr.mxu0 0.0
      %350 = vmatpush2.xpose.msra.mxu0 0.0
      %351 = vmatprep.subr.mxu0 0.0
      %352 = vmatpush2.xpose.msra.mxu0 0.0
      %353 = vmatprep.subr.mxu0 0.0
      %354 = vmatpush2.xpose.msra.mxu0 0.0
      %355 = vmatprep.subr.mxu0 0.0
      %356 = vmatpush2.xpose.msra.mxu0 0.0
      %357 = vmatprep.subr.mxu0 0.0
      %358 = vmatpush2.xpose.msra.mxu0 0.0
      %359 = vmatprep.subr.mxu0 0.0
      %360 = vmatpush2.xpose.msra.mxu0 0.0
      %361 = vmatprep.subr.mxu0 0.0
      %362 = vmatpush2.xpose.msra.mxu0 0.0
      %363 = vmatprep.subr.mxu0 0.0
      %364 = vmatpush2.xpose.msra.mxu0 0.0
      %365 = vmatprep.subr.mxu0 0.0
      %366 = vmatpush2.xpose.msra.mxu0 0.0
      %367 = vmatprep.subr.mxu0 0.0
      %368 = vmatpush2.xpose.msra.mxu0 0.0
      %369 = vmatprep.subr.mxu0 0.0
      %370 = vmatpush2.xpose.msra.mxu0 0.0
      %371 = vmatprep.subr.mxu0 0.0
      %372 = vmatpush2.xpose.msra.mxu0 0.0
      %373 = vmatprep.subr.mxu0 0.0
      %374 = vmatpush2.xpose.msra.mxu0 0.0
      %375 = vmatprep.subr.mxu0 0.0
      %376 = vmatpush2.xpose.msra.mxu0 0.0
      %377 = vmatprep.mubr.f32.mxu0 0.0
      %378 = vmatmul.mubr.f32.gmra.mxu0 %v308
      %v379 = vpop.f32.mrf.mxu0
      %v380 = vadd.f32 0.0, %v379
      %v381 = vpop.f32.mrf.mxu0
      %382 = vdwg.mxu0
      %v384 = vsel %vm230, %v220, 0
      %v387 = vsel %vm230, %v224, 0
      %389 = vmatprep.subr.mxu0 0.0
      %390 = vmatpush1.xpose.msra.mxu0 0.0
      %391 = vmatprep.subr.mxu0 0.0
      %392 = vmatpush1.xpose.msra.mxu0 0.0
      %393 = vmatprep.subr.mxu0 0.0
      %394 = vmatpush1.xpose.msra.mxu0 0.0
      %395 = vmatprep.subr.mxu0 0.0
      %396 = vmatpush1.xpose.msra.mxu0 0.0
      %397 = vmatprep.subr.mxu0 0.0
      %398 = vmatpush1.xpose.msra.mxu0 0.0
      %399 = vmatprep.subr.mxu0 0.0
      %400 = vmatpush1.xpose.msra.mxu0 0.0
      %401 = vmatprep.subr.mxu0 0.0
      %402 = vmatpush1.xpose.msra.mxu0 0.0
      %403 = vmatprep.subr.mxu0 0.0
      %404 = vmatpush1.xpose.msra.mxu0 0.0
      %405 = vmatprep.subr.mxu0 0.0
      %406 = vmatpush1.xpose.msra.mxu0 0.0
      %407 = vmatprep.subr.mxu0 0.0
      %408 = vmatpush1.xpose.msra.mxu0 0.0
      %409 = vmatprep.subr.mxu0 0.0
      %410 = vmatpush1.xpose.msra.mxu0 0.0
      %411 = vmatprep.subr.mxu0 0.0
      %412 = vmatpush1.xpose.msra.mxu0 0.0
      %413 = vmatprep.subr.mxu0 0.0
      %414 = vmatpush1.xpose.msra.mxu0 0.0
      %415 = vmatprep.subr.mxu0 0.0
      %416 = vmatpush1.xpose.msra.mxu0 0.0
      %417 = vmatprep.subr.mxu0 0.0
      %418 = vmatpush1.xpose.msra.mxu0 0.0
      %419 = vmatprep.subr.mxu0 0.0
      %420 = vmatpush1.xpose.msra.mxu0 %v387
      %421 = vmatprep.subr.mxu0 0.0
      %422 = vmatpush2.xpose.msra.mxu0 0.0
      %423 = vmatprep.subr.mxu0 0.0
      %424 = vmatpush2.xpose.msra.mxu0 0.0
      %425 = vmatprep.subr.mxu0 0.0
      %426 = vmatpush2.xpose.msra.mxu0 0.0
      %427 = vmatprep.subr.mxu0 0.0
      %428 = vmatpush2.xpose.msra.mxu0 0.0
      %429 = vmatprep.subr.mxu0 0.0
      %430 = vmatpush2.xpose.msra.mxu0 0.0
      %431 = vmatprep.subr.mxu0 0.0
      %432 = vmatpush2.xpose.msra.mxu0 0.0
      %433 = vmatprep.subr.mxu0 0.0
      %434 = vmatpush2.xpose.msra.mxu0 0.0
      %435 = vmatprep.subr.mxu0 0.0
      %436 = vmatpush2.xpose.msra.mxu0 0.0
      %437 = vmatprep.subr.mxu0 0.0
      %438 = vmatpush2.xpose.msra.mxu0 0.0
      %439 = vmatprep.subr.mxu0 0.0
      %440 = vmatpush2.xpose.msra.mxu0 0.0
      %441 = vmatprep.subr.mxu0 0.0
      %442 = vmatpush2.xpose.msra.mxu0 0.0
      %443 = vmatprep.subr.mxu0 0.0
      %444 = vmatpush2.xpose.msra.mxu0 0.0
      %445 = vmatprep.subr.mxu0 0.0
      %446 = vmatpush2.xpose.msra.mxu0 0.0
      %447 = vmatprep.subr.mxu0 0.0
      %448 = vmatpush2.xpose.msra.mxu0 0.0
      %449 = vmatprep.subr.mxu0 0.0
      %450 = vmatpush2.xpose.msra.mxu0 0.0
      %451 = vmatprep.subr.mxu0 0.0
      %452 = vmatpush2.xpose.msra.mxu0 0.0
      %453 = vmatprep.mubr.f32.mxu0 0.0
      %454 = vmatmul.mubr.f32.gmra.mxu0 %v384
      %v455 = vpop.f32.mrf.mxu0
      %v456 = vadd.f32 0.0, %v455
      %v457 = vpop.f32.mrf.mxu0
      %458 = vdwg.mxu0
      %v460 = vsel %vm230, %v221, 0
      %v463 = vsel %vm230, %v225, 0
      %465 = vmatprep.subr.mxu0 0.0
      %466 = vmatpush1.xpose.msra.mxu0 0.0
      %467 = vmatprep.subr.mxu0 0.0
      %468 = vmatpush1.xpose.msra.mxu0 0.0
      %469 = vmatprep.subr.mxu0 0.0
      %470 = vmatpush1.xpose.msra.mxu0 0.0
      %471 = vmatprep.subr.mxu0 0.0
      %472 = vmatpush1.xpose.msra.mxu0 0.0
      %473 = vmatprep.subr.mxu0 0.0
      %474 = vmatpush1.xpose.msra.mxu0 0.0
      %475 = vmatprep.subr.mxu0 0.0
      %476 = vmatpush1.xpose.msra.mxu0 0.0
      %477 = vmatprep.subr.mxu0 0.0
      %478 = vmatpush1.xpose.msra.mxu0 0.0
      %479 = vmatprep.subr.mxu0 0.0
      %480 = vmatpush1.xpose.msra.mxu0 0.0
      %481 = vmatprep.subr.mxu0 0.0
      %482 = vmatpush1.xpose.msra.mxu0 0.0
      %483 = vmatprep.subr.mxu0 0.0
      %484 = vmatpush1.xpose.msra.mxu0 0.0
      %485 = vmatprep.subr.mxu0 0.0
      %486 = vmatpush1.xpose.msra.mxu0 0.0
      %487 = vmatprep.subr.mxu0 0.0
      %488 = vmatpush1.xpose.msra.mxu0 0.0
      %489 = vmatprep.subr.mxu0 0.0
      %490 = vmatpush1.xpose.msra.mxu0 0.0
      %491 = vmatprep.subr.mxu0 0.0
      %492 = vmatpush1.xpose.msra.mxu0 0.0
      %493 = vmatprep.subr.mxu0 0.0
      %494 = vmatpush1.xpose.msra.mxu0 0.0
      %495 = vmatprep.subr.mxu0 0.0
      %496 = vmatpush1.xpose.msra.mxu0 %v463
      %497 = vmatprep.subr.mxu0 0.0
      %498 = vmatpush2.xpose.msra.mxu0 0.0
      %499 = vmatprep.subr.mxu0 0.0
      %500 = vmatpush2.xpose.msra.mxu0 0.0
      %501 = vmatprep.subr.mxu0 0.0
      %502 = vmatpush2.xpose.msra.mxu0 0.0
      %503 = vmatprep.subr.mxu0 0.0
      %504 = vmatpush2.xpose.msra.mxu0 0.0
      %505 = vmatprep.subr.mxu0 0.0
      %506 = vmatpush2.xpose.msra.mxu0 0.0
      %507 = vmatprep.subr.mxu0 0.0
      %508 = vmatpush2.xpose.msra.mxu0 0.0
      %509 = vmatprep.subr.mxu0 0.0
      %510 = vmatpush2.xpose.msra.mxu0 0.0
      %511 = vmatprep.subr.mxu0 0.0
      %512 = vmatpush2.xpose.msra.mxu0 0.0
      %513 = vmatprep.subr.mxu0 0.0
      %514 = vmatpush2.xpose.msra.mxu0 0.0
      %515 = vmatprep.subr.mxu0 0.0
      %516 = vmatpush2.xpose.msra.mxu0 0.0
      %517 = vmatprep.subr.mxu0 0.0
      %518 = vmatpush2.xpose.msra.mxu0 0.0
      %519 = vmatprep.subr.mxu0 0.0
      %520 = vmatpush2.xpose.msra.mxu0 0.0
      %521 = vmatprep.subr.mxu0 0.0
      %522 = vmatpush2.xpose.msra.mxu0 0.0
      %523 = vmatprep.subr.mxu0 0.0
      %524 = vmatpush2.xpose.msra.mxu0 0.0
      %525 = vmatprep.subr.mxu0 0.0
      %526 = vmatpush2.xpose.msra.mxu0 0.0
      %527 = vmatprep.subr.mxu0 0.0
      %528 = vmatpush2.xpose.msra.mxu0 0.0
      %529 = vmatprep.mubr.f32.mxu0 0.0
      %530 = vmatmul.mubr.f32.gmra.mxu0 %v460
      %v531 = vpop.f32.mrf.mxu0
      %v532 = vadd.f32 0.0, %v531
      %v533 = vpop.f32.mrf.mxu0
      %534 = vdwg.mxu0
      %v535 = vmul.f32 %v304, 0.35355338
      %v536 = vmul.f32 %v380, 0.35355338
      %v537 = vmul.f32 %v456, 0.35355338
      %v538 = vmul.f32 %v532, 0.35355338
      %v539 = vsel %vm230, %v535, -inf
      %540 = vmax.xlane.f32.xlu0 %v539
      %v541 = vpop.xlane.xlu0 %540
      %v542 = vsel %vm230, %v536, -inf
      %543 = vmax.xlane.f32.xlu0 %v542
      %v544 = vpop.xlane.xlu0 %543
      %v545 = vsel %vm230, %v537, -inf
      %546 = vmax.xlane.f32.xlu0 %v545
      %v547 = vpop.xlane.xlu0 %546
      %v548 = vsel %vm230, %v538, -inf
      %549 = vmax.xlane.f32.xlu0 %v548
      %v550 = vpop.xlane.xlu0 %549
      %v551 = vsub.f32 %v535, %v541
      %v552 = vsub.f32 %v536, %v544
      %v553 = vsub.f32 %v537, %v547
      %v554 = vsub.f32 %v538, %v550
      %v555 = vmul.f32 %v551, 1.442695
      %v556 = vpow.pop %v555
      %v557 = vmul.f32 %v552, 1.442695
      %v558 = vpow.pop %v557
      %v559 = vmul.f32 %v553, 1.442695
      %v560 = vpow.pop %v559
      %v561 = vmul.f32 %v554, 1.442695
      %v562 = vpow.pop %v561
      %v563 = vsel %vm230, %v556, 0.0
      %564 = vadd.xlane.f32.xlu0 %v563
      %v565 = vpop.xlane.xlu0 %564
      %v566 = vsel %vm230, %v558, 0.0
      %567 = vadd.xlane.f32.xlu0 %v566
      %v568 = vpop.xlane.xlu0 %567
      %v569 = vsel %vm230, %v560, 0.0
      %570 = vadd.xlane.f32.xlu0 %v569
      %v571 = vpop.xlane.xlu0 %570
      %v572 = vsel %vm230, %v562, 0.0
      %573 = vadd.xlane.f32.xlu0 %v572
      %v574 = vpop.xlane.xlu0 %573
      %v575 = vrcp.pop %v565
      %v576 = vrcp.pop %v568
      %v577 = vrcp.pop %v571
      %v578 = vrcp.pop %v574
      %v580 = vsel %vm230, %v556, 0
      %582 = vmatprep.subr.mxu0 0.0
      %583 = vmatpush1.msra.mxu0 0.0
      %584 = vmatprep.subr.mxu0 0.0
      %585 = vmatpush1.msra.mxu0 0.0
      %586 = vmatprep.subr.mxu0 0.0
      %587 = vmatpush1.msra.mxu0 0.0
      %588 = vmatprep.subr.mxu0 0.0
      %589 = vmatpush1.msra.mxu0 0.0
      %590 = vmatprep.subr.mxu0 0.0
      %591 = vmatpush1.msra.mxu0 0.0
      %592 = vmatprep.subr.mxu0 0.0
      %593 = vmatpush1.msra.mxu0 0.0
      %594 = vmatprep.subr.mxu0 0.0
      %595 = vmatpush1.msra.mxu0 0.0
      %596 = vmatprep.subr.mxu0 0.0
      %597 = vmatpush1.msra.mxu0 0.0
      %598 = vmatprep.subr.mxu0 0.0
      %599 = vmatpush1.msra.mxu0 0.0
      %600 = vmatprep.subr.mxu0 0.0
      %601 = vmatpush1.msra.mxu0 0.0
      %602 = vmatprep.subr.mxu0 0.0
      %603 = vmatpush1.msra.mxu0 0.0
      %604 = vmatprep.subr.mxu0 0.0
      %605 = vmatpush1.msra.mxu0 0.0
      %606 = vmatprep.subr.mxu0 0.0
      %607 = vmatpush1.msra.mxu0 0.0
      %608 = vmatprep.subr.mxu0 0.0
      %609 = vmatpush1.msra.mxu0 0.0
      %610 = vmatprep.subr.mxu0 0.0
      %611 = vmatpush1.msra.mxu0 0.0
      %612 = vmatprep.subr.mxu0 0.0
      %613 = vmatpush1.msra.mxu0 %v226
      %614 = vmatprep.subr.mxu0 0.0
      %615 = vmatpush2.msra.mxu0 0.0
      %616 = vmatprep.subr.mxu0 0.0
      %617 = vmatpush2.msra.mxu0 0.0
      %618 = vmatprep.subr.mxu0 0.0
      %619 = vmatpush2.msra.mxu0 0.0
      %620 = vmatprep.subr.mxu0 0.0
      %621 = vmatpush2.msra.mxu0 0.0
      %622 = vmatprep.subr.mxu0 0.0
      %623 = vmatpush2.msra.mxu0 0.0
      %624 = vmatprep.subr.mxu0 0.0
      %625 = vmatpush2.msra.mxu0 0.0
      %626 = vmatprep.subr.mxu0 0.0
      %627 = vmatpush2.msra.mxu0 0.0
      %628 = vmatprep.subr.mxu0 0.0
      %629 = vmatpush2.msra.mxu0 0.0
      %630 = vmatprep.subr.mxu0 0.0
      %631 = vmatpush2.msra.mxu0 0.0
      %632 = vmatprep.subr.mxu0 0.0
      %633 = vmatpush2.msra.mxu0 0.0
      %634 = vmatprep.subr.mxu0 0.0
      %635 = vmatpush2.msra.mxu0 0.0
      %636 = vmatprep.subr.mxu0 0.0
      %637 = vmatpush2.msra.mxu0 0.0
      %638 = vmatprep.subr.mxu0 0.0
      %639 = vmatpush2.msra.mxu0 0.0
      %640 = vmatprep.subr.mxu0 0.0
      %641 = vmatpush2.msra.mxu0 0.0
      %642 = vmatprep.subr.mxu0 0.0
      %643 = vmatpush2.msra.mxu0 0.0
      %644 = vmatprep.subr.mxu0 0.0
      %645 = vmatpush2.msra.mxu0 0.0
      %646 = vmatprep.mubr.f32.mxu0 0.0
      %647 = vmatmul.mubr.f32.gmra.mxu0 %v580
      %v648 = vpop.f32.mrf.mxu0
      %v649 = vadd.f32 0.0, %v648
      %v650 = vpop.f32.mrf.mxu0
      %651 = vdwg.mxu0
      %v653 = vsel %vm230, %v558, 0
      %655 = vmatprep.subr.mxu0 0.0
      %656 = vmatpush1.msra.mxu0 0.0
      %657 = vmatprep.subr.mxu0 0.0
      %658 = vmatpush1.msra.mxu0 0.0
      %659 = vmatprep.subr.mxu0 0.0
      %660 = vmatpush1.msra.mxu0 0.0
      %661 = vmatprep.subr.mxu0 0.0
      %662 = vmatpush1.msra.mxu0 0.0
      %663 = vmatprep.subr.mxu0 0.0
      %664 = vmatpush1.msra.mxu0 0.0
      %665 = vmatprep.subr.mxu0 0.0
      %666 = vmatpush1.msra.mxu0 0.0
      %667 = vmatprep.subr.mxu0 0.0
      %668 = vmatpush1.msra.mxu0 0.0
      %669 = vmatprep.subr.mxu0 0.0
      %670 = vmatpush1.msra.mxu0 0.0
      %671 = vmatprep.subr.mxu0 0.0
      %672 = vmatpush1.msra.mxu0 0.0
      %673 = vmatprep.subr.mxu0 0.0
      %674 = vmatpush1.msra.mxu0 0.0
      %675 = vmatprep.subr.mxu0 0.0
      %676 = vmatpush1.msra.mxu0 0.0
      %677 = vmatprep.subr.mxu0 0.0
      %678 = vmatpush1.msra.mxu0 0.0
      %679 = vmatprep.subr.mxu0 0.0
      %680 = vmatpush1.msra.mxu0 0.0
      %681 = vmatprep.subr.mxu0 0.0
      %682 = vmatpush1.msra.mxu0 0.0
      %683 = vmatprep.subr.mxu0 0.0
      %684 = vmatpush1.msra.mxu0 0.0
      %685 = vmatprep.subr.mxu0 0.0
      %686 = vmatpush1.msra.mxu0 %v227
      %687 = vmatprep.subr.mxu0 0.0
      %688 = vmatpush2.msra.mxu0 0.0
      %689 = vmatprep.subr.mxu0 0.0
      %690 = vmatpush2.msra.mxu0 0.0
      %691 = vmatprep.subr.mxu0 0.0
      %692 = vmatpush2.msra.mxu0 0.0
      %693 = vmatprep.subr.mxu0 0.0
      %694 = vmatpush2.msra.mxu0 0.0
      %695 = vmatprep.subr.mxu0 0.0
      %696 = vmatpush2.msra.mxu0 0.0
      %697 = vmatprep.subr.mxu0 0.0
      %698 = vmatpush2.msra.mxu0 0.0
      %699 = vmatprep.subr.mxu0 0.0
      %700 = vmatpush2.msra.mxu0 0.0
      %701 = vmatprep.subr.mxu0 0.0
      %702 = vmatpush2.msra.mxu0 0.0
      %703 = vmatprep.subr.mxu0 0.0
      %704 = vmatpush2.msra.mxu0 0.0
      %705 = vmatprep.subr.mxu0 0.0
      %706 = vmatpush2.msra.mxu0 0.0
      %707 = vmatprep.subr.mxu0 0.0
      %708 = vmatpush2.msra.mxu0 0.0
      %709 = vmatprep.subr.mxu0 0.0
      %710 = vmatpush2.msra.mxu0 0.0
      %711 = vmatprep.subr.mxu0 0.0
      %712 = vmatpush2.msra.mxu0 0.0
      %713 = vmatprep.subr.mxu0 0.0
      %714 = vmatpush2.msra.mxu0 0.0
      %715 = vmatprep.subr.mxu0 0.0
      %716 = vmatpush2.msra.mxu0 0.0
      %717 = vmatprep.subr.mxu0 0.0
      %718 = vmatpush2.msra.mxu0 0.0
      %719 = vmatprep.mubr.f32.mxu0 0.0
      %720 = vmatmul.mubr.f32.gmra.mxu0 %v653
      %v721 = vpop.f32.mrf.mxu0
      %v722 = vadd.f32 0.0, %v721
      %v723 = vpop.f32.mrf.mxu0
      %724 = vdwg.mxu0
      %v726 = vsel %vm230, %v560, 0
      %728 = vmatprep.subr.mxu0 0.0
      %729 = vmatpush1.msra.mxu0 0.0
      %730 = vmatprep.subr.mxu0 0.0
      %731 = vmatpush1.msra.mxu0 0.0
      %732 = vmatprep.subr.mxu0 0.0
      %733 = vmatpush1.msra.mxu0 0.0
      %734 = vmatprep.subr.mxu0 0.0
      %735 = vmatpush1.msra.mxu0 0.0
      %736 = vmatprep.subr.mxu0 0.0
      %737 = vmatpush1.msra.mxu0 0.0
      %738 = vmatprep.subr.mxu0 0.0
      %739 = vmatpush1.msra.mxu0 0.0
      %740 = vmatprep.subr.mxu0 0.0
      %741 = vmatpush1.msra.mxu0 0.0
      %742 = vmatprep.subr.mxu0 0.0
      %743 = vmatpush1.msra.mxu0 0.0
      %744 = vmatprep.subr.mxu0 0.0
      %745 = vmatpush1.msra.mxu0 0.0
      %746 = vmatprep.subr.mxu0 0.0
      %747 = vmatpush1.msra.mxu0 0.0
      %748 = vmatprep.subr.mxu0 0.0
      %749 = vmatpush1.msra.mxu0 0.0
      %750 = vmatprep.subr.mxu0 0.0
      %751 = vmatpush1.msra.mxu0 0.0
      %752 = vmatprep.subr.mxu0 0.0
      %753 = vmatpush1.msra.mxu0 0.0
      %754 = vmatprep.subr.mxu0 0.0
      %755 = vmatpush1.msra.mxu0 0.0
      %756 = vmatprep.subr.mxu0 0.0
      %757 = vmatpush1.msra.mxu0 0.0
      %758 = vmatprep.subr.mxu0 0.0
      %759 = vmatpush1.msra.mxu0 %v228
      %760 = vmatprep.subr.mxu0 0.0
      %761 = vmatpush2.msra.mxu0 0.0
      %762 = vmatprep.subr.mxu0 0.0
      %763 = vmatpush2.msra.mxu0 0.0
      %764 = vmatprep.subr.mxu0 0.0
      %765 = vmatpush2.msra.mxu0 0.0
      %766 = vmatprep.subr.mxu0 0.0
      %767 = vmatpush2.msra.mxu0 0.0
      %768 = vmatprep.subr.mxu0 0.0
      %769 = vmatpush2.msra.mxu0 0.0
      %770 = vmatprep.subr.mxu0 0.0
      %771 = vmatpush2.msra.mxu0 0.0
      %772 = vmatprep.subr.mxu0 0.0
      %773 = vmatpush2.msra.mxu0 0.0
      %774 = vmatprep.subr.mxu0 0.0
      %775 = vmatpush2.msra.mxu0 0.0
      %776 = vmatprep.subr.mxu0 0.0
      %777 = vmatpush2.msra.mxu0 0.0
      %778 = vmatprep.subr.mxu0 0.0
      %779 = vmatpush2.msra.mxu0 0.0
      %780 = vmatprep.subr.mxu0 0.0
      %781 = vmatpush2.msra.mxu0 0.0
      %782 = vmatprep.subr.mxu0 0.0
      %783 = vmatpush2.msra.mxu0 0.0
      %784 = vmatprep.subr.mxu0 0.0
      %785 = vmatpush2.msra.mxu0 0.0
      %786 = vmatprep.subr.mxu0 0.0
      %787 = vmatpush2.msra.mxu0 0.0
      %788 = vmatprep.subr.mxu0 0.0
      %789 = vmatpush2.msra.mxu0 0.0
      %790 = vmatprep.subr.mxu0 0.0
      %791 = vmatpush2.msra.mxu0 0.0
      %792 = vmatprep.mubr.f32.mxu0 0.0
      %793 = vmatmul.mubr.f32.gmra.mxu0 %v726
      %v794 = vpop.f32.mrf.mxu0
      %v795 = vadd.f32 0.0, %v794
      %v796 = vpop.f32.mrf.mxu0
      %797 = vdwg.mxu0
      %v799 = vsel %vm230, %v562, 0
      %801 = vmatprep.subr.mxu0 0.0
      %802 = vmatpush1.msra.mxu0 0.0
      %803 = vmatprep.subr.mxu0 0.0
      %804 = vmatpush1.msra.mxu0 0.0
      %805 = vmatprep.subr.mxu0 0.0
      %806 = vmatpush1.msra.mxu0 0.0
      %807 = vmatprep.subr.mxu0 0.0
      %808 = vmatpush1.msra.mxu0 0.0
      %809 = vmatprep.subr.mxu0 0.0
      %810 = vmatpush1.msra.mxu0 0.0
      %811 = vmatprep.subr.mxu0 0.0
      %812 = vmatpush1.msra.mxu0 0.0
      %813 = vmatprep.subr.mxu0 0.0
      %814 = vmatpush1.msra.mxu0 0.0
      %815 = vmatprep.subr.mxu0 0.0
      %816 = vmatpush1.msra.mxu0 0.0
      %817 = vmatprep.subr.mxu0 0.0
      %818 = vmatpush1.msra.mxu0 0.0
      %819 = vmatprep.subr.mxu0 0.0
      %820 = vmatpush1.msra.mxu0 0.0
      %821 = vmatprep.subr.mxu0 0.0
      %822 = vmatpush1.msra.mxu0 0.0
      %823 = vmatprep.subr.mxu0 0.0
      %824 = vmatpush1.msra.mxu0 0.0
      %825 = vmatprep.subr.mxu0 0.0
      %826 = vmatpush1.msra.mxu0 0.0
      %827 = vmatprep.subr.mxu0 0.0
      %828 = vmatpush1.msra.mxu0 0.0
      %829 = vmatprep.subr.mxu0 0.0
      %830 = vmatpush1.msra.mxu0 0.0
      %831 = vmatprep.subr.mxu0 0.0
      %832 = vmatpush1.msra.mxu0 %v229
      %833 = vmatprep.subr.mxu0 0.0
      %834 = vmatpush2.msra.mxu0 0.0
      %835 = vmatprep.subr.mxu0 0.0
      %836 = vmatpush2.msra.mxu0 0.0
      %837 = vmatprep.subr.mxu0 0.0
      %838 = vmatpush2.msra.mxu0 0.0
      %839 = vmatprep.subr.mxu0 0.0
      %840 = vmatpush2.msra.mxu0 0.0
      %841 = vmatprep.subr.mxu0 0.0
      %842 = vmatpush2.msra.mxu0 0.0
      %843 = vmatprep.subr.mxu0 0.0
      %844 = vmatpush2.msra.mxu0 0.0
      %845 = vmatprep.subr.mxu0 0.0
      %846 = vmatpush2.msra.mxu0 0.0
      %847 = vmatprep.subr.mxu0 0.0
      %848 = vmatpush2.msra.mxu0 0.0
      %849 = vmatprep.subr.mxu0 0.0
      %850 = vmatpush2.msra.mxu0 0.0
      %851 = vmatprep.subr.mxu0 0.0
      %852 = vmatpush2.msra.mxu0 0.0
      %853 = vmatprep.subr.mxu0 0.0
      %854 = vmatpush2.msra.mxu0 0.0
      %855 = vmatprep.subr.mxu0 0.0
      %856 = vmatpush2.msra.mxu0 0.0
      %857 = vmatprep.subr.mxu0 0.0
      %858 = vmatpush2.msra.mxu0 0.0
      %859 = vmatprep.subr.mxu0 0.0
      %860 = vmatpush2.msra.mxu0 0.0
      %861 = vmatprep.subr.mxu0 0.0
      %862 = vmatpush2.msra.mxu0 0.0
      %863 = vmatprep.subr.mxu0 0.0
      %864 = vmatpush2.msra.mxu0 0.0
      %865 = vmatprep.mubr.f32.mxu0 0.0
      %866 = vmatmul.mubr.f32.gmra.mxu0 %v799
      %v867 = vpop.f32.mrf.mxu0
      %v868 = vadd.f32 0.0, %v867
      %v869 = vpop.f32.mrf.mxu0
      %870 = vdwg.mxu0
      %v871 = vmul.f32 %v649, %v575
      %v872 = vmul.f32 %v722, %v576
      %v873 = vmul.f32 %v795, %v577
      %v874 = vmul.f32 %v868, %v578
      %875 = vst.msk [vmem:[%s216] sm:$0xff] %vm230, %v871
      %876 = vst.msk [vmem:[%s216 + $0x8] sm:$0xff] %vm230, %v872
      %877 = vst.msk [vmem:[%s216 + $0x10] sm:$0xff] %vm230, %v873
      %878 = vst.msk [vmem:[%s216 + $0x18] sm:$0xff] %vm230, %v874
      %s879 = smul.u32 4, %s14
      %p880 = scmp.lt.s32.totalorder %s879, 7
      %s881 = scalar_select %p880, %s879, 7
      %s882 = smul.addr %s881, 8
      %s883 = scalar_lea.vmem %s3, %s882
      // Predicated region
      $region33: #{cross_attention_gcn_forward.33} parent=31 // pred_check
        %p884 = pneg %p110
      $region34: #{cross_attention_gcn_forward.33} parent=31 // pred_check_branch
        %886 = sbr.rel (%p884) target = $region36
      $region35: #{cross_attention_gcn_forward.33} parent=31 // pred_region
        %s887 = smul.u32 4, %s14
      $region36: #{cross_attention_gcn_forward.33} parent=31 // pred_fallthru
        _
    $region32: #{cross_attention_gcn_forward.33} parent=5 // pred_fallthru
      _
    %p888 = scmp.le.s32.totalorder 2, %s9
    // Predicated region
    $region37: #{cross_attention_gcn_forward.33} parent=5 // pred_check
      %p889 = pneg %p888
    $region38: #{cross_attention_gcn_forward.33} parent=5 // pred_check_branch
      %891 = sbr.rel (%p889) target = $region40
    $region39: #{cross_attention_gcn_forward.33} parent=5 // pred_region
      %s892 = ssub.s32 %s9, 2
      // Predicated region
      $region41: #{cross_attention_gcn_forward.33} parent=39 // pred_check
        %p893 = pneg %p116
      $region42: #{cross_attention_gcn_forward.33} parent=39 // pred_check_branch
        %895 = sbr.rel (%p893) target = $region44
      $region43: #{cross_attention_gcn_forward.33} parent=39 // pred_region
        %s896 = smul.u32 4, %s15
        %p897 = scmp.lt.s32.totalorder %s896, 7
        %s898 = scalar_select %p897, %s896, 7
        %s899 = smul.addr %s898, 8
        %s900 = scalar_lea.vmem %s3, %s899
      $region44: #{cross_attention_gcn_forward.33} parent=39 // pred_fallthru
        _
    $region40: #{cross_attention_gcn_forward.33} parent=5 // pred_fallthru
      _
  $region6: #{cross_attention_gcn_forward.33} parent=0 // loop_footer
    %s13 = sadd.s32 1, %s9
  $region7: #{cross_attention_gcn_forward.33} parent=0 // loop_footer_branch
    %8 = sbr.rel target = $region3
  $region8: #{cross_attention_gcn_forward.33} parent=0 // loop_exit
    _

// kernel: cross_attention_gcn_forward.34
$region0: #{cross_attention_gcn_forward.34}
  #allocation0 [shape = 'u32[]', space=smem, size = 0x4, offset = 0x4, fixed_abs, tag = 'smem constant byte address 0x4 - core index']
  #allocation1 [shape = 'u32[144,128]{1,0:T(1,128)}', space=vmem, size = 0x12000, scoped, tag = 'internal scratch']
  %s0 = inlined_call_operand.vmem [shape: f32[16,32], index: 0, kind: input, shape index: {}]
  %s1 = inlined_call_operand.vmem [shape: f32[32,32], index: 1, kind: input, shape index: {}]
  %s2 = inlined_call_operand.vmem [shape: f32[1,32], index: 2, kind: input, shape index: {}]
  %s3 = inlined_call_operand.vmem [shape: f32[16,32], index: 3, kind: input, shape index: {}]
  %s4 = inlined_call_operand.vmem [shape: f32[16,32], index: 4, kind: output, shape index: {}]
  %s5 = sld [smem:[#allocation0]]
  $region49: #{cross_attention_gcn_forward.34} parent=0
    _
  %s7 = ssub.s32 1, %s5
  %s8 = scalar_select 0, %s7, %s5
  loop: start=0, step=1, limit=4
  $region2: #{cross_attention_gcn_forward.34} parent=0 // loop_pre_header
    _
  $region3: #{cross_attention_gcn_forward.34} parent=0 // loop_header
    %s10 = sphi 0, %s14
    %p11 = scmp.ge.s32.totalorder %s10, 4
    %s20 = sphi 0, %s22
    %s23 = sphi 0, %s20
    %s24 = sphi 0, %s23
    %s40 = sphi 0, %s24
    %s44 = sphi 0, %s44
    %s46 = sphi 0, %s44
    %s47 = sphi 0, %s46
    %s61 = sphi 0, %s47
    %s65 = sphi 0, %s65
    %s67 = sphi 0, %s65
    %s68 = sphi 0, %s67
    %s82 = sphi 0, %s68
    %s88 = sphi 0, %s90
    %s91 = sphi 0, %s88
    %s92 = sphi 0, %s91
    %s108 = sphi 0, %s92
    %s114 = sphi 0, %s116
    %s117 = sphi 0, %s114
    %s118 = sphi 0, %s117
    %s134 = sphi 0, %s118
  $region4: #{cross_attention_gcn_forward.34} parent=0 // loop_header_branch
    %13 = sbr.rel (%p11) target = $region8
  $region5: #{cross_attention_gcn_forward.34} parent=0 // loop_body
    %s15 = ssub.s32 %s10, 1
    %s16 = ssub.s32 %s10, 2
    %s17 = sadd.s32 %s10, 1
    %s18 = ssub.s32 %s10, %s17
    %p19 = scmp.eq.s32.totalorder %s18, 0
    %s21 = sadd.s32 %s20, 1
    %s22 = scalar_select %p19, %s20, %s21
    %p25 = pneg %p19
    %p26 = scmp.eq.s32.totalorder %s10, 1
    %p27 = por %p25, %p26
    %p28 = scmp.ne.s32.totalorder %s20, %s23
    %p29 = scmp.eq.s32.totalorder %s10, 0
    %p30 = por %p28, %p29
    %p31 = scmp.ne.s32.totalorder %s20, %s23
    %p32 = scmp.eq.s32.totalorder %s15, 1
    %p33 = por %p31, %p32
    %p34 = scmp.ne.s32.totalorder %s23, %s24
    %p35 = scmp.eq.s32.totalorder %s15, 0
    %p36 = por %p34, %p35
    %p37 = scmp.ne.s32.totalorder %s23, %s24
    %p38 = scmp.eq.s32.totalorder %s16, 1
    %p39 = por %p37, %p38
    %p41 = scmp.ne.s32.totalorder %s24, %s40
    %p42 = scmp.eq.s32.totalorder %s16, 0
    %p43 = por %p41, %p42
    %s45 = sadd.s32 %s44, 1
    %p48 = scmp.eq.s32.totalorder %s10, 1
    %p49 = scmp.ne.s32.totalorder %s44, %s46
    %p50 = scmp.eq.s32.totalorder %s10, 0
    %p51 = por %p49, %p50
    %p52 = scmp.ne.s32.totalorder %s44, %s46
    %p53 = scmp.eq.s32.totalorder %s15, 1
    %p54 = por %p52, %p53
    %p55 = scmp.ne.s32.totalorder %s46, %s47
    %p56 = scmp.eq.s32.totalorder %s15, 0
    %p57 = por %p55, %p56
    %p58 = scmp.ne.s32.totalorder %s46, %s47
    %p59 = scmp.eq.s32.totalorder %s16, 1
    %p60 = por %p58, %p59
    %p62 = scmp.ne.s32.totalorder %s47, %s61
    %p63 = scmp.eq.s32.totalorder %s16, 0
    %p64 = por %p62, %p63
    %s66 = sadd.s32 %s65, 1
    %p69 = scmp.eq.s32.totalorder %s10, 1
    %p70 = scmp.ne.s32.totalorder %s65, %s67
    %p71 = scmp.eq.s32.totalorder %s10, 0
    %p72 = por %p70, %p71
    %p73 = scmp.ne.s32.totalorder %s65, %s67
    %p74 = scmp.eq.s32.totalorder %s15, 1
    %p75 = por %p73, %p74
    %p76 = scmp.ne.s32.totalorder %s67, %s68
    %p77 = scmp.eq.s32.totalorder %s15, 0
    %p78 = por %p76, %p77
    %p79 = scmp.ne.s32.totalorder %s67, %s68
    %p80 = scmp.eq.s32.totalorder %s16, 1
    %p81 = por %p79, %p80
    %p83 = scmp.ne.s32.totalorder %s68, %s82
    %p84 = scmp.eq.s32.totalorder %s16, 0
    %p85 = por %p83, %p84
    %s86 = ssub.s32 %s10, %s17
    %p87 = scmp.eq.s32.totalorder %s86, 0
    %s89 = sadd.s32 %s88, 1
    %s90 = scalar_select %p87, %s88, %s89
    %p93 = pneg %p87
    %p94 = scmp.eq.s32.totalorder %s10, 1
    %p95 = por %p93, %p94
    %p96 = scmp.ne.s32.totalorder %s88, %s91
    %p97 = scmp.eq.s32.totalorder %s10, 0
    %p98 = por %p96, %p97
    %p99 = scmp.ne.s32.totalorder %s88, %s91
    %p100 = scmp.eq.s32.totalorder %s15, 1
    %p101 = por %p99, %p100
    %p102 = scmp.ne.s32.totalorder %s91, %s92
    %p103 = scmp.eq.s32.totalorder %s15, 0
    %p104 = por %p102, %p103
    %p105 = scmp.ne.s32.totalorder %s91, %s92
    %p106 = scmp.eq.s32.totalorder %s16, 1
    %p107 = por %p105, %p106
    %p109 = scmp.ne.s32.totalorder %s92, %s108
    %p110 = scmp.eq.s32.totalorder %s16, 0
    %p111 = por %p109, %p110
    %s112 = ssub.s32 %s10, %s17
    %p113 = scmp.eq.s32.totalorder %s112, 0
    %s115 = sadd.s32 %s114, 1
    %s116 = scalar_select %p113, %s114, %s115
    %p119 = pneg %p113
    %p120 = scmp.eq.s32.totalorder %s10, 1
    %p121 = por %p119, %p120
    %p122 = scmp.ne.s32.totalorder %s114, %s117
    %p123 = scmp.eq.s32.totalorder %s10, 0
    %p124 = por %p122, %p123
    %p125 = scmp.ne.s32.totalorder %s114, %s117
    %p126 = scmp.eq.s32.totalorder %s15, 1
    %p127 = por %p125, %p126
    %p128 = scmp.ne.s32.totalorder %s117, %s118
    %p129 = scmp.eq.s32.totalorder %s15, 0
    %p130 = por %p128, %p129
    %p131 = scmp.ne.s32.totalorder %s117, %s118
    %p132 = scmp.eq.s32.totalorder %s16, 1
    %p133 = por %p131, %p132
    %p135 = scmp.ne.s32.totalorder %s118, %s134
    %p136 = scmp.eq.s32.totalorder %s16, 0
    %p137 = por %p135, %p136
    %p138 = scmp.le.s32.totalorder 1, %s10
    %p139 = scmp.lt.s32.totalorder %s10, 3
    %p140 = pnand %p138, %p139
    %p141 = pneg %p140
    // Predicated region
    $region9: #{cross_attention_gcn_forward.34} parent=5 // pred_check
      _
    $region10: #{cross_attention_gcn_forward.34} parent=5 // pred_check_branch
      %143 = sbr.rel (%p140) target = $region12
    $region11: #{cross_attention_gcn_forward.34} parent=5 // pred_region
      %s144 = ssub.s32 %s10, 1
      // Predicated region
      $region13: #{cross_attention_gcn_forward.34} parent=11 // pred_check
        %p145 = pneg %p57
      $region14: #{cross_attention_gcn_forward.34} parent=11 // pred_check_branch
        %147 = sbr.rel (%p145) target = $region16
      $region15: #{cross_attention_gcn_forward.34} parent=11 // pred_region
        _
      $region16: #{cross_attention_gcn_forward.34} parent=11 // pred_fallthru
        _
      // Predicated region
      $region17: #{cross_attention_gcn_forward.34} parent=11 // pred_check
        %p148 = pneg %p78
      $region18: #{cross_attention_gcn_forward.34} parent=11 // pred_check_branch
        %150 = sbr.rel (%p148) target = $region20
      $region19: #{cross_attention_gcn_forward.34} parent=11 // pred_region
        _
      $region20: #{cross_attention_gcn_forward.34} parent=11 // pred_fallthru
        _
    $region12: #{cross_attention_gcn_forward.34} parent=5 // pred_fallthru
      _
    %p151 = scmp.lt.s32.totalorder %s10, 2
    // Predicated region
    $region21: #{cross_attention_gcn_forward.34} parent=5 // pred_check
      %p152 = pneg %p151
    $region22: #{cross_attention_gcn_forward.34} parent=5 // pred_check_branch
      %154 = sbr.rel (%p152) target = $region24
    $region23: #{cross_attention_gcn_forward.34} parent=5 // pred_region
      // Predicated region
      $region25: #{cross_attention_gcn_forward.34} parent=23 // pred_check
        %p155 = pneg %p30
      $region26: #{cross_attention_gcn_forward.34} parent=23 // pred_check_branch
        %157 = sbr.rel (%p155) target = $region28
      $region27: #{cross_attention_gcn_forward.34} parent=23 // pred_region
        %p158 = scmp.lt.s32.totalorder %s10, 1
        %s159 = scalar_select %p158, %s10, 1
        %s160 = smul.addr %s159, 8
        %s161 = scalar_lea.vmem %s0, %s160
      $region28: #{cross_attention_gcn_forward.34} parent=23 // pred_fallthru
        _
      // Predicated region
      $region29: #{cross_attention_gcn_forward.34} parent=23 // pred_check
        %p162 = pneg %p98
      $region30: #{cross_attention_gcn_forward.34} parent=23 // pred_check_branch
        %164 = sbr.rel (%p162) target = $region32
      $region31: #{cross_attention_gcn_forward.34} parent=23 // pred_region
        %p165 = scmp.lt.s32.totalorder %s10, 1
        %s166 = scalar_select %p165, %s10, 1
        %s167 = smul.addr %s166, 8
        %s168 = scalar_lea.vmem %s3, %s167
      $region32: #{cross_attention_gcn_forward.34} parent=23 // pred_fallthru
        _
    $region24: #{cross_attention_gcn_forward.34} parent=5 // pred_fallthru
      _
    %p169 = scmp.le.s32.totalorder 1, %s10
    %p170 = scmp.lt.s32.totalorder %s10, 3
    %p171 = pnand %p169, %p170
    %p172 = pneg %p171
    // Predicated region
    $region33: #{cross_attention_gcn_forward.34} parent=5 // pred_check
      _
    $region34: #{cross_attention_gcn_forward.34} parent=5 // pred_check_branch
      %174 = sbr.rel (%p171) target = $region36
    $region35: #{cross_attention_gcn_forward.34} parent=5 // pred_region
      %s175 = ssub.s32 %s10, 1
      %p176 = scmp.lt.s32.totalorder %s15, 1
      %s177 = scalar_select %p176, %s15, 1
      %s178 = smul.addr %s177, 8
      %s179 = scalar_lea.vmem %s0, %s178
      %p180 = pneg %p36
      %p181 = pneg %p33
      %p182 = pneg %p57
      %p183 = pneg %p54
      %p184 = pneg %p78
      %p185 = pneg %p75
      %p186 = scmp.lt.s32.totalorder %s15, 1
      %s187 = scalar_select %p186, %s15, 1
      %s188 = smul.addr %s187, 8
      %s189 = scalar_lea.vmem %s3, %s188
      %p190 = pneg %p104
      %p191 = pneg %p101
      %p192 = pneg %p130
      %p193 = pneg %p127
      %p194 = scmp.lt.s32.totalorder %s15, 1
      %s195 = scalar_select %p194, %s15, 1
      %s196 = smul.addr %s195, 8
      %s197 = scalar_lea.vmem %s4, %s196
      %p198 = scmp.lt.s32.totalorder %s15, 1
      %s199 = scalar_select %p198, %s15, 1
      %s200 = smul.addr %s199, 8
      %s201 = scalar_lea.vmem %s0, %s200
      %p202 = scmp.lt.s32.totalorder %s15, 1
      %s203 = scalar_select %p202, %s15, 1
      %s204 = smul.addr %s203, 8
      %s205 = scalar_lea.vmem %s3, %s204
      %p206 = scmp.lt.s32.totalorder %s15, 1
      %s207 = scalar_select %p206, %s15, 1
      %s208 = smul.addr %s207, 8
      %s209 = scalar_lea.vmem %s4, %s208
      %v210 = vld [vmem:[%s201] sm:$0xff]
      %v211 = vld [vmem:[%s1] sm:$0xff]
      %v212 = vld [vmem:[%s1 + $0x8] sm:$0xff]
      %v213 = vld [vmem:[%s1 + $0x10] sm:$0xff]
      %v214 = vld [vmem:[%s1 + $0x18] sm:$0xff]
      %v215 = vld [vmem:[%s2] sm:$0x1]
      %v217 = vlaneseq
      %v218 = vshrl.u32 %v217, 7
      %v219 = vsub.s32 0, %v218
      %v220 = vrot.slane %v215, %v219
      %vm222 = vcmask 261120
      %v224 = vsel %vm222, %v210, 0
      %226 = vmatprep.subr.mxu0 0.0
      %227 = vmatpush1.msra.mxu0 0.0
      %228 = vmatprep.subr.mxu0 0.0
      %229 = vmatpush1.msra.mxu0 0.0
      %230 = vmatprep.subr.mxu0 0.0
      %231 = vmatpush1.msra.mxu0 0.0
      %232 = vmatprep.subr.mxu0 0.0
      %233 = vmatpush1.msra.mxu0 0.0
      %234 = vmatprep.subr.mxu0 0.0
      %235 = vmatpush1.msra.mxu0 0.0
      %236 = vmatprep.subr.mxu0 0.0
      %237 = vmatpush1.msra.mxu0 0.0
      %238 = vmatprep.subr.mxu0 0.0
      %239 = vmatpush1.msra.mxu0 0.0
      %240 = vmatprep.subr.mxu0 0.0
      %241 = vmatpush1.msra.mxu0 0.0
      %242 = vmatprep.subr.mxu0 0.0
      %243 = vmatpush1.msra.mxu0 0.0
      %244 = vmatprep.subr.mxu0 0.0
      %245 = vmatpush1.msra.mxu0 0.0
      %246 = vmatprep.subr.mxu0 0.0
      %247 = vmatpush1.msra.mxu0 0.0
      %248 = vmatprep.subr.mxu0 0.0
      %249 = vmatpush1.msra.mxu0 0.0
      %250 = vmatprep.subr.mxu0 0.0
      %251 = vmatpush1.msra.mxu0 %v214
      %252 = vmatprep.subr.mxu0 0.0
      %253 = vmatpush1.msra.mxu0 %v213
      %254 = vmatprep.subr.mxu0 0.0
      %255 = vmatpush1.msra.mxu0 %v212
      %256 = vmatprep.subr.mxu0 0.0
      %257 = vmatpush1.msra.mxu0 %v211
      %258 = vmatprep.subr.mxu0 0.0
      %259 = vmatpush2.msra.mxu0 0.0
      %260 = vmatprep.subr.mxu0 0.0
      %261 = vmatpush2.msra.mxu0 0.0
      %262 = vmatprep.subr.mxu0 0.0
      %263 = vmatpush2.msra.mxu0 0.0
      %264 = vmatprep.subr.mxu0 0.0
      %265 = vmatpush2.msra.mxu0 0.0
      %266 = vmatprep.subr.mxu0 0.0
      %267 = vmatpush2.msra.mxu0 0.0
      %268 = vmatprep.subr.mxu0 0.0
      %269 = vmatpush2.msra.mxu0 0.0
      %270 = vmatprep.subr.mxu0 0.0
      %271 = vmatpush2.msra.mxu0 0.0
      %272 = vmatprep.subr.mxu0 0.0
      %273 = vmatpush2.msra.mxu0 0.0
      %274 = vmatprep.subr.mxu0 0.0
      %275 = vmatpush2.msra.mxu0 0.0
      %276 = vmatprep.subr.mxu0 0.0
      %277 = vmatpush2.msra.mxu0 0.0
      %278 = vmatprep.subr.mxu0 0.0
      %279 = vmatpush2.msra.mxu0 0.0
      %280 = vmatprep.subr.mxu0 0.0
      %281 = vmatpush2.msra.mxu0 0.0
      %282 = vmatprep.subr.mxu0 0.0
      %283 = vmatpush2.msra.mxu0 0.0
      %284 = vmatprep.subr.mxu0 0.0
      %285 = vmatpush2.msra.mxu0 0.0
      %286 = vmatprep.subr.mxu0 0.0
      %287 = vmatpush2.msra.mxu0 0.0
      %288 = vmatprep.subr.mxu0 0.0
      %289 = vmatpush2.msra.mxu0 0.0
      %290 = vmatprep.mubr.f32.mxu0 0.0
      %291 = vmatmul.mubr.f32.gmra.mxu0 %v224
      %v292 = vpop.f32.mrf.mxu0
      %v293 = vadd.f32 %v220, %v292
      %v294 = vpop.f32.mrf.mxu0
      %295 = vdwg.mxu0
      %v296 = vld [vmem:[%s205] sm:$0xff]
      %v297 = vadd.f32 %v296, %v293
      %298 = vst.msk [vmem:[%s209] sm:$0xff] %vm222, %v297
      %p299 = scmp.lt.s32.totalorder %s15, 1
      %s300 = scalar_select %p299, %s15, 1
      %s301 = smul.addr %s300, 8
      %s302 = scalar_lea.vmem %s4, %s301
      // Predicated region
      $region37: #{cross_attention_gcn_forward.34} parent=35 // pred_check
        %p303 = pneg %p127
      $region38: #{cross_attention_gcn_forward.34} parent=35 // pred_check_branch
        %305 = sbr.rel (%p303) target = $region40
      $region39: #{cross_attention_gcn_forward.34} parent=35 // pred_region
        _
      $region40: #{cross_attention_gcn_forward.34} parent=35 // pred_fallthru
        _
    $region36: #{cross_attention_gcn_forward.34} parent=5 // pred_fallthru
      _
    %p306 = scmp.le.s32.totalorder 2, %s10
    // Predicated region
    $region41: #{cross_attention_gcn_forward.34} parent=5 // pred_check
      %p307 = pneg %p306
    $region42: #{cross_attention_gcn_forward.34} parent=5 // pred_check_branch
      %309 = sbr.rel (%p307) target = $region44
    $region43: #{cross_attention_gcn_forward.34} parent=5 // pred_region
      %s310 = ssub.s32 %s10, 2
      // Predicated region
      $region45: #{cross_attention_gcn_forward.34} parent=43 // pred_check
        %p311 = pneg %p133
      $region46: #{cross_attention_gcn_forward.34} parent=43 // pred_check_branch
        %313 = sbr.rel (%p311) target = $region48
      $region47: #{cross_attention_gcn_forward.34} parent=43 // pred_region
        %p314 = scmp.lt.s32.totalorder %s16, 1
        %s315 = scalar_select %p314, %s16, 1
        %s316 = smul.addr %s315, 8
        %s317 = scalar_lea.vmem %s4, %s316
      $region48: #{cross_attention_gcn_forward.34} parent=43 // pred_fallthru
        _
    $region44: #{cross_attention_gcn_forward.34} parent=5 // pred_fallthru
      _
  $region6: #{cross_attention_gcn_forward.34} parent=0 // loop_footer
    %s14 = sadd.s32 1, %s10
  $region7: #{cross_attention_gcn_forward.34} parent=0 // loop_footer_branch
    %9 = sbr.rel target = $region3
  $region8: #{cross_attention_gcn_forward.34} parent=0 // loop_exit
    _

// kernel: cross_attention_gcn_forward.35
$region0: #{cross_attention_gcn_forward.35}
  #allocation0 [shape = 'u32[]', space=smem, size = 0x4, offset = 0x4, fixed_abs, tag = 'smem constant byte address 0x4 - core index']
  #allocation1 [shape = 'u32[144,128]{1,0:T(1,128)}', space=vmem, size = 0x12000, scoped, tag = 'internal scratch']
  #allocation2 [shape = 'f32[36,96]{1,0:T(8,128)}', space=vmem, size = 0x5000, scoped, tag = 'scratch operand']
  %s0 = inlined_call_operand.vmem [shape: f32[32,32], index: 0, kind: input, shape index: {}]
  %s1 = inlined_call_operand.vmem [shape: f32[1,32], index: 1, kind: input, shape index: {}]
  %s2 = inlined_call_operand.vmem [shape: f32[1,32], index: 2, kind: input, shape index: {}]
  %s3 = inlined_call_operand.vmem [shape: f32[32,96], index: 3, kind: input, shape index: {}]
  %s4 = inlined_call_operand.vmem [shape: f32[1,96], index: 4, kind: input, shape index: {}]
  %s5 = inlined_call_operand.vmem [shape: f32[3,96], index: 5, kind: input, shape index: {}]
  %s6 = inlined_call_operand.vmem [shape: f32[1,96], index: 6, kind: input, shape index: {}]
  %s7 = inlined_call_operand.vmem [shape: f32[32,96], index: 7, kind: output, shape index: {}]
  %s8 = sld [smem:[#allocation0]]
  $region38: #{cross_attention_gcn_forward.35} parent=0
    _
  %s10 = ssub.s32 1, %s8
  %s11 = scalar_select 0, %s10, %s8
  // Predicated region
  $region2: #{cross_attention_gcn_forward.35} parent=0 // pred_check
    _
  $region3: #{cross_attention_gcn_forward.35} parent=0 // pred_check_branch
    %13 = sbr.rel (0) target = $region5
  $region4: #{cross_attention_gcn_forward.35} parent=0 // pred_region
    _
  $region5: #{cross_attention_gcn_forward.35} parent=0 // pred_fallthru
    _
  // Predicated region
  $region6: #{cross_attention_gcn_forward.35} parent=0 // pred_check
    _
  $region7: #{cross_attention_gcn_forward.35} parent=0 // pred_check_branch
    %15 = sbr.rel (0) target = $region9
  $region8: #{cross_attention_gcn_forward.35} parent=0 // pred_region
    _
  $region9: #{cross_attention_gcn_forward.35} parent=0 // pred_fallthru
    _
  // Predicated region
  $region10: #{cross_attention_gcn_forward.35} parent=0 // pred_check
    _
  $region11: #{cross_attention_gcn_forward.35} parent=0 // pred_check_branch
    %17 = sbr.rel (0) target = $region13
  $region12: #{cross_attention_gcn_forward.35} parent=0 // pred_region
    _
  $region13: #{cross_attention_gcn_forward.35} parent=0 // pred_fallthru
    _
  // Predicated region
  $region14: #{cross_attention_gcn_forward.35} parent=0 // pred_check
    _
  $region15: #{cross_attention_gcn_forward.35} parent=0 // pred_check_branch
    %19 = sbr.rel (0) target = $region17
  $region16: #{cross_attention_gcn_forward.35} parent=0 // pred_region
    _
  $region17: #{cross_attention_gcn_forward.35} parent=0 // pred_fallthru
    _
  // Predicated region
  $region18: #{cross_attention_gcn_forward.35} parent=0 // pred_check
    _
  $region19: #{cross_attention_gcn_forward.35} parent=0 // pred_check_branch
    %21 = sbr.rel (0) target = $region21
  $region20: #{cross_attention_gcn_forward.35} parent=0 // pred_region
    _
  $region21: #{cross_attention_gcn_forward.35} parent=0 // pred_fallthru
    _
  // Predicated region
  $region22: #{cross_attention_gcn_forward.35} parent=0 // pred_check
    _
  $region23: #{cross_attention_gcn_forward.35} parent=0 // pred_check_branch
    %23 = sbr.rel (0) target = $region25
  $region24: #{cross_attention_gcn_forward.35} parent=0 // pred_region
    _
  $region25: #{cross_attention_gcn_forward.35} parent=0 // pred_fallthru
    _
  // Predicated region
  $region26: #{cross_attention_gcn_forward.35} parent=0 // pred_check
    _
  $region27: #{cross_attention_gcn_forward.35} parent=0 // pred_check_branch
    %25 = sbr.rel (0) target = $region29
  $region28: #{cross_attention_gcn_forward.35} parent=0 // pred_region
    _
  $region29: #{cross_attention_gcn_forward.35} parent=0 // pred_fallthru
    _
  %v26 = vld [vmem:[%s0] sm:$0xff]
  %v27 = vld [vmem:[%s0 + $0x8] sm:$0xff]
  %v28 = vld [vmem:[%s0 + $0x10] sm:$0xff]
  %v29 = vld [vmem:[%s0 + $0x18] sm:$0xff]
  %v30 = vld [vmem:[%s1] sm:$0x1]
  %v31 = vld [vmem:[%s2] sm:$0x1]
  %vm32 = vcmask 261120
  %v33 = vsel %vm32, %v26, 0.0
  %34 = vadd.xlane.f32.xlu0 %v33
  %v35 = vpop.xlane.xlu0 %34
  %v36 = vsel %vm32, %v27, 0.0
  %37 = vadd.xlane.f32.xlu0 %v36
  %v38 = vpop.xlane.xlu0 %37
  %v39 = vsel %vm32, %v28, 0.0
  %40 = vadd.xlane.f32.xlu0 %v39
  %v41 = vpop.xlane.xlu0 %40
  %v42 = vsel %vm32, %v29, 0.0
  %43 = vadd.xlane.f32.xlu0 %v42
  %v44 = vpop.xlane.xlu0 %43
  %v45 = vrcp.pop 32.0
  %v46 = vmul.f32 %v35, %v45
  %v47 = vmul.f32 %v38, %v45
  %v48 = vmul.f32 %v41, %v45
  %v49 = vmul.f32 %v44, %v45
  %v50 = vsub.f32 %v26, %v46
  %v51 = vsub.f32 %v27, %v47
  %v52 = vsub.f32 %v28, %v48
  %v53 = vsub.f32 %v29, %v49
  %v54 = vmul.f32 %v50, %v50
  %v55 = vmul.f32 %v51, %v51
  %v56 = vmul.f32 %v52, %v52
  %v57 = vmul.f32 %v53, %v53
  %v58 = vsel %vm32, %v54, 0.0
  %59 = vadd.xlane.f32.xlu0 %v58
  %v60 = vpop.xlane.xlu0 %59
  %v61 = vsel %vm32, %v55, 0.0
  %62 = vadd.xlane.f32.xlu0 %v61
  %v63 = vpop.xlane.xlu0 %62
  %v64 = vsel %vm32, %v56, 0.0
  %65 = vadd.xlane.f32.xlu0 %v64
  %v66 = vpop.xlane.xlu0 %65
  %v67 = vsel %vm32, %v57, 0.0
  %68 = vadd.xlane.f32.xlu0 %v67
  %v69 = vpop.xlane.xlu0 %68
  %v70 = vmul.f32 %v60, %v45
  %v71 = vmul.f32 %v63, %v45
  %v72 = vmul.f32 %v66, %v45
  %v73 = vmul.f32 %v69, %v45
  %v74 = vadd.f32 %v70, 1e-05
  %v75 = vadd.f32 %v71, 1e-05
  %v76 = vadd.f32 %v72, 1e-05
  %v77 = vadd.f32 %v73, 1e-05
  %v78 = vrsqrt.pop %v74
  %v79 = vrsqrt.pop %v75
  %v80 = vrsqrt.pop %v76
  %v81 = vrsqrt.pop %v77
  %v82 = vmul.f32 %v50, %v78
  %v83 = vmul.f32 %v51, %v79
  %v84 = vmul.f32 %v52, %v80
  %v85 = vmul.f32 %v53, %v81
  %v87 = vlaneseq
  %v88 = vshrl.u32 %v87, 7
  %v89 = vsub.s32 0, %v88
  %v90 = vrot.slane %v30, %v89
  %v92 = vmul.f32 %v82, %v90
  %v93 = vmul.f32 %v83, %v90
  %v94 = vmul.f32 %v84, %v90
  %v95 = vmul.f32 %v85, %v90
  %v97 = vlaneseq
  %v98 = vshrl.u32 %v97, 7
  %v99 = vsub.s32 0, %v98
  %v100 = vrot.slane %v31, %v99
  %v102 = vadd.f32 %v92, %v100
  %v103 = vadd.f32 %v93, %v100
  %v104 = vadd.f32 %v94, %v100
  %v105 = vadd.f32 %v95, %v100
  %v106 = vld [vmem:[%s3] sm:$0xff]
  %v107 = vld [vmem:[%s3 + $0x8] sm:$0xff]
  %v108 = vld [vmem:[%s3 + $0x10] sm:$0xff]
  %v109 = vld [vmem:[%s3 + $0x18] sm:$0xff]
  %v110 = vld [vmem:[%s4] sm:$0x1]
  %v112 = vlaneseq
  %v113 = vshrl.u32 %v112, 7
  %v114 = vsub.s32 0, %v113
  %v115 = vrot.slane %v110, %v114
  %v118 = vsel %vm32, %v102, 0
  %v121 = vsel %vm32, %v103, 0
  %v124 = vsel %vm32, %v104, 0
  %v127 = vsel %vm32, %v105, 0
  %129 = vmatprep.subr.mxu0 0.0
  %130 = vmatpush1.msra.mxu0 0.0
  %131 = vmatprep.subr.mxu0 0.0
  %132 = vmatpush1.msra.mxu0 0.0
  %133 = vmatprep.subr.mxu0 0.0
  %134 = vmatpush1.msra.mxu0 0.0
  %135 = vmatprep.subr.mxu0 0.0
  %136 = vmatpush1.msra.mxu0 0.0
  %137 = vmatprep.subr.mxu0 0.0
  %138 = vmatpush1.msra.mxu0 0.0
  %139 = vmatprep.subr.mxu0 0.0
  %140 = vmatpush1.msra.mxu0 0.0
  %141 = vmatprep.subr.mxu0 0.0
  %142 = vmatpush1.msra.mxu0 0.0
  %143 = vmatprep.subr.mxu0 0.0
  %144 = vmatpush1.msra.mxu0 0.0
  %145 = vmatprep.subr.mxu0 0.0
  %146 = vmatpush1.msra.mxu0 0.0
  %147 = vmatprep.subr.mxu0 0.0
  %148 = vmatpush1.msra.mxu0 0.0
  %149 = vmatprep.subr.mxu0 0.0
  %150 = vmatpush1.msra.mxu0 0.0
  %151 = vmatprep.subr.mxu0 0.0
  %152 = vmatpush1.msra.mxu0 0.0
  %153 = vmatprep.subr.mxu0 0.0
  %154 = vmatpush1.msra.mxu0 %v109
  %155 = vmatprep.subr.mxu0 0.0
  %156 = vmatpush1.msra.mxu0 %v108
  %157 = vmatprep.subr.mxu0 0.0
  %158 = vmatpush1.msra.mxu0 %v107
  %159 = vmatprep.subr.mxu0 0.0
  %160 = vmatpush1.msra.mxu0 %v106
  %161 = vmatprep.subr.mxu0 0.0
  %162 = vmatpush2.msra.mxu0 0.0
  %163 = vmatprep.subr.mxu0 0.0
  %164 = vmatpush2.msra.mxu0 0.0
  %165 = vmatprep.subr.mxu0 0.0
  %166 = vmatpush2.msra.mxu0 0.0
  %167 = vmatprep.subr.mxu0 0.0
  %168 = vmatpush2.msra.mxu0 0.0
  %169 = vmatprep.subr.mxu0 0.0
  %170 = vmatpush2.msra.mxu0 0.0
  %171 = vmatprep.subr.mxu0 0.0
  %172 = vmatpush2.msra.mxu0 0.0
  %173 = vmatprep.subr.mxu0 0.0
  %174 = vmatpush2.msra.mxu0 0.0
  %175 = vmatprep.subr.mxu0 0.0
  %176 = vmatpush2.msra.mxu0 0.0
  %177 = vmatprep.subr.mxu0 0.0
  %178 = vmatpush2.msra.mxu0 0.0
  %179 = vmatprep.subr.mxu0 0.0
  %180 = vmatpush2.msra.mxu0 0.0
  %181 = vmatprep.subr.mxu0 0.0
  %182 = vmatpush2.msra.mxu0 0.0
  %183 = vmatprep.subr.mxu0 0.0
  %184 = vmatpush2.msra.mxu0 0.0
  %185 = vmatprep.subr.mxu0 0.0
  %186 = vmatpush2.msra.mxu0 0.0
  %187 = vmatprep.subr.mxu0 0.0
  %188 = vmatpush2.msra.mxu0 0.0
  %189 = vmatprep.subr.mxu0 0.0
  %190 = vmatpush2.msra.mxu0 0.0
  %191 = vmatprep.subr.mxu0 0.0
  %192 = vmatpush2.msra.mxu0 0.0
  %193 = vmatprep.mubr.f32.mxu0 0.0
  %194 = vmatmul.mubr.f32.gmra.mxu0 %v118
  %v195 = vpop.f32.mrf.mxu0
  %v196 = vadd.f32 %v115, %v195
  %v197 = vpop.f32.mrf.mxu0
  %198 = vmatprep.mubr.f32.mxu0 0.0
  %199 = vmatmul.mubr.f32.gmra.mxu0 %v121
  %v200 = vpop.f32.mrf.mxu0
  %v201 = vadd.f32 %v115, %v200
  %v202 = vpop.f32.mrf.mxu0
  %203 = vmatprep.mubr.f32.mxu0 0.0
  %204 = vmatmul.mubr.f32.gmra.mxu0 %v124
  %v205 = vpop.f32.mrf.mxu0
  %v206 = vadd.f32 %v115, %v205
  %v207 = vpop.f32.mrf.mxu0
  %208 = vmatprep.mubr.f32.mxu0 0.0
  %209 = vmatmul.mubr.f32.gmra.mxu0 %v127
  %v210 = vpop.f32.mrf.mxu0
  %v211 = vadd.f32 %v115, %v210
  %v212 = vpop.f32.mrf.mxu0
  %213 = vdwg.mxu0
  %vm214 = vcmask 781312
  %215 = vst.msk [vmem:[#allocation2] sm:$0xf] %vm214, 0.0
  %vm216 = vcmask 785408
  %217 = vst.msk [vmem:[#allocation2 + $0x4] sm:$0xff] %vm216, %v196
  %218 = vst.msk [vmem:[#allocation2 + $0xc] sm:$0xff] %vm216, %v201
  %219 = vst.msk [vmem:[#allocation2 + $0x14] sm:$0xff] %vm216, %v206
  %220 = vst.msk [vmem:[#allocation2 + $0x1c] sm:$0xff] %vm216, %v211
  %v221 = vld [vmem:[%s5] sm:$0x7]
  %v222 = vld [vmem:[#allocation2] sm:$0xff]
  %v223 = vld [vmem:[#allocation2 + $0x8] sm:$0xff]
  %v224 = vld [vmem:[#allocation2 + $0x10] sm:$0xff]
  %v225 = vld [vmem:[#allocation2 + $0x18] sm:$0xff]
  %v226 = vlaneseq
  %v227 = vshrl.u32 %v226, 7
  %v228 = vsub.s32 0, %v227
  %v229 = vrot.slane %v221, %v228
  %v230 = vmul.f32 %v229, %v222
  %v231 = vmul.f32 %v229, %v223
  %v232 = vmul.f32 %v229, %v224
  %v233 = vmul.f32 %v229, %v225
  %v234 = vld [vmem:[#allocation2 + $0x2] sm:$0xff]
  %v235 = vld [vmem:[#allocation2 + $0xa] sm:$0xff]
  %v236 = vld [vmem:[#allocation2 + $0x12] sm:$0xff]
  %v237 = vld [vmem:[#allocation2 + $0x1a] sm:$0xff]
  %v238 = vlaneseq
  %v239 = vshrl.u32 %v238, 7
  %v240 = vsub.s32 1, %v239
  %v241 = vrot.slane %v221, %v240
  %v242 = vmul.f32 %v241, %v234
  %v243 = vmul.f32 %v241, %v235
  %v244 = vmul.f32 %v241, %v236
  %v245 = vmul.f32 %v241, %v237
  %v246 = vadd.f32 %v230, %v242
  %v247 = vadd.f32 %v231, %v243
  %v248 = vadd.f32 %v232, %v244
  %v249 = vadd.f32 %v233, %v245
  %v250 = vld [vmem:[#allocation2 + $0x4] sm:$0xff]
  %v251 = vld [vmem:[#allocation2 + $0xc] sm:$0xff]
  %v252 = vld [vmem:[#allocation2 + $0x14] sm:$0xff]
  %v253 = vld [vmem:[#allocation2 + $0x1c] sm:$0xff]
  %v254 = vlaneseq
  %v255 = vshrl.u32 %v254, 7
  %v256 = vsub.s32 2, %v255
  %v257 = vrot.slane %v221, %v256
  %v258 = vmul.f32 %v257, %v250
  %v259 = vmul.f32 %v257, %v251
  %v260 = vmul.f32 %v257, %v252
  %v261 = vmul.f32 %v257, %v253
  %v262 = vadd.f32 %v246, %v258
  %v263 = vadd.f32 %v247, %v259
  %v264 = vadd.f32 %v248, %v260
  %v265 = vadd.f32 %v249, %v261
  %v266 = vld [vmem:[%s6] sm:$0x1]
  %v268 = vlaneseq
  %v269 = vshrl.u32 %v268, 7
  %v270 = vsub.s32 0, %v269
  %v271 = vrot.slane %v266, %v270
  %v273 = vadd.f32 %v262, %v271
  %v274 = vadd.f32 %v263, %v271
  %v275 = vadd.f32 %v264, %v271
  %v276 = vadd.f32 %v265, %v271
  %277 = vst.msk [vmem:[%s7] sm:$0xff] %vm216, %v273
  %278 = vst.msk [vmem:[%s7 + $0x8] sm:$0xff] %vm216, %v274
  %279 = vst.msk [vmem:[%s7 + $0x10] sm:$0xff] %vm216, %v275
  %280 = vst.msk [vmem:[%s7 + $0x18] sm:$0xff] %vm216, %v276
  // Predicated region
  $region30: #{cross_attention_gcn_forward.35} parent=0 // pred_check
    _
  $region31: #{cross_attention_gcn_forward.35} parent=0 // pred_check_branch
    %282 = sbr.rel (0) target = $region33
  $region32: #{cross_attention_gcn_forward.35} parent=0 // pred_region
    _
  $region33: #{cross_attention_gcn_forward.35} parent=0 // pred_fallthru
    _
  // Predicated region
  $region34: #{cross_attention_gcn_forward.35} parent=0 // pred_check
    _
  $region35: #{cross_attention_gcn_forward.35} parent=0 // pred_check_branch
    %284 = sbr.rel (0) target = $region37
  $region36: #{cross_attention_gcn_forward.35} parent=0 // pred_region
    _
  $region37: #{cross_attention_gcn_forward.35} parent=0 // pred_fallthru
    _

// kernel: cross_attention_gcn_forward.28
$region0: #{cross_attention_gcn_forward.28}
  #allocation0 [shape = 'u32[]', space=smem, size = 0x4, offset = 0x4, fixed_abs, tag = 'smem constant byte address 0x4 - core index']
  #allocation1 [shape = 'u32[144,128]{1,0:T(1,128)}', space=vmem, size = 0x12000, scoped, tag = 'internal scratch']
  %s0 = inlined_call_operand.vmem [shape: f32[16,32], index: 0, kind: input, shape index: {}]
  %s1 = inlined_call_operand.vmem [shape: f32[32,32], index: 1, kind: input, shape index: {}]
  %s2 = inlined_call_operand.vmem [shape: f32[32,32], index: 2, kind: input, shape index: {}]
  %s3 = inlined_call_operand.vmem [shape: f32[1,32], index: 3, kind: input, shape index: {}]
  %s4 = inlined_call_operand.vmem [shape: f32[16,32], index: 4, kind: output, shape index: {}]
  %s5 = sld [smem:[#allocation0]]
  $region49: #{cross_attention_gcn_forward.28} parent=0
    _
  %s7 = ssub.s32 1, %s5
  %s8 = scalar_select 0, %s7, %s5
  loop: start=0, step=1, limit=4
  $region2: #{cross_attention_gcn_forward.28} parent=0 // loop_pre_header
    _
  $region3: #{cross_attention_gcn_forward.28} parent=0 // loop_header
    %s10 = sphi 0, %s14
    %p11 = scmp.ge.s32.totalorder %s10, 4
    %s20 = sphi 0, %s22
    %s23 = sphi 0, %s20
    %s24 = sphi 0, %s23
    %s40 = sphi 0, %s24
    %s44 = sphi 0, %s44
    %s46 = sphi 0, %s44
    %s47 = sphi 0, %s46
    %s61 = sphi 0, %s47
    %s65 = sphi 0, %s65
    %s67 = sphi 0, %s65
    %s68 = sphi 0, %s67
    %s82 = sphi 0, %s68
    %s86 = sphi 0, %s86
    %s88 = sphi 0, %s86
    %s89 = sphi 0, %s88
    %s103 = sphi 0, %s89
    %s109 = sphi 0, %s111
    %s112 = sphi 0, %s109
    %s113 = sphi 0, %s112
    %s129 = sphi 0, %s113
  $region4: #{cross_attention_gcn_forward.28} parent=0 // loop_header_branch
    %13 = sbr.rel (%p11) target = $region8
  $region5: #{cross_attention_gcn_forward.28} parent=0 // loop_body
    %s15 = ssub.s32 %s10, 1
    %s16 = ssub.s32 %s10, 2
    %s17 = sadd.s32 %s10, 1
    %s18 = ssub.s32 %s10, %s17
    %p19 = scmp.eq.s32.totalorder %s18, 0
    %s21 = sadd.s32 %s20, 1
    %s22 = scalar_select %p19, %s20, %s21
    %p25 = pneg %p19
    %p26 = scmp.eq.s32.totalorder %s10, 1
    %p27 = por %p25, %p26
    %p28 = scmp.ne.s32.totalorder %s20, %s23
    %p29 = scmp.eq.s32.totalorder %s10, 0
    %p30 = por %p28, %p29
    %p31 = scmp.ne.s32.totalorder %s20, %s23
    %p32 = scmp.eq.s32.totalorder %s15, 1
    %p33 = por %p31, %p32
    %p34 = scmp.ne.s32.totalorder %s23, %s24
    %p35 = scmp.eq.s32.totalorder %s15, 0
    %p36 = por %p34, %p35
    %p37 = scmp.ne.s32.totalorder %s23, %s24
    %p38 = scmp.eq.s32.totalorder %s16, 1
    %p39 = por %p37, %p38
    %p41 = scmp.ne.s32.totalorder %s24, %s40
    %p42 = scmp.eq.s32.totalorder %s16, 0
    %p43 = por %p41, %p42
    %s45 = sadd.s32 %s44, 1
    %p48 = scmp.eq.s32.totalorder %s10, 1
    %p49 = scmp.ne.s32.totalorder %s44, %s46
    %p50 = scmp.eq.s32.totalorder %s10, 0
    %p51 = por %p49, %p50
    %p52 = scmp.ne.s32.totalorder %s44, %s46
    %p53 = scmp.eq.s32.totalorder %s15, 1
    %p54 = por %p52, %p53
    %p55 = scmp.ne.s32.totalorder %s46, %s47
    %p56 = scmp.eq.s32.totalorder %s15, 0
    %p57 = por %p55, %p56
    %p58 = scmp.ne.s32.totalorder %s46, %s47
    %p59 = scmp.eq.s32.totalorder %s16, 1
    %p60 = por %p58, %p59
    %p62 = scmp.ne.s32.totalorder %s47, %s61
    %p63 = scmp.eq.s32.totalorder %s16, 0
    %p64 = por %p62, %p63
    %s66 = sadd.s32 %s65, 1
    %p69 = scmp.eq.s32.totalorder %s10, 1
    %p70 = scmp.ne.s32.totalorder %s65, %s67
    %p71 = scmp.eq.s32.totalorder %s10, 0
    %p72 = por %p70, %p71
    %p73 = scmp.ne.s32.totalorder %s65, %s67
    %p74 = scmp.eq.s32.totalorder %s15, 1
    %p75 = por %p73, %p74
    %p76 = scmp.ne.s32.totalorder %s67, %s68
    %p77 = scmp.eq.s32.totalorder %s15, 0
    %p78 = por %p76, %p77
    %p79 = scmp.ne.s32.totalorder %s67, %s68
    %p80 = scmp.eq.s32.totalorder %s16, 1
    %p81 = por %p79, %p80
    %p83 = scmp.ne.s32.totalorder %s68, %s82
    %p84 = scmp.eq.s32.totalorder %s16, 0
    %p85 = por %p83, %p84
    %s87 = sadd.s32 %s86, 1
    %p90 = scmp.eq.s32.totalorder %s10, 1
    %p91 = scmp.ne.s32.totalorder %s86, %s88
    %p92 = scmp.eq.s32.totalorder %s10, 0
    %p93 = por %p91, %p92
    %p94 = scmp.ne.s32.totalorder %s86, %s88
    %p95 = scmp.eq.s32.totalorder %s15, 1
    %p96 = por %p94, %p95
    %p97 = scmp.ne.s32.totalorder %s88, %s89
    %p98 = scmp.eq.s32.totalorder %s15, 0
    %p99 = por %p97, %p98
    %p100 = scmp.ne.s32.totalorder %s88, %s89
    %p101 = scmp.eq.s32.totalorder %s16, 1
    %p102 = por %p100, %p101
    %p104 = scmp.ne.s32.totalorder %s89, %s103
    %p105 = scmp.eq.s32.totalorder %s16, 0
    %p106 = por %p104, %p105
    %s107 = ssub.s32 %s10, %s17
    %p108 = scmp.eq.s32.totalorder %s107, 0
    %s110 = sadd.s32 %s109, 1
    %s111 = scalar_select %p108, %s109, %s110
    %p114 = pneg %p108
    %p115 = scmp.eq.s32.totalorder %s10, 1
    %p116 = por %p114, %p115
    %p117 = scmp.ne.s32.totalorder %s109, %s112
    %p118 = scmp.eq.s32.totalorder %s10, 0
    %p119 = por %p117, %p118
    %p120 = scmp.ne.s32.totalorder %s109, %s112
    %p121 = scmp.eq.s32.totalorder %s15, 1
    %p122 = por %p120, %p121
    %p123 = scmp.ne.s32.totalorder %s112, %s113
    %p124 = scmp.eq.s32.totalorder %s15, 0
    %p125 = por %p123, %p124
    %p126 = scmp.ne.s32.totalorder %s112, %s113
    %p127 = scmp.eq.s32.totalorder %s16, 1
    %p128 = por %p126, %p127
    %p130 = scmp.ne.s32.totalorder %s113, %s129
    %p131 = scmp.eq.s32.totalorder %s16, 0
    %p132 = por %p130, %p131
    %p133 = scmp.le.s32.totalorder 1, %s10
    %p134 = scmp.lt.s32.totalorder %s10, 3
    %p135 = pnand %p133, %p134
    %p136 = pneg %p135
    // Predicated region
    $region9: #{cross_attention_gcn_forward.28} parent=5 // pred_check
      _
    $region10: #{cross_attention_gcn_forward.28} parent=5 // pred_check_branch
      %138 = sbr.rel (%p135) target = $region12
    $region11: #{cross_attention_gcn_forward.28} parent=5 // pred_region
      %s139 = ssub.s32 %s10, 1
      // Predicated region
      $region13: #{cross_attention_gcn_forward.28} parent=11 // pred_check
        %p140 = pneg %p57
      $region14: #{cross_attention_gcn_forward.28} parent=11 // pred_check_branch
        %142 = sbr.rel (%p140) target = $region16
      $region15: #{cross_attention_gcn_forward.28} parent=11 // pred_region
        _
      $region16: #{cross_attention_gcn_forward.28} parent=11 // pred_fallthru
        _
      // Predicated region
      $region17: #{cross_attention_gcn_forward.28} parent=11 // pred_check
        %p143 = pneg %p78
      $region18: #{cross_attention_gcn_forward.28} parent=11 // pred_check_branch
        %145 = sbr.rel (%p143) target = $region20
      $region19: #{cross_attention_gcn_forward.28} parent=11 // pred_region
        _
      $region20: #{cross_attention_gcn_forward.28} parent=11 // pred_fallthru
        _
      // Predicated region
      $region21: #{cross_attention_gcn_forward.28} parent=11 // pred_check
        %p146 = pneg %p99
      $region22: #{cross_attention_gcn_forward.28} parent=11 // pred_check_branch
        %148 = sbr.rel (%p146) target = $region24
      $region23: #{cross_attention_gcn_forward.28} parent=11 // pred_region
        _
      $region24: #{cross_attention_gcn_forward.28} parent=11 // pred_fallthru
        _
    $region12: #{cross_attention_gcn_forward.28} parent=5 // pred_fallthru
      _
    %p149 = scmp.lt.s32.totalorder %s10, 2
    // Predicated region
    $region25: #{cross_attention_gcn_forward.28} parent=5 // pred_check
      %p150 = pneg %p149
    $region26: #{cross_attention_gcn_forward.28} parent=5 // pred_check_branch
      %152 = sbr.rel (%p150) target = $region28
    $region27: #{cross_attention_gcn_forward.28} parent=5 // pred_region
      // Predicated region
      $region29: #{cross_attention_gcn_forward.28} parent=27 // pred_check
        %p153 = pneg %p30
      $region30: #{cross_attention_gcn_forward.28} parent=27 // pred_check_branch
        %155 = sbr.rel (%p153) target = $region32
      $region31: #{cross_attention_gcn_forward.28} parent=27 // pred_region
        %p156 = scmp.lt.s32.totalorder %s10, 1
        %s157 = scalar_select %p156, %s10, 1
        %s158 = smul.addr %s157, 8
        %s159 = scalar_lea.vmem %s0, %s158
      $region32: #{cross_attention_gcn_forward.28} parent=27 // pred_fallthru
        _
    $region28: #{cross_attention_gcn_forward.28} parent=5 // pred_fallthru
      _
    %p160 = scmp.le.s32.totalorder 1, %s10
    %p161 = scmp.lt.s32.totalorder %s10, 3
    %p162 = pnand %p160, %p161
    %p163 = pneg %p162
    // Predicated region
    $region33: #{cross_attention_gcn_forward.28} parent=5 // pred_check
      _
    $region34: #{cross_attention_gcn_forward.28} parent=5 // pred_check_branch
      %165 = sbr.rel (%p162) target = $region36
    $region35: #{cross_attention_gcn_forward.28} parent=5 // pred_region
      %s166 = ssub.s32 %s10, 1
      %p167 = scmp.lt.s32.totalorder %s15, 1
      %s168 = scalar_select %p167, %s15, 1
      %s169 = smul.addr %s168, 8
      %s170 = scalar_lea.vmem %s0, %s169
      %p171 = pneg %p36
      %p172 = pneg %p33
      %p173 = pneg %p57
      %p174 = pneg %p54
      %p175 = pneg %p78
      %p176 = pneg %p75
      %p177 = pneg %p99
      %p178 = pneg %p96
      %p179 = pneg %p125
      %p180 = pneg %p122
      %p181 = scmp.lt.s32.totalorder %s15, 1
      %s182 = scalar_select %p181, %s15, 1
      %s183 = smul.addr %s182, 8
      %s184 = scalar_lea.vmem %s4, %s183
      %p185 = scmp.lt.s32.totalorder %s15, 1
      %s186 = scalar_select %p185, %s15, 1
      %s187 = smul.addr %s186, 8
      %s188 = scalar_lea.vmem %s0, %s187
      %p189 = scmp.lt.s32.totalorder %s15, 1
      %s190 = scalar_select %p189, %s15, 1
      %s191 = smul.addr %s190, 8
      %s192 = scalar_lea.vmem %s4, %s191
      %v193 = vld [vmem:[%s188] sm:$0xff]
      %v194 = vld [vmem:[%s1] sm:$0xff]
      %v195 = vld [vmem:[%s1 + $0x8] sm:$0xff]
      %v196 = vld [vmem:[%s1 + $0x10] sm:$0xff]
      %v197 = vld [vmem:[%s1 + $0x18] sm:$0xff]
      %vm198 = vcmask 261120
      %v200 = vsel %vm198, %v193, 0
      %202 = vmatprep.subr.mxu0 0.0
      %203 = vmatpush1.msra.mxu0 0.0
      %204 = vmatprep.subr.mxu0 0.0
      %205 = vmatpush1.msra.mxu0 0.0
      %206 = vmatprep.subr.mxu0 0.0
      %207 = vmatpush1.msra.mxu0 0.0
      %208 = vmatprep.subr.mxu0 0.0
      %209 = vmatpush1.msra.mxu0 0.0
      %210 = vmatprep.subr.mxu0 0.0
      %211 = vmatpush1.msra.mxu0 0.0
      %212 = vmatprep.subr.mxu0 0.0
      %213 = vmatpush1.msra.mxu0 0.0
      %214 = vmatprep.subr.mxu0 0.0
      %215 = vmatpush1.msra.mxu0 0.0
      %216 = vmatprep.subr.mxu0 0.0
      %217 = vmatpush1.msra.mxu0 0.0
      %218 = vmatprep.subr.mxu0 0.0
      %219 = vmatpush1.msra.mxu0 0.0
      %220 = vmatprep.subr.mxu0 0.0
      %221 = vmatpush1.msra.mxu0 0.0
      %222 = vmatprep.subr.mxu0 0.0
      %223 = vmatpush1.msra.mxu0 0.0
      %224 = vmatprep.subr.mxu0 0.0
      %225 = vmatpush1.msra.mxu0 0.0
      %226 = vmatprep.subr.mxu0 0.0
      %227 = vmatpush1.msra.mxu0 %v197
      %228 = vmatprep.subr.mxu0 0.0
      %229 = vmatpush1.msra.mxu0 %v196
      %230 = vmatprep.subr.mxu0 0.0
      %231 = vmatpush1.msra.mxu0 %v195
      %232 = vmatprep.subr.mxu0 0.0
      %233 = vmatpush1.msra.mxu0 %v194
      %234 = vmatprep.subr.mxu0 0.0
      %235 = vmatpush2.msra.mxu0 0.0
      %236 = vmatprep.subr.mxu0 0.0
      %237 = vmatpush2.msra.mxu0 0.0
      %238 = vmatprep.subr.mxu0 0.0
      %239 = vmatpush2.msra.mxu0 0.0
      %240 = vmatprep.subr.mxu0 0.0
      %241 = vmatpush2.msra.mxu0 0.0
      %242 = vmatprep.subr.mxu0 0.0
      %243 = vmatpush2.msra.mxu0 0.0
      %244 = vmatprep.subr.mxu0 0.0
      %245 = vmatpush2.msra.mxu0 0.0
      %246 = vmatprep.subr.mxu0 0.0
      %247 = vmatpush2.msra.mxu0 0.0
      %248 = vmatprep.subr.mxu0 0.0
      %249 = vmatpush2.msra.mxu0 0.0
      %250 = vmatprep.subr.mxu0 0.0
      %251 = vmatpush2.msra.mxu0 0.0
      %252 = vmatprep.subr.mxu0 0.0
      %253 = vmatpush2.msra.mxu0 0.0
      %254 = vmatprep.subr.mxu0 0.0
      %255 = vmatpush2.msra.mxu0 0.0
      %256 = vmatprep.subr.mxu0 0.0
      %257 = vmatpush2.msra.mxu0 0.0
      %258 = vmatprep.subr.mxu0 0.0
      %259 = vmatpush2.msra.mxu0 0.0
      %260 = vmatprep.subr.mxu0 0.0
      %261 = vmatpush2.msra.mxu0 0.0
      %262 = vmatprep.subr.mxu0 0.0
      %263 = vmatpush2.msra.mxu0 0.0
      %264 = vmatprep.subr.mxu0 0.0
      %265 = vmatpush2.msra.mxu0 0.0
      %266 = vmatprep.mubr.f32.mxu0 0.0
      %267 = vmatmul.mubr.f32.gmra.mxu0 %v200
      %v268 = vpop.f32.mrf.mxu0
      %v269 = vadd.f32 0.0, %v268
      %v270 = vpop.f32.mrf.mxu0
      %271 = vdwg.mxu0
      %v272 = vmul.f32 %v193, %v193
      %v274 = vsel %vm198, %v272, 0
      %276 = vmatprep.subr.mxu0 0.0
      %277 = vmatpush1.msra.mxu0 0.0
      %278 = vmatprep.subr.mxu0 0.0
      %279 = vmatpush1.msra.mxu0 0.0
      %280 = vmatprep.subr.mxu0 0.0
      %281 = vmatpush1.msra.mxu0 0.0
      %282 = vmatprep.subr.mxu0 0.0
      %283 = vmatpush1.msra.mxu0 0.0
      %284 = vmatprep.subr.mxu0 0.0
      %285 = vmatpush1.msra.mxu0 0.0
      %286 = vmatprep.subr.mxu0 0.0
      %287 = vmatpush1.msra.mxu0 0.0
      %288 = vmatprep.subr.mxu0 0.0
      %289 = vmatpush1.msra.mxu0 0.0
      %290 = vmatprep.subr.mxu0 0.0
      %291 = vmatpush1.msra.mxu0 0.0
      %292 = vmatprep.subr.mxu0 0.0
      %293 = vmatpush1.msra.mxu0 0.0
      %294 = vmatprep.subr.mxu0 0.0
      %295 = vmatpush1.msra.mxu0 0.0
      %296 = vmatprep.subr.mxu0 0.0
      %297 = vmatpush1.msra.mxu0 0.0
      %298 = vmatprep.subr.mxu0 0.0
      %299 = vmatpush1.msra.mxu0 0.0
      %300 = vmatprep.subr.mxu0 0.0
      %301 = vmatpush1.msra.mxu0 %v197
      %302 = vmatprep.subr.mxu0 0.0
      %303 = vmatpush1.msra.mxu0 %v196
      %304 = vmatprep.subr.mxu0 0.0
      %305 = vmatpush1.msra.mxu0 %v195
      %306 = vmatprep.subr.mxu0 0.0
      %307 = vmatpush1.msra.mxu0 %v194
      %308 = vmatprep.subr.mxu0 0.0
      %309 = vmatpush2.msra.mxu0 0.0
      %310 = vmatprep.subr.mxu0 0.0
      %311 = vmatpush2.msra.mxu0 0.0
      %312 = vmatprep.subr.mxu0 0.0
      %313 = vmatpush2.msra.mxu0 0.0
      %314 = vmatprep.subr.mxu0 0.0
      %315 = vmatpush2.msra.mxu0 0.0
      %316 = vmatprep.subr.mxu0 0.0
      %317 = vmatpush2.msra.mxu0 0.0
      %318 = vmatprep.subr.mxu0 0.0
      %319 = vmatpush2.msra.mxu0 0.0
      %320 = vmatprep.subr.mxu0 0.0
      %321 = vmatpush2.msra.mxu0 0.0
      %322 = vmatprep.subr.mxu0 0.0
      %323 = vmatpush2.msra.mxu0 0.0
      %324 = vmatprep.subr.mxu0 0.0
      %325 = vmatpush2.msra.mxu0 0.0
      %326 = vmatprep.subr.mxu0 0.0
      %327 = vmatpush2.msra.mxu0 0.0
      %328 = vmatprep.subr.mxu0 0.0
      %329 = vmatpush2.msra.mxu0 0.0
      %330 = vmatprep.subr.mxu0 0.0
      %331 = vmatpush2.msra.mxu0 0.0
      %332 = vmatprep.subr.mxu0 0.0
      %333 = vmatpush2.msra.mxu0 0.0
      %334 = vmatprep.subr.mxu0 0.0
      %335 = vmatpush2.msra.mxu0 0.0
      %336 = vmatprep.subr.mxu0 0.0
      %337 = vmatpush2.msra.mxu0 0.0
      %338 = vmatprep.subr.mxu0 0.0
      %339 = vmatpush2.msra.mxu0 0.0
      %340 = vmatprep.mubr.f32.mxu0 0.0
      %341 = vmatmul.mubr.f32.gmra.mxu0 %v274
      %v342 = vpop.f32.mrf.mxu0
      %v343 = vadd.f32 0.0, %v342
      %v344 = vpop.f32.mrf.mxu0
      %345 = vdwg.mxu0
      %v346 = vmul.f32 %v269, %v269
      %v347 = vsub.f32 %v343, %v346
      %v348 = vsub.f32 %v193, %v269
      %v349 = vadd.f32 %v347, 1e-05
      %v350 = vrsqrt.pop %v349
      %v351 = vmul.f32 %v348, %v350
      %v352 = vld [vmem:[%s2] sm:$0xff]
      %v353 = vld [vmem:[%s2 + $0x8] sm:$0xff]
      %v354 = vld [vmem:[%s2 + $0x10] sm:$0xff]
      %v355 = vld [vmem:[%s2 + $0x18] sm:$0xff]
      %v356 = vld [vmem:[%s3] sm:$0x1]
      %v358 = vlaneseq
      %v359 = vshrl.u32 %v358, 7
      %v360 = vsub.s32 0, %v359
      %v361 = vrot.slane %v356, %v360
      %v364 = vsel %vm198, %v351, 0
      %366 = vmatprep.subr.mxu0 0.0
      %367 = vmatpush1.msra.mxu0 0.0
      %368 = vmatprep.subr.mxu0 0.0
      %369 = vmatpush1.msra.mxu0 0.0
      %370 = vmatprep.subr.mxu0 0.0
      %371 = vmatpush1.msra.mxu0 0.0
      %372 = vmatprep.subr.mxu0 0.0
      %373 = vmatpush1.msra.mxu0 0.0
      %374 = vmatprep.subr.mxu0 0.0
      %375 = vmatpush1.msra.mxu0 0.0
      %376 = vmatprep.subr.mxu0 0.0
      %377 = vmatpush1.msra.mxu0 0.0
      %378 = vmatprep.subr.mxu0 0.0
      %379 = vmatpush1.msra.mxu0 0.0
      %380 = vmatprep.subr.mxu0 0.0
      %381 = vmatpush1.msra.mxu0 0.0
      %382 = vmatprep.subr.mxu0 0.0
      %383 = vmatpush1.msra.mxu0 0.0
      %384 = vmatprep.subr.mxu0 0.0
      %385 = vmatpush1.msra.mxu0 0.0
      %386 = vmatprep.subr.mxu0 0.0
      %387 = vmatpush1.msra.mxu0 0.0
      %388 = vmatprep.subr.mxu0 0.0
      %389 = vmatpush1.msra.mxu0 0.0
      %390 = vmatprep.subr.mxu0 0.0
      %391 = vmatpush1.msra.mxu0 %v355
      %392 = vmatprep.subr.mxu0 0.0
      %393 = vmatpush1.msra.mxu0 %v354
      %394 = vmatprep.subr.mxu0 0.0
      %395 = vmatpush1.msra.mxu0 %v353
      %396 = vmatprep.subr.mxu0 0.0
      %397 = vmatpush1.msra.mxu0 %v352
      %398 = vmatprep.subr.mxu0 0.0
      %399 = vmatpush2.msra.mxu0 0.0
      %400 = vmatprep.subr.mxu0 0.0
      %401 = vmatpush2.msra.mxu0 0.0
      %402 = vmatprep.subr.mxu0 0.0
      %403 = vmatpush2.msra.mxu0 0.0
      %404 = vmatprep.subr.mxu0 0.0
      %405 = vmatpush2.msra.mxu0 0.0
      %406 = vmatprep.subr.mxu0 0.0
      %407 = vmatpush2.msra.mxu0 0.0
      %408 = vmatprep.subr.mxu0 0.0
      %409 = vmatpush2.msra.mxu0 0.0
      %410 = vmatprep.subr.mxu0 0.0
      %411 = vmatpush2.msra.mxu0 0.0
      %412 = vmatprep.subr.mxu0 0.0
      %413 = vmatpush2.msra.mxu0 0.0
      %414 = vmatprep.subr.mxu0 0.0
      %415 = vmatpush2.msra.mxu0 0.0
      %416 = vmatprep.subr.mxu0 0.0
      %417 = vmatpush2.msra.mxu0 0.0
      %418 = vmatprep.subr.mxu0 0.0
      %419 = vmatpush2.msra.mxu0 0.0
      %420 = vmatprep.subr.mxu0 0.0
      %421 = vmatpush2.msra.mxu0 0.0
      %422 = vmatprep.subr.mxu0 0.0
      %423 = vmatpush2.msra.mxu0 0.0
      %424 = vmatprep.subr.mxu0 0.0
      %425 = vmatpush2.msra.mxu0 0.0
      %426 = vmatprep.subr.mxu0 0.0
      %427 = vmatpush2.msra.mxu0 0.0
      %428 = vmatprep.subr.mxu0 0.0
      %429 = vmatpush2.msra.mxu0 0.0
      %430 = vmatprep.mubr.f32.mxu0 0.0
      %431 = vmatmul.mubr.f32.gmra.mxu0 %v364
      %v432 = vpop.f32.mrf.mxu0
      %v433 = vadd.f32 %v361, %v432
      %v434 = vpop.f32.mrf.mxu0
      %435 = vdwg.mxu0
      %v436 = vadd.f32 %v193, %v433
      %437 = vst.msk [vmem:[%s192] sm:$0xff] %vm198, %v436
      %p438 = scmp.lt.s32.totalorder %s15, 1
      %s439 = scalar_select %p438, %s15, 1
      %s440 = smul.addr %s439, 8
      %s441 = scalar_lea.vmem %s4, %s440
      // Predicated region
      $region37: #{cross_attention_gcn_forward.28} parent=35 // pred_check
        %p442 = pneg %p122
      $region38: #{cross_attention_gcn_forward.28} parent=35 // pred_check_branch
        %444 = sbr.rel (%p442) target = $region40
      $region39: #{cross_attention_gcn_forward.28} parent=35 // pred_region
        _
      $region40: #{cross_attention_gcn_forward.28} parent=35 // pred_fallthru
        _
    $region36: #{cross_attention_gcn_forward.28} parent=5 // pred_fallthru
      _
    %p445 = scmp.le.s32.totalorder 2, %s10
    // Predicated region
    $region41: #{cross_attention_gcn_forward.28} parent=5 // pred_check
      %p446 = pneg %p445
    $region42: #{cross_attention_gcn_forward.28} parent=5 // pred_check_branch
      %448 = sbr.rel (%p446) target = $region44
    $region43: #{cross_attention_gcn_forward.28} parent=5 // pred_region
      %s449 = ssub.s32 %s10, 2
      // Predicated region
      $region45: #{cross_attention_gcn_forward.28} parent=43 // pred_check
        %p450 = pneg %p128
      $region46: #{cross_attention_gcn_forward.28} parent=43 // pred_check_branch
        %452 = sbr.rel (%p450) target = $region48
      $region47: #{cross_attention_gcn_forward.28} parent=43 // pred_region
        %p453 = scmp.lt.s32.totalorder %s16, 1
        %s454 = scalar_select %p453, %s16, 1
        %s455 = smul.addr %s454, 8
        %s456 = scalar_lea.vmem %s4, %s455
      $region48: #{cross_attention_gcn_forward.28} parent=43 // pred_fallthru
        _
    $region44: #{cross_attention_gcn_forward.28} parent=5 // pred_fallthru
      _
  $region6: #{cross_attention_gcn_forward.28} parent=0 // loop_footer
    %s14 = sadd.s32 1, %s10
  $region7: #{cross_attention_gcn_forward.28} parent=0 // loop_footer_branch
    %9 = sbr.rel target = $region3
  $region8: #{cross_attention_gcn_forward.28} parent=0 // loop_exit
    _

// kernel: cross_attention_gcn_forward.37
$region0: #{cross_attention_gcn_forward.37}
  #allocation0 [shape = 'u32[]', space=smem, size = 0x4, offset = 0x4, fixed_abs, tag = 'smem constant byte address 0x4 - core index']
  #allocation1 [shape = 'u32[144,128]{1,0:T(1,128)}', space=vmem, size = 0x12000, scoped, tag = 'internal scratch']
  %s0 = inlined_call_operand.vmem [shape: f32[32,32], index: 0, kind: input, shape index: {}]
  %s1 = inlined_call_operand.vmem [shape: f32[32,32], index: 1, kind: input, shape index: {}]
  %s2 = inlined_call_operand.vmem [shape: f32[1,32], index: 2, kind: input, shape index: {}]
  %s3 = inlined_call_operand.vmem [shape: f32[32,32], index: 3, kind: input, shape index: {}]
  %s4 = inlined_call_operand.vmem [shape: f32[32,32], index: 4, kind: output, shape index: {}]
  %s5 = sld [smem:[#allocation0]]
  $region49: #{cross_attention_gcn_forward.37} parent=0
    _
  %s7 = ssub.s32 1, %s5
  %s8 = scalar_select 0, %s7, %s5
  loop: start=0, step=1, limit=4
  $region2: #{cross_attention_gcn_forward.37} parent=0 // loop_pre_header
    _
  $region3: #{cross_attention_gcn_forward.37} parent=0 // loop_header
    %s10 = sphi 0, %s14
    %p11 = scmp.ge.s32.totalorder %s10, 4
    %s20 = sphi 0, %s22
    %s23 = sphi 0, %s20
    %s24 = sphi 0, %s23
    %s40 = sphi 0, %s24
    %s44 = sphi 0, %s44
    %s46 = sphi 0, %s44
    %s47 = sphi 0, %s46
    %s61 = sphi 0, %s47
    %s65 = sphi 0, %s65
    %s67 = sphi 0, %s65
    %s68 = sphi 0, %s67
    %s82 = sphi 0, %s68
    %s88 = sphi 0, %s90
    %s91 = sphi 0, %s88
    %s92 = sphi 0, %s91
    %s108 = sphi 0, %s92
    %s114 = sphi 0, %s116
    %s117 = sphi 0, %s114
    %s118 = sphi 0, %s117
    %s134 = sphi 0, %s118
  $region4: #{cross_attention_gcn_forward.37} parent=0 // loop_header_branch
    %13 = sbr.rel (%p11) target = $region8
  $region5: #{cross_attention_gcn_forward.37} parent=0 // loop_body
    %s15 = ssub.s32 %s10, 1
    %s16 = ssub.s32 %s10, 2
    %s17 = sadd.s32 %s10, 1
    %s18 = ssub.s32 %s10, %s17
    %p19 = scmp.eq.s32.totalorder %s18, 0
    %s21 = sadd.s32 %s20, 1
    %s22 = scalar_select %p19, %s20, %s21
    %p25 = pneg %p19
    %p26 = scmp.eq.s32.totalorder %s10, 1
    %p27 = por %p25, %p26
    %p28 = scmp.ne.s32.totalorder %s20, %s23
    %p29 = scmp.eq.s32.totalorder %s10, 0
    %p30 = por %p28, %p29
    %p31 = scmp.ne.s32.totalorder %s20, %s23
    %p32 = scmp.eq.s32.totalorder %s15, 1
    %p33 = por %p31, %p32
    %p34 = scmp.ne.s32.totalorder %s23, %s24
    %p35 = scmp.eq.s32.totalorder %s15, 0
    %p36 = por %p34, %p35
    %p37 = scmp.ne.s32.totalorder %s23, %s24
    %p38 = scmp.eq.s32.totalorder %s16, 1
    %p39 = por %p37, %p38
    %p41 = scmp.ne.s32.totalorder %s24, %s40
    %p42 = scmp.eq.s32.totalorder %s16, 0
    %p43 = por %p41, %p42
    %s45 = sadd.s32 %s44, 1
    %p48 = scmp.eq.s32.totalorder %s10, 1
    %p49 = scmp.ne.s32.totalorder %s44, %s46
    %p50 = scmp.eq.s32.totalorder %s10, 0
    %p51 = por %p49, %p50
    %p52 = scmp.ne.s32.totalorder %s44, %s46
    %p53 = scmp.eq.s32.totalorder %s15, 1
    %p54 = por %p52, %p53
    %p55 = scmp.ne.s32.totalorder %s46, %s47
    %p56 = scmp.eq.s32.totalorder %s15, 0
    %p57 = por %p55, %p56
    %p58 = scmp.ne.s32.totalorder %s46, %s47
    %p59 = scmp.eq.s32.totalorder %s16, 1
    %p60 = por %p58, %p59
    %p62 = scmp.ne.s32.totalorder %s47, %s61
    %p63 = scmp.eq.s32.totalorder %s16, 0
    %p64 = por %p62, %p63
    %s66 = sadd.s32 %s65, 1
    %p69 = scmp.eq.s32.totalorder %s10, 1
    %p70 = scmp.ne.s32.totalorder %s65, %s67
    %p71 = scmp.eq.s32.totalorder %s10, 0
    %p72 = por %p70, %p71
    %p73 = scmp.ne.s32.totalorder %s65, %s67
    %p74 = scmp.eq.s32.totalorder %s15, 1
    %p75 = por %p73, %p74
    %p76 = scmp.ne.s32.totalorder %s67, %s68
    %p77 = scmp.eq.s32.totalorder %s15, 0
    %p78 = por %p76, %p77
    %p79 = scmp.ne.s32.totalorder %s67, %s68
    %p80 = scmp.eq.s32.totalorder %s16, 1
    %p81 = por %p79, %p80
    %p83 = scmp.ne.s32.totalorder %s68, %s82
    %p84 = scmp.eq.s32.totalorder %s16, 0
    %p85 = por %p83, %p84
    %s86 = ssub.s32 %s10, %s17
    %p87 = scmp.eq.s32.totalorder %s86, 0
    %s89 = sadd.s32 %s88, 1
    %s90 = scalar_select %p87, %s88, %s89
    %p93 = pneg %p87
    %p94 = scmp.eq.s32.totalorder %s10, 1
    %p95 = por %p93, %p94
    %p96 = scmp.ne.s32.totalorder %s88, %s91
    %p97 = scmp.eq.s32.totalorder %s10, 0
    %p98 = por %p96, %p97
    %p99 = scmp.ne.s32.totalorder %s88, %s91
    %p100 = scmp.eq.s32.totalorder %s15, 1
    %p101 = por %p99, %p100
    %p102 = scmp.ne.s32.totalorder %s91, %s92
    %p103 = scmp.eq.s32.totalorder %s15, 0
    %p104 = por %p102, %p103
    %p105 = scmp.ne.s32.totalorder %s91, %s92
    %p106 = scmp.eq.s32.totalorder %s16, 1
    %p107 = por %p105, %p106
    %p109 = scmp.ne.s32.totalorder %s92, %s108
    %p110 = scmp.eq.s32.totalorder %s16, 0
    %p111 = por %p109, %p110
    %s112 = ssub.s32 %s10, %s17
    %p113 = scmp.eq.s32.totalorder %s112, 0
    %s115 = sadd.s32 %s114, 1
    %s116 = scalar_select %p113, %s114, %s115
    %p119 = pneg %p113
    %p120 = scmp.eq.s32.totalorder %s10, 1
    %p121 = por %p119, %p120
    %p122 = scmp.ne.s32.totalorder %s114, %s117
    %p123 = scmp.eq.s32.totalorder %s10, 0
    %p124 = por %p122, %p123
    %p125 = scmp.ne.s32.totalorder %s114, %s117
    %p126 = scmp.eq.s32.totalorder %s15, 1
    %p127 = por %p125, %p126
    %p128 = scmp.ne.s32.totalorder %s117, %s118
    %p129 = scmp.eq.s32.totalorder %s15, 0
    %p130 = por %p128, %p129
    %p131 = scmp.ne.s32.totalorder %s117, %s118
    %p132 = scmp.eq.s32.totalorder %s16, 1
    %p133 = por %p131, %p132
    %p135 = scmp.ne.s32.totalorder %s118, %s134
    %p136 = scmp.eq.s32.totalorder %s16, 0
    %p137 = por %p135, %p136
    %p138 = scmp.le.s32.totalorder 1, %s10
    %p139 = scmp.lt.s32.totalorder %s10, 3
    %p140 = pnand %p138, %p139
    %p141 = pneg %p140
    // Predicated region
    $region9: #{cross_attention_gcn_forward.37} parent=5 // pred_check
      _
    $region10: #{cross_attention_gcn_forward.37} parent=5 // pred_check_branch
      %143 = sbr.rel (%p140) target = $region12
    $region11: #{cross_attention_gcn_forward.37} parent=5 // pred_region
      %s144 = ssub.s32 %s10, 1
      // Predicated region
      $region13: #{cross_attention_gcn_forward.37} parent=11 // pred_check
        %p145 = pneg %p57
      $region14: #{cross_attention_gcn_forward.37} parent=11 // pred_check_branch
        %147 = sbr.rel (%p145) target = $region16
      $region15: #{cross_attention_gcn_forward.37} parent=11 // pred_region
        _
      $region16: #{cross_attention_gcn_forward.37} parent=11 // pred_fallthru
        _
      // Predicated region
      $region17: #{cross_attention_gcn_forward.37} parent=11 // pred_check
        %p148 = pneg %p78
      $region18: #{cross_attention_gcn_forward.37} parent=11 // pred_check_branch
        %150 = sbr.rel (%p148) target = $region20
      $region19: #{cross_attention_gcn_forward.37} parent=11 // pred_region
        _
      $region20: #{cross_attention_gcn_forward.37} parent=11 // pred_fallthru
        _
    $region12: #{cross_attention_gcn_forward.37} parent=5 // pred_fallthru
      _
    %p151 = scmp.lt.s32.totalorder %s10, 2
    // Predicated region
    $region21: #{cross_attention_gcn_forward.37} parent=5 // pred_check
      %p152 = pneg %p151
    $region22: #{cross_attention_gcn_forward.37} parent=5 // pred_check_branch
      %154 = sbr.rel (%p152) target = $region24
    $region23: #{cross_attention_gcn_forward.37} parent=5 // pred_region
      // Predicated region
      $region25: #{cross_attention_gcn_forward.37} parent=23 // pred_check
        %p155 = pneg %p30
      $region26: #{cross_attention_gcn_forward.37} parent=23 // pred_check_branch
        %157 = sbr.rel (%p155) target = $region28
      $region27: #{cross_attention_gcn_forward.37} parent=23 // pred_region
        %s158 = smul.u32 2, %s10
        %p159 = scmp.lt.s32.totalorder %s158, 3
        %s160 = scalar_select %p159, %s158, 3
        %s161 = smul.addr %s160, 8
        %s162 = scalar_lea.vmem %s0, %s161
        %s163 = smul.u32 2, %s10
      $region28: #{cross_attention_gcn_forward.37} parent=23 // pred_fallthru
        _
      // Predicated region
      $region29: #{cross_attention_gcn_forward.37} parent=23 // pred_check
        %p164 = pneg %p98
      $region30: #{cross_attention_gcn_forward.37} parent=23 // pred_check_branch
        %166 = sbr.rel (%p164) target = $region32
      $region31: #{cross_attention_gcn_forward.37} parent=23 // pred_region
        %s167 = smul.u32 2, %s10
        %p168 = scmp.lt.s32.totalorder %s167, 3
        %s169 = scalar_select %p168, %s167, 3
        %s170 = smul.addr %s169, 8
        %s171 = scalar_lea.vmem %s3, %s170
        %s172 = smul.u32 2, %s10
      $region32: #{cross_attention_gcn_forward.37} parent=23 // pred_fallthru
        _
    $region24: #{cross_attention_gcn_forward.37} parent=5 // pred_fallthru
      _
    %p173 = scmp.le.s32.totalorder 1, %s10
    %p174 = scmp.lt.s32.totalorder %s10, 3
    %p175 = pnand %p173, %p174
    %p176 = pneg %p175
    // Predicated region
    $region33: #{cross_attention_gcn_forward.37} parent=5 // pred_check
      _
    $region34: #{cross_attention_gcn_forward.37} parent=5 // pred_check_branch
      %178 = sbr.rel (%p175) target = $region36
    $region35: #{cross_attention_gcn_forward.37} parent=5 // pred_region
      %s179 = ssub.s32 %s10, 1
      %s180 = smul.u32 2, %s15
      %p181 = scmp.lt.s32.totalorder %s180, 3
      %s182 = scalar_select %p181, %s180, 3
      %s183 = smul.addr %s182, 8
      %s184 = scalar_lea.vmem %s0, %s183
      %p185 = pneg %p36
      %p186 = pneg %p33
      %p187 = pneg %p57
      %p188 = pneg %p54
      %p189 = pneg %p78
      %p190 = pneg %p75
      %s191 = smul.u32 2, %s15
      %p192 = scmp.lt.s32.totalorder %s191, 3
      %s193 = scalar_select %p192, %s191, 3
      %s194 = smul.addr %s193, 8
      %s195 = scalar_lea.vmem %s3, %s194
      %p196 = pneg %p104
      %p197 = pneg %p101
      %p198 = pneg %p130
      %p199 = pneg %p127
      %s200 = smul.u32 2, %s15
      %p201 = scmp.lt.s32.totalorder %s200, 3
      %s202 = scalar_select %p201, %s200, 3
      %s203 = smul.addr %s202, 8
      %s204 = scalar_lea.vmem %s4, %s203
      %s205 = smul.u32 2, %s15
      %p206 = scmp.lt.s32.totalorder %s205, 3
      %s207 = scalar_select %p206, %s205, 3
      %s208 = smul.addr %s207, 8
      %s209 = scalar_lea.vmem %s0, %s208
      %s210 = smul.u32 2, %s15
      %s211 = smul.u32 2, %s15
      %p212 = scmp.lt.s32.totalorder %s211, 3
      %s213 = scalar_select %p212, %s211, 3
      %s214 = smul.addr %s213, 8
      %s215 = scalar_lea.vmem %s3, %s214
      %s216 = smul.u32 2, %s15
      %s217 = smul.u32 2, %s15
      %p218 = scmp.lt.s32.totalorder %s217, 3
      %s219 = scalar_select %p218, %s217, 3
      %s220 = smul.addr %s219, 8
      %s221 = scalar_lea.vmem %s4, %s220
      %s222 = smul.u32 2, %s15
      %v223 = vld [vmem:[%s209] sm:$0xff]
      %v224 = vld [vmem:[%s209 + $0x8] sm:$0xff]
      %v225 = vld [vmem:[%s1] sm:$0xff]
      %v226 = vld [vmem:[%s1 + $0x8] sm:$0xff]
      %v227 = vld [vmem:[%s1 + $0x10] sm:$0xff]
      %v228 = vld [vmem:[%s1 + $0x18] sm:$0xff]
      %v229 = vld [vmem:[%s2] sm:$0x1]
      %v231 = vlaneseq
      %v232 = vshrl.u32 %v231, 7
      %v233 = vsub.s32 0, %v232
      %v234 = vrot.slane %v229, %v233
      %vm236 = vcmask 261120
      %v238 = vsel %vm236, %v223, 0
      %v241 = vsel %vm236, %v224, 0
      %243 = vmatprep.subr.mxu0 0.0
      %244 = vmatpush1.msra.mxu0 0.0
      %245 = vmatprep.subr.mxu0 0.0
      %246 = vmatpush1.msra.mxu0 0.0
      %247 = vmatprep.subr.mxu0 0.0
      %248 = vmatpush1.msra.mxu0 0.0
      %249 = vmatprep.subr.mxu0 0.0
      %250 = vmatpush1.msra.mxu0 0.0
      %251 = vmatprep.subr.mxu0 0.0
      %252 = vmatpush1.msra.mxu0 0.0
      %253 = vmatprep.subr.mxu0 0.0
      %254 = vmatpush1.msra.mxu0 0.0
      %255 = vmatprep.subr.mxu0 0.0
      %256 = vmatpush1.msra.mxu0 0.0
      %257 = vmatprep.subr.mxu0 0.0
      %258 = vmatpush1.msra.mxu0 0.0
      %259 = vmatprep.subr.mxu0 0.0
      %260 = vmatpush1.msra.mxu0 0.0
      %261 = vmatprep.subr.mxu0 0.0
      %262 = vmatpush1.msra.mxu0 0.0
      %263 = vmatprep.subr.mxu0 0.0
      %264 = vmatpush1.msra.mxu0 0.0
      %265 = vmatprep.subr.mxu0 0.0
      %266 = vmatpush1.msra.mxu0 0.0
      %267 = vmatprep.subr.mxu0 0.0
      %268 = vmatpush1.msra.mxu0 %v228
      %269 = vmatprep.subr.mxu0 0.0
      %270 = vmatpush1.msra.mxu0 %v227
      %271 = vmatprep.subr.mxu0 0.0
      %272 = vmatpush1.msra.mxu0 %v226
      %273 = vmatprep.subr.mxu0 0.0
      %274 = vmatpush1.msra.mxu0 %v225
      %275 = vmatprep.subr.mxu0 0.0
      %276 = vmatpush2.msra.mxu0 0.0
      %277 = vmatprep.subr.mxu0 0.0
      %278 = vmatpush2.msra.mxu0 0.0
      %279 = vmatprep.subr.mxu0 0.0
      %280 = vmatpush2.msra.mxu0 0.0
      %281 = vmatprep.subr.mxu0 0.0
      %282 = vmatpush2.msra.mxu0 0.0
      %283 = vmatprep.subr.mxu0 0.0
      %284 = vmatpush2.msra.mxu0 0.0
      %285 = vmatprep.subr.mxu0 0.0
      %286 = vmatpush2.msra.mxu0 0.0
      %287 = vmatprep.subr.mxu0 0.0
      %288 = vmatpush2.msra.mxu0 0.0
      %289 = vmatprep.subr.mxu0 0.0
      %290 = vmatpush2.msra.mxu0 0.0
      %291 = vmatprep.subr.mxu0 0.0
      %292 = vmatpush2.msra.mxu0 0.0
      %293 = vmatprep.subr.mxu0 0.0
      %294 = vmatpush2.msra.mxu0 0.0
      %295 = vmatprep.subr.mxu0 0.0
      %296 = vmatpush2.msra.mxu0 0.0
      %297 = vmatprep.subr.mxu0 0.0
      %298 = vmatpush2.msra.mxu0 0.0
      %299 = vmatprep.subr.mxu0 0.0
      %300 = vmatpush2.msra.mxu0 0.0
      %301 = vmatprep.subr.mxu0 0.0
      %302 = vmatpush2.msra.mxu0 0.0
      %303 = vmatprep.subr.mxu0 0.0
      %304 = vmatpush2.msra.mxu0 0.0
      %305 = vmatprep.subr.mxu0 0.0
      %306 = vmatpush2.msra.mxu0 0.0
      %307 = vmatprep.mubr.f32.mxu0 0.0
      %308 = vmatmul.mubr.f32.gmra.mxu0 %v238
      %v309 = vpop.f32.mrf.mxu0
      %v310 = vadd.f32 %v234, %v309
      %v311 = vpop.f32.mrf.mxu0
      %312 = vmatprep.mubr.f32.mxu0 0.0
      %313 = vmatmul.mubr.f32.gmra.mxu0 %v241
      %v314 = vpop.f32.mrf.mxu0
      %v315 = vadd.f32 %v234, %v314
      %v316 = vpop.f32.mrf.mxu0
      %317 = vdwg.mxu0
      %v318 = vld [vmem:[%s215] sm:$0xff]
      %v319 = vld [vmem:[%s215 + $0x8] sm:$0xff]
      %v320 = vadd.f32 %v318, %v310
      %v321 = vadd.f32 %v319, %v315
      %322 = vst.msk [vmem:[%s221] sm:$0xff] %vm236, %v320
      %323 = vst.msk [vmem:[%s221 + $0x8] sm:$0xff] %vm236, %v321
      %s324 = smul.u32 2, %s15
      %p325 = scmp.lt.s32.totalorder %s324, 3
      %s326 = scalar_select %p325, %s324, 3
      %s327 = smul.addr %s326, 8
      %s328 = scalar_lea.vmem %s4, %s327
      // Predicated region
      $region37: #{cross_attention_gcn_forward.37} parent=35 // pred_check
        %p329 = pneg %p127
      $region38: #{cross_attention_gcn_forward.37} parent=35 // pred_check_branch
        %331 = sbr.rel (%p329) target = $region40
      $region39: #{cross_attention_gcn_forward.37} parent=35 // pred_region
        %s332 = smul.u32 2, %s15
      $region40: #{cross_attention_gcn_forward.37} parent=35 // pred_fallthru
        _
    $region36: #{cross_attention_gcn_forward.37} parent=5 // pred_fallthru
      _
    %p333 = scmp.le.s32.totalorder 2, %s10
    // Predicated region
    $region41: #{cross_attention_gcn_forward.37} parent=5 // pred_check
      %p334 = pneg %p333
    $region42: #{cross_attention_gcn_forward.37} parent=5 // pred_check_branch
      %336 = sbr.rel (%p334) target = $region44
    $region43: #{cross_attention_gcn_forward.37} parent=5 // pred_region
      %s337 = ssub.s32 %s10, 2
      // Predicated region
      $region45: #{cross_attention_gcn_forward.37} parent=43 // pred_check
        %p338 = pneg %p133
      $region46: #{cross_attention_gcn_forward.37} parent=43 // pred_check_branch
        %340 = sbr.rel (%p338) target = $region48
      $region47: #{cross_attention_gcn_forward.37} parent=43 // pred_region
        %s341 = smul.u32 2, %s16
        %p342 = scmp.lt.s32.totalorder %s341, 3
        %s343 = scalar_select %p342, %s341, 3
        %s344 = smul.addr %s343, 8
        %s345 = scalar_lea.vmem %s4, %s344
      $region48: #{cross_attention_gcn_forward.37} parent=43 // pred_fallthru
        _
    $region44: #{cross_attention_gcn_forward.37} parent=5 // pred_fallthru
      _
  $region6: #{cross_attention_gcn_forward.37} parent=0 // loop_footer
    %s14 = sadd.s32 1, %s10
  $region7: #{cross_attention_gcn_forward.37} parent=0 // loop_footer_branch
    %9 = sbr.rel target = $region3
  $region8: #{cross_attention_gcn_forward.37} parent=0 // loop_exit
    _

// kernel: cross_attention_gcn_forward.36
$region0: #{cross_attention_gcn_forward.36}
  #allocation0 [shape = 'u32[]', space=smem, size = 0x4, offset = 0x4, fixed_abs, tag = 'smem constant byte address 0x4 - core index']
  #allocation1 [shape = 'u32[144,128]{1,0:T(1,128)}', space=vmem, size = 0x12000, scoped, tag = 'internal scratch']
  %s0 = inlined_call_operand.vmem [shape: f32[8,16,8], index: 0, kind: input, shape index: {}]
  %s1 = inlined_call_operand.vmem [shape: f32[8,16,8], index: 1, kind: input, shape index: {}]
  %s2 = inlined_call_operand.vmem [shape: f32[8,16,8], index: 2, kind: input, shape index: {}]
  %s3 = inlined_call_operand.vmem [shape: f32[8,16,8], index: 3, kind: output, shape index: {}]
  %s4 = sld [smem:[#allocation0]]
  $region45: #{cross_attention_gcn_forward.36} parent=0
    _
  %s6 = ssub.s32 1, %s4
  %s7 = scalar_select 0, %s6, %s4
  loop: start=0, step=1, limit=4
  $region2: #{cross_attention_gcn_forward.36} parent=0 // loop_pre_header
    _
  $region3: #{cross_attention_gcn_forward.36} parent=0 // loop_header
    %s9 = sphi 0, %s13
    %p10 = scmp.ge.s32.totalorder %s9, 4
    %s19 = sphi 0, %s21
    %s22 = sphi 0, %s19
    %s23 = sphi 0, %s22
    %s39 = sphi 0, %s23
    %s45 = sphi 0, %s47
    %s48 = sphi 0, %s45
    %s49 = sphi 0, %s48
    %s65 = sphi 0, %s49
    %s71 = sphi 0, %s73
    %s74 = sphi 0, %s71
    %s75 = sphi 0, %s74
    %s91 = sphi 0, %s75
    %s97 = sphi 0, %s99
    %s100 = sphi 0, %s97
    %s101 = sphi 0, %s100
    %s117 = sphi 0, %s101
  $region4: #{cross_attention_gcn_forward.36} parent=0 // loop_header_branch
    %12 = sbr.rel (%p10) target = $region8
  $region5: #{cross_attention_gcn_forward.36} parent=0 // loop_body
    %s14 = ssub.s32 %s9, 1
    %s15 = ssub.s32 %s9, 2
    %s16 = sadd.s32 %s9, 1
    %s17 = ssub.s32 %s9, %s16
    %p18 = scmp.eq.s32.totalorder %s17, 0
    %s20 = sadd.s32 %s19, 1
    %s21 = scalar_select %p18, %s19, %s20
    %p24 = pneg %p18
    %p25 = scmp.eq.s32.totalorder %s9, 1
    %p26 = por %p24, %p25
    %p27 = scmp.ne.s32.totalorder %s19, %s22
    %p28 = scmp.eq.s32.totalorder %s9, 0
    %p29 = por %p27, %p28
    %p30 = scmp.ne.s32.totalorder %s19, %s22
    %p31 = scmp.eq.s32.totalorder %s14, 1
    %p32 = por %p30, %p31
    %p33 = scmp.ne.s32.totalorder %s22, %s23
    %p34 = scmp.eq.s32.totalorder %s14, 0
    %p35 = por %p33, %p34
    %p36 = scmp.ne.s32.totalorder %s22, %s23
    %p37 = scmp.eq.s32.totalorder %s15, 1
    %p38 = por %p36, %p37
    %p40 = scmp.ne.s32.totalorder %s23, %s39
    %p41 = scmp.eq.s32.totalorder %s15, 0
    %p42 = por %p40, %p41
    %s43 = ssub.s32 %s9, %s16
    %p44 = scmp.eq.s32.totalorder %s43, 0
    %s46 = sadd.s32 %s45, 1
    %s47 = scalar_select %p44, %s45, %s46
    %p50 = pneg %p44
    %p51 = scmp.eq.s32.totalorder %s9, 1
    %p52 = por %p50, %p51
    %p53 = scmp.ne.s32.totalorder %s45, %s48
    %p54 = scmp.eq.s32.totalorder %s9, 0
    %p55 = por %p53, %p54
    %p56 = scmp.ne.s32.totalorder %s45, %s48
    %p57 = scmp.eq.s32.totalorder %s14, 1
    %p58 = por %p56, %p57
    %p59 = scmp.ne.s32.totalorder %s48, %s49
    %p60 = scmp.eq.s32.totalorder %s14, 0
    %p61 = por %p59, %p60
    %p62 = scmp.ne.s32.totalorder %s48, %s49
    %p63 = scmp.eq.s32.totalorder %s15, 1
    %p64 = por %p62, %p63
    %p66 = scmp.ne.s32.totalorder %s49, %s65
    %p67 = scmp.eq.s32.totalorder %s15, 0
    %p68 = por %p66, %p67
    %s69 = ssub.s32 %s9, %s16
    %p70 = scmp.eq.s32.totalorder %s69, 0
    %s72 = sadd.s32 %s71, 1
    %s73 = scalar_select %p70, %s71, %s72
    %p76 = pneg %p70
    %p77 = scmp.eq.s32.totalorder %s9, 1
    %p78 = por %p76, %p77
    %p79 = scmp.ne.s32.totalorder %s71, %s74
    %p80 = scmp.eq.s32.totalorder %s9, 0
    %p81 = por %p79, %p80
    %p82 = scmp.ne.s32.totalorder %s71, %s74
    %p83 = scmp.eq.s32.totalorder %s14, 1
    %p84 = por %p82, %p83
    %p85 = scmp.ne.s32.totalorder %s74, %s75
    %p86 = scmp.eq.s32.totalorder %s14, 0
    %p87 = por %p85, %p86
    %p88 = scmp.ne.s32.totalorder %s74, %s75
    %p89 = scmp.eq.s32.totalorder %s15, 1
    %p90 = por %p88, %p89
    %p92 = scmp.ne.s32.totalorder %s75, %s91
    %p93 = scmp.eq.s32.totalorder %s15, 0
    %p94 = por %p92, %p93
    %s95 = ssub.s32 %s9, %s16
    %p96 = scmp.eq.s32.totalorder %s95, 0
    %s98 = sadd.s32 %s97, 1
    %s99 = scalar_select %p96, %s97, %s98
    %p102 = pneg %p96
    %p103 = scmp.eq.s32.totalorder %s9, 1
    %p104 = por %p102, %p103
    %p105 = scmp.ne.s32.totalorder %s97, %s100
    %p106 = scmp.eq.s32.totalorder %s9, 0
    %p107 = por %p105, %p106
    %p108 = scmp.ne.s32.totalorder %s97, %s100
    %p109 = scmp.eq.s32.totalorder %s14, 1
    %p110 = por %p108, %p109
    %p111 = scmp.ne.s32.totalorder %s100, %s101
    %p112 = scmp.eq.s32.totalorder %s14, 0
    %p113 = por %p111, %p112
    %p114 = scmp.ne.s32.totalorder %s100, %s101
    %p115 = scmp.eq.s32.totalorder %s15, 1
    %p116 = por %p114, %p115
    %p118 = scmp.ne.s32.totalorder %s101, %s117
    %p119 = scmp.eq.s32.totalorder %s15, 0
    %p120 = por %p118, %p119
    %p121 = scmp.le.s32.totalorder 1, %s9
    %p122 = scmp.lt.s32.totalorder %s9, 3
    %p123 = pnand %p121, %p122
    %p124 = pneg %p123
    // Predicated region
    $region9: #{cross_attention_gcn_forward.36} parent=5 // pred_check
      _
    $region10: #{cross_attention_gcn_forward.36} parent=5 // pred_check_branch
      %126 = sbr.rel (%p123) target = $region12
    $region11: #{cross_attention_gcn_forward.36} parent=5 // pred_region
      %s127 = ssub.s32 %s9, 1
    $region12: #{cross_attention_gcn_forward.36} parent=5 // pred_fallthru
      _
    %p128 = scmp.lt.s32.totalorder %s9, 2
    // Predicated region
    $region13: #{cross_attention_gcn_forward.36} parent=5 // pred_check
      %p129 = pneg %p128
    $region14: #{cross_attention_gcn_forward.36} parent=5 // pred_check_branch
      %131 = sbr.rel (%p129) target = $region16
    $region15: #{cross_attention_gcn_forward.36} parent=5 // pred_region
      // Predicated region
      $region17: #{cross_attention_gcn_forward.36} parent=15 // pred_check
        %p132 = pneg %p29
      $region18: #{cross_attention_gcn_forward.36} parent=15 // pred_check_branch
        %134 = sbr.rel (%p132) target = $region20
      $region19: #{cross_attention_gcn_forward.36} parent=15 // pred_region
        %s135 = smul.u32 4, %s9
        %p136 = scmp.lt.s32.totalorder %s135, 7
        %s137 = scalar_select %p136, %s135, 7
        %s138 = smul.addr %s137, 2
        %s139 = smul.addr %s138, 8
        %s140 = scalar_lea.vmem %s0, %s139
        %s141 = smul.u32 4, %s9
      $region20: #{cross_attention_gcn_forward.36} parent=15 // pred_fallthru
        _
      // Predicated region
      $region21: #{cross_attention_gcn_forward.36} parent=15 // pred_check
        %p142 = pneg %p55
      $region22: #{cross_attention_gcn_forward.36} parent=15 // pred_check_branch
        %144 = sbr.rel (%p142) target = $region24
      $region23: #{cross_attention_gcn_forward.36} parent=15 // pred_region
        %s145 = smul.u32 4, %s9
        %p146 = scmp.lt.s32.totalorder %s145, 7
        %s147 = scalar_select %p146, %s145, 7
        %s148 = smul.addr %s147, 2
        %s149 = smul.addr %s148, 8
        %s150 = scalar_lea.vmem %s1, %s149
        %s151 = smul.u32 4, %s9
      $region24: #{cross_attention_gcn_forward.36} parent=15 // pred_fallthru
        _
      // Predicated region
      $region25: #{cross_attention_gcn_forward.36} parent=15 // pred_check
        %p152 = pneg %p81
      $region26: #{cross_attention_gcn_forward.36} parent=15 // pred_check_branch
        %154 = sbr.rel (%p152) target = $region28
      $region27: #{cross_attention_gcn_forward.36} parent=15 // pred_region
        %s155 = smul.u32 4, %s9
        %p156 = scmp.lt.s32.totalorder %s155, 7
        %s157 = scalar_select %p156, %s155, 7
        %s158 = smul.addr %s157, 2
        %s159 = smul.addr %s158, 8
        %s160 = scalar_lea.vmem %s2, %s159
        %s161 = smul.u32 4, %s9
      $region28: #{cross_attention_gcn_forward.36} parent=15 // pred_fallthru
        _
    $region16: #{cross_attention_gcn_forward.36} parent=5 // pred_fallthru
      _
    %p162 = scmp.le.s32.totalorder 1, %s9
    %p163 = scmp.lt.s32.totalorder %s9, 3
    %p164 = pnand %p162, %p163
    %p165 = pneg %p164
    // Predicated region
    $region29: #{cross_attention_gcn_forward.36} parent=5 // pred_check
      _
    $region30: #{cross_attention_gcn_forward.36} parent=5 // pred_check_branch
      %167 = sbr.rel (%p164) target = $region32
    $region31: #{cross_attention_gcn_forward.36} parent=5 // pred_region
      %s168 = ssub.s32 %s9, 1
      %s169 = smul.u32 4, %s14
      %p170 = scmp.lt.s32.totalorder %s169, 7
      %s171 = scalar_select %p170, %s169, 7
      %s172 = smul.addr %s171, 2
      %s173 = smul.addr %s172, 8
      %s174 = scalar_lea.vmem %s0, %s173
      %p175 = pneg %p35
      %p176 = pneg %p32
      %s177 = smul.u32 4, %s14
      %p178 = scmp.lt.s32.totalorder %s177, 7
      %s179 = scalar_select %p178, %s177, 7
      %s180 = smul.addr %s179, 2
      %s181 = smul.addr %s180, 8
      %s182 = scalar_lea.vmem %s1, %s181
      %p183 = pneg %p61
      %p184 = pneg %p58
      %s185 = smul.u32 4, %s14
      %p186 = scmp.lt.s32.totalorder %s185, 7
      %s187 = scalar_select %p186, %s185, 7
      %s188 = smul.addr %s187, 2
      %s189 = smul.addr %s188, 8
      %s190 = scalar_lea.vmem %s2, %s189
      %p191 = pneg %p87
      %p192 = pneg %p84
      %p193 = pneg %p113
      %p194 = pneg %p110
      %s195 = smul.u32 4, %s14
      %p196 = scmp.lt.s32.totalorder %s195, 7
      %s197 = scalar_select %p196, %s195, 7
      %s198 = smul.addr %s197, 2
      %s199 = smul.addr %s198, 8
      %s200 = scalar_lea.vmem %s3, %s199
      %s201 = smul.u32 4, %s14
      %p202 = scmp.lt.s32.totalorder %s201, 7
      %s203 = scalar_select %p202, %s201, 7
      %s204 = smul.addr %s203, 2
      %s205 = smul.addr %s204, 8
      %s206 = scalar_lea.vmem %s0, %s205
      %s207 = smul.u32 4, %s14
      %s208 = smul.u32 4, %s14
      %p209 = scmp.lt.s32.totalorder %s208, 7
      %s210 = scalar_select %p209, %s208, 7
      %s211 = smul.addr %s210, 2
      %s212 = smul.addr %s211, 8
      %s213 = scalar_lea.vmem %s1, %s212
      %s214 = smul.u32 4, %s14
      %s215 = smul.u32 4, %s14
      %p216 = scmp.lt.s32.totalorder %s215, 7
      %s217 = scalar_select %p216, %s215, 7
      %s218 = smul.addr %s217, 2
      %s219 = smul.addr %s218, 8
      %s220 = scalar_lea.vmem %s2, %s219
      %s221 = smul.u32 4, %s14
      %s222 = smul.u32 4, %s14
      %p223 = scmp.lt.s32.totalorder %s222, 7
      %s224 = scalar_select %p223, %s222, 7
      %s225 = smul.addr %s224, 2
      %s226 = smul.addr %s225, 8
      %s227 = scalar_lea.vmem %s3, %s226
      %s228 = smul.u32 4, %s14
      %v229 = vld [vmem:[%s206] sm:$0xff]
      %v230 = vld [vmem:[%s206 + $0x8] sm:$0xff]
      %v231 = vld [vmem:[%s206 + $0x10] sm:$0xff]
      %v232 = vld [vmem:[%s206 + $0x18] sm:$0xff]
      %v233 = vld [vmem:[%s206 + $0x20] sm:$0xff]
      %v234 = vld [vmem:[%s206 + $0x28] sm:$0xff]
      %v235 = vld [vmem:[%s206 + $0x30] sm:$0xff]
      %v236 = vld [vmem:[%s206 + $0x38] sm:$0xff]
      %v237 = vld [vmem:[%s213] sm:$0xff]
      %v238 = vld [vmem:[%s213 + $0x8] sm:$0xff]
      %v239 = vld [vmem:[%s213 + $0x10] sm:$0xff]
      %v240 = vld [vmem:[%s213 + $0x18] sm:$0xff]
      %v241 = vld [vmem:[%s213 + $0x20] sm:$0xff]
      %v242 = vld [vmem:[%s213 + $0x28] sm:$0xff]
      %v243 = vld [vmem:[%s213 + $0x30] sm:$0xff]
      %v244 = vld [vmem:[%s213 + $0x38] sm:$0xff]
      %v245 = vld [vmem:[%s220] sm:$0xff]
      %v246 = vld [vmem:[%s220 + $0x8] sm:$0xff]
      %v247 = vld [vmem:[%s220 + $0x10] sm:$0xff]
      %v248 = vld [vmem:[%s220 + $0x18] sm:$0xff]
      %v249 = vld [vmem:[%s220 + $0x20] sm:$0xff]
      %v250 = vld [vmem:[%s220 + $0x28] sm:$0xff]
      %v251 = vld [vmem:[%s220 + $0x30] sm:$0xff]
      %v252 = vld [vmem:[%s220 + $0x38] sm:$0xff]
      %vm253 = vcmask 64512
      %v255 = vsel %vm253, %v229, 0
      %v258 = vsel %vm253, %v230, 0
      %v261 = vsel %vm253, %v237, 0
      %v264 = vsel %vm253, %v238, 0
      %266 = vmatprep.subr.mxu0 0.0
      %267 = vmatpush1.xpose.msra.mxu0 0.0
      %268 = vmatprep.subr.mxu0 0.0
      %269 = vmatpush1.xpose.msra.mxu0 0.0
      %270 = vmatprep.subr.mxu0 0.0
      %271 = vmatpush1.xpose.msra.mxu0 0.0
      %272 = vmatprep.subr.mxu0 0.0
      %273 = vmatpush1.xpose.msra.mxu0 0.0
      %274 = vmatprep.subr.mxu0 0.0
      %275 = vmatpush1.xpose.msra.mxu0 0.0
      %276 = vmatprep.subr.mxu0 0.0
      %277 = vmatpush1.xpose.msra.mxu0 0.0
      %278 = vmatprep.subr.mxu0 0.0
      %279 = vmatpush1.xpose.msra.mxu0 0.0
      %280 = vmatprep.subr.mxu0 0.0
      %281 = vmatpush1.xpose.msra.mxu0 0.0
      %282 = vmatprep.subr.mxu0 0.0
      %283 = vmatpush1.xpose.msra.mxu0 0.0
      %284 = vmatprep.subr.mxu0 0.0
      %285 = vmatpush1.xpose.msra.mxu0 0.0
      %286 = vmatprep.subr.mxu0 0.0
      %287 = vmatpush1.xpose.msra.mxu0 0.0
      %288 = vmatprep.subr.mxu0 0.0
      %289 = vmatpush1.xpose.msra.mxu0 0.0
      %290 = vmatprep.subr.mxu0 0.0
      %291 = vmatpush1.xpose.msra.mxu0 0.0
      %292 = vmatprep.subr.mxu0 0.0
      %293 = vmatpush1.xpose.msra.mxu0 0.0
      %294 = vmatprep.subr.mxu0 0.0
      %295 = vmatpush1.xpose.msra.mxu0 %v264
      %296 = vmatprep.subr.mxu0 0.0
      %297 = vmatpush1.xpose.msra.mxu0 %v261
      %298 = vmatprep.subr.mxu0 0.0
      %299 = vmatpush2.xpose.msra.mxu0 0.0
      %300 = vmatprep.subr.mxu0 0.0
      %301 = vmatpush2.xpose.msra.mxu0 0.0
      %302 = vmatprep.subr.mxu0 0.0
      %303 = vmatpush2.xpose.msra.mxu0 0.0
      %304 = vmatprep.subr.mxu0 0.0
      %305 = vmatpush2.xpose.msra.mxu0 0.0
      %306 = vmatprep.subr.mxu0 0.0
      %307 = vmatpush2.xpose.msra.mxu0 0.0
      %308 = vmatprep.subr.mxu0 0.0
      %309 = vmatpush2.xpose.msra.mxu0 0.0
      %310 = vmatprep.subr.mxu0 0.0
      %311 = vmatpush2.xpose.msra.mxu0 0.0
      %312 = vmatprep.subr.mxu0 0.0
      %313 = vmatpush2.xpose.msra.mxu0 0.0
      %314 = vmatprep.subr.mxu0 0.0
      %315 = vmatpush2.xpose.msra.mxu0 0.0
      %316 = vmatprep.subr.mxu0 0.0
      %317 = vmatpush2.xpose.msra.mxu0 0.0
      %318 = vmatprep.subr.mxu0 0.0
      %319 = vmatpush2.xpose.msra.mxu0 0.0
      %320 = vmatprep.subr.mxu0 0.0
      %321 = vmatpush2.xpose.msra.mxu0 0.0
      %322 = vmatprep.subr.mxu0 0.0
      %323 = vmatpush2.xpose.msra.mxu0 0.0
      %324 = vmatprep.subr.mxu0 0.0
      %325 = vmatpush2.xpose.msra.mxu0 0.0
      %326 = vmatprep.subr.mxu0 0.0
      %327 = vmatpush2.xpose.msra.mxu0 0.0
      %328 = vmatprep.subr.mxu0 0.0
      %329 = vmatpush2.xpose.msra.mxu0 0.0
      %330 = vmatprep.mubr.f32.mxu0 0.0
      %331 = vmatmul.mubr.f32.gmra.mxu0 %v255
      %v332 = vpop.f32.mrf.mxu0
      %v333 = vadd.f32 0.0, %v332
      %v334 = vpop.f32.mrf.mxu0
      %335 = vmatprep.mubr.f32.mxu0 0.0
      %336 = vmatmul.mubr.f32.gmra.mxu0 %v258
      %v337 = vpop.f32.mrf.mxu0
      %v338 = vadd.f32 0.0, %v337
      %v339 = vpop.f32.mrf.mxu0
      %340 = vdwg.mxu0
      %v342 = vsel %vm253, %v231, 0
      %v345 = vsel %vm253, %v232, 0
      %v348 = vsel %vm253, %v239, 0
      %v351 = vsel %vm253, %v240, 0
      %353 = vmatprep.subr.mxu0 0.0
      %354 = vmatpush1.xpose.msra.mxu0 0.0
      %355 = vmatprep.subr.mxu0 0.0
      %356 = vmatpush1.xpose.msra.mxu0 0.0
      %357 = vmatprep.subr.mxu0 0.0
      %358 = vmatpush1.xpose.msra.mxu0 0.0
      %359 = vmatprep.subr.mxu0 0.0
      %360 = vmatpush1.xpose.msra.mxu0 0.0
      %361 = vmatprep.subr.mxu0 0.0
      %362 = vmatpush1.xpose.msra.mxu0 0.0
      %363 = vmatprep.subr.mxu0 0.0
      %364 = vmatpush1.xpose.msra.mxu0 0.0
      %365 = vmatprep.subr.mxu0 0.0
      %366 = vmatpush1.xpose.msra.mxu0 0.0
      %367 = vmatprep.subr.mxu0 0.0
      %368 = vmatpush1.xpose.msra.mxu0 0.0
      %369 = vmatprep.subr.mxu0 0.0
      %370 = vmatpush1.xpose.msra.mxu0 0.0
      %371 = vmatprep.subr.mxu0 0.0
      %372 = vmatpush1.xpose.msra.mxu0 0.0
      %373 = vmatprep.subr.mxu0 0.0
      %374 = vmatpush1.xpose.msra.mxu0 0.0
      %375 = vmatprep.subr.mxu0 0.0
      %376 = vmatpush1.xpose.msra.mxu0 0.0
      %377 = vmatprep.subr.mxu0 0.0
      %378 = vmatpush1.xpose.msra.mxu0 0.0
      %379 = vmatprep.subr.mxu0 0.0
      %380 = vmatpush1.xpose.msra.mxu0 0.0
      %381 = vmatprep.subr.mxu0 0.0
      %382 = vmatpush1.xpose.msra.mxu0 %v351
      %383 = vmatprep.subr.mxu0 0.0
      %384 = vmatpush1.xpose.msra.mxu0 %v348
      %385 = vmatprep.subr.mxu0 0.0
      %386 = vmatpush2.xpose.msra.mxu0 0.0
      %387 = vmatprep.subr.mxu0 0.0
      %388 = vmatpush2.xpose.msra.mxu0 0.0
      %389 = vmatprep.subr.mxu0 0.0
      %390 = vmatpush2.xpose.msra.mxu0 0.0
      %391 = vmatprep.subr.mxu0 0.0
      %392 = vmatpush2.xpose.msra.mxu0 0.0
      %393 = vmatprep.subr.mxu0 0.0
      %394 = vmatpush2.xpose.msra.mxu0 0.0
      %395 = vmatprep.subr.mxu0 0.0
      %396 = vmatpush2.xpose.msra.mxu0 0.0
      %397 = vmatprep.subr.mxu0 0.0
      %398 = vmatpush2.xpose.msra.mxu0 0.0
      %399 = vmatprep.subr.mxu0 0.0
      %400 = vmatpush2.xpose.msra.mxu0 0.0
      %401 = vmatprep.subr.mxu0 0.0
      %402 = vmatpush2.xpose.msra.mxu0 0.0
      %403 = vmatprep.subr.mxu0 0.0
      %404 = vmatpush2.xpose.msra.mxu0 0.0
      %405 = vmatprep.subr.mxu0 0.0
      %406 = vmatpush2.xpose.msra.mxu0 0.0
      %407 = vmatprep.subr.mxu0 0.0
      %408 = vmatpush2.xpose.msra.mxu0 0.0
      %409 = vmatprep.subr.mxu0 0.0
      %410 = vmatpush2.xpose.msra.mxu0 0.0
      %411 = vmatprep.subr.mxu0 0.0
      %412 = vmatpush2.xpose.msra.mxu0 0.0
      %413 = vmatprep.subr.mxu0 0.0
      %414 = vmatpush2.xpose.msra.mxu0 0.0
      %415 = vmatprep.subr.mxu0 0.0
      %416 = vmatpush2.xpose.msra.mxu0 0.0
      %417 = vmatprep.mubr.f32.mxu0 0.0
      %418 = vmatmul.mubr.f32.gmra.mxu0 %v342
      %v419 = vpop.f32.mrf.mxu0
      %v420 = vadd.f32 0.0, %v419
      %v421 = vpop.f32.mrf.mxu0
      %422 = vmatprep.mubr.f32.mxu0 0.0
      %423 = vmatmul.mubr.f32.gmra.mxu0 %v345
      %v424 = vpop.f32.mrf.mxu0
      %v425 = vadd.f32 0.0, %v424
      %v426 = vpop.f32.mrf.mxu0
      %427 = vdwg.mxu0
      %v429 = vsel %vm253, %v233, 0
      %v432 = vsel %vm253, %v234, 0
      %v435 = vsel %vm253, %v241, 0
      %v438 = vsel %vm253, %v242, 0
      %440 = vmatprep.subr.mxu0 0.0
      %441 = vmatpush1.xpose.msra.mxu0 0.0
      %442 = vmatprep.subr.mxu0 0.0
      %443 = vmatpush1.xpose.msra.mxu0 0.0
      %444 = vmatprep.subr.mxu0 0.0
      %445 = vmatpush1.xpose.msra.mxu0 0.0
      %446 = vmatprep.subr.mxu0 0.0
      %447 = vmatpush1.xpose.msra.mxu0 0.0
      %448 = vmatprep.subr.mxu0 0.0
      %449 = vmatpush1.xpose.msra.mxu0 0.0
      %450 = vmatprep.subr.mxu0 0.0
      %451 = vmatpush1.xpose.msra.mxu0 0.0
      %452 = vmatprep.subr.mxu0 0.0
      %453 = vmatpush1.xpose.msra.mxu0 0.0
      %454 = vmatprep.subr.mxu0 0.0
      %455 = vmatpush1.xpose.msra.mxu0 0.0
      %456 = vmatprep.subr.mxu0 0.0
      %457 = vmatpush1.xpose.msra.mxu0 0.0
      %458 = vmatprep.subr.mxu0 0.0
      %459 = vmatpush1.xpose.msra.mxu0 0.0
      %460 = vmatprep.subr.mxu0 0.0
      %461 = vmatpush1.xpose.msra.mxu0 0.0
      %462 = vmatprep.subr.mxu0 0.0
      %463 = vmatpush1.xpose.msra.mxu0 0.0
      %464 = vmatprep.subr.mxu0 0.0
      %465 = vmatpush1.xpose.msra.mxu0 0.0
      %466 = vmatprep.subr.mxu0 0.0
      %467 = vmatpush1.xpose.msra.mxu0 0.0
      %468 = vmatprep.subr.mxu0 0.0
      %469 = vmatpush1.xpose.msra.mxu0 %v438
      %470 = vmatprep.subr.mxu0 0.0
      %471 = vmatpush1.xpose.msra.mxu0 %v435
      %472 = vmatprep.subr.mxu0 0.0
      %473 = vmatpush2.xpose.msra.mxu0 0.0
      %474 = vmatprep.subr.mxu0 0.0
      %475 = vmatpush2.xpose.msra.mxu0 0.0
      %476 = vmatprep.subr.mxu0 0.0
      %477 = vmatpush2.xpose.msra.mxu0 0.0
      %478 = vmatprep.subr.mxu0 0.0
      %479 = vmatpush2.xpose.msra.mxu0 0.0
      %480 = vmatprep.subr.mxu0 0.0
      %481 = vmatpush2.xpose.msra.mxu0 0.0
      %482 = vmatprep.subr.mxu0 0.0
      %483 = vmatpush2.xpose.msra.mxu0 0.0
      %484 = vmatprep.subr.mxu0 0.0
      %485 = vmatpush2.xpose.msra.mxu0 0.0
      %486 = vmatprep.subr.mxu0 0.0
      %487 = vmatpush2.xpose.msra.mxu0 0.0
      %488 = vmatprep.subr.mxu0 0.0
      %489 = vmatpush2.xpose.msra.mxu0 0.0
      %490 = vmatprep.subr.mxu0 0.0
      %491 = vmatpush2.xpose.msra.mxu0 0.0
      %492 = vmatprep.subr.mxu0 0.0
      %493 = vmatpush2.xpose.msra.mxu0 0.0
      %494 = vmatprep.subr.mxu0 0.0
      %495 = vmatpush2.xpose.msra.mxu0 0.0
      %496 = vmatprep.subr.mxu0 0.0
      %497 = vmatpush2.xpose.msra.mxu0 0.0
      %498 = vmatprep.subr.mxu0 0.0
      %499 = vmatpush2.xpose.msra.mxu0 0.0
      %500 = vmatprep.subr.mxu0 0.0
      %501 = vmatpush2.xpose.msra.mxu0 0.0
      %502 = vmatprep.subr.mxu0 0.0
      %503 = vmatpush2.xpose.msra.mxu0 0.0
      %504 = vmatprep.mubr.f32.mxu0 0.0
      %505 = vmatmul.mubr.f32.gmra.mxu0 %v429
      %v506 = vpop.f32.mrf.mxu0
      %v507 = vadd.f32 0.0, %v506
      %v508 = vpop.f32.mrf.mxu0
      %509 = vmatprep.mubr.f32.mxu0 0.0
      %510 = vmatmul.mubr.f32.gmra.mxu0 %v432
      %v511 = vpop.f32.mrf.mxu0
      %v512 = vadd.f32 0.0, %v511
      %v513 = vpop.f32.mrf.mxu0
      %514 = vdwg.mxu0
      %v516 = vsel %vm253, %v235, 0
      %v519 = vsel %vm253, %v236, 0
      %v522 = vsel %vm253, %v243, 0
      %v525 = vsel %vm253, %v244, 0
      %527 = vmatprep.subr.mxu0 0.0
      %528 = vmatpush1.xpose.msra.mxu0 0.0
      %529 = vmatprep.subr.mxu0 0.0
      %530 = vmatpush1.xpose.msra.mxu0 0.0
      %531 = vmatprep.subr.mxu0 0.0
      %532 = vmatpush1.xpose.msra.mxu0 0.0
      %533 = vmatprep.subr.mxu0 0.0
      %534 = vmatpush1.xpose.msra.mxu0 0.0
      %535 = vmatprep.subr.mxu0 0.0
      %536 = vmatpush1.xpose.msra.mxu0 0.0
      %537 = vmatprep.subr.mxu0 0.0
      %538 = vmatpush1.xpose.msra.mxu0 0.0
      %539 = vmatprep.subr.mxu0 0.0
      %540 = vmatpush1.xpose.msra.mxu0 0.0
      %541 = vmatprep.subr.mxu0 0.0
      %542 = vmatpush1.xpose.msra.mxu0 0.0
      %543 = vmatprep.subr.mxu0 0.0
      %544 = vmatpush1.xpose.msra.mxu0 0.0
      %545 = vmatprep.subr.mxu0 0.0
      %546 = vmatpush1.xpose.msra.mxu0 0.0
      %547 = vmatprep.subr.mxu0 0.0
      %548 = vmatpush1.xpose.msra.mxu0 0.0
      %549 = vmatprep.subr.mxu0 0.0
      %550 = vmatpush1.xpose.msra.mxu0 0.0
      %551 = vmatprep.subr.mxu0 0.0
      %552 = vmatpush1.xpose.msra.mxu0 0.0
      %553 = vmatprep.subr.mxu0 0.0
      %554 = vmatpush1.xpose.msra.mxu0 0.0
      %555 = vmatprep.subr.mxu0 0.0
      %556 = vmatpush1.xpose.msra.mxu0 %v525
      %557 = vmatprep.subr.mxu0 0.0
      %558 = vmatpush1.xpose.msra.mxu0 %v522
      %559 = vmatprep.subr.mxu0 0.0
      %560 = vmatpush2.xpose.msra.mxu0 0.0
      %561 = vmatprep.subr.mxu0 0.0
      %562 = vmatpush2.xpose.msra.mxu0 0.0
      %563 = vmatprep.subr.mxu0 0.0
      %564 = vmatpush2.xpose.msra.mxu0 0.0
      %565 = vmatprep.subr.mxu0 0.0
      %566 = vmatpush2.xpose.msra.mxu0 0.0
      %567 = vmatprep.subr.mxu0 0.0
      %568 = vmatpush2.xpose.msra.mxu0 0.0
      %569 = vmatprep.subr.mxu0 0.0
      %570 = vmatpush2.xpose.msra.mxu0 0.0
      %571 = vmatprep.subr.mxu0 0.0
      %572 = vmatpush2.xpose.msra.mxu0 0.0
      %573 = vmatprep.subr.mxu0 0.0
      %574 = vmatpush2.xpose.msra.mxu0 0.0
      %575 = vmatprep.subr.mxu0 0.0
      %576 = vmatpush2.xpose.msra.mxu0 0.0
      %577 = vmatprep.subr.mxu0 0.0
      %578 = vmatpush2.xpose.msra.mxu0 0.0
      %579 = vmatprep.subr.mxu0 0.0
      %580 = vmatpush2.xpose.msra.mxu0 0.0
      %581 = vmatprep.subr.mxu0 0.0
      %582 = vmatpush2.xpose.msra.mxu0 0.0
      %583 = vmatprep.subr.mxu0 0.0
      %584 = vmatpush2.xpose.msra.mxu0 0.0
      %585 = vmatprep.subr.mxu0 0.0
      %586 = vmatpush2.xpose.msra.mxu0 0.0
      %587 = vmatprep.subr.mxu0 0.0
      %588 = vmatpush2.xpose.msra.mxu0 0.0
      %589 = vmatprep.subr.mxu0 0.0
      %590 = vmatpush2.xpose.msra.mxu0 0.0
      %591 = vmatprep.mubr.f32.mxu0 0.0
      %592 = vmatmul.mubr.f32.gmra.mxu0 %v516
      %v593 = vpop.f32.mrf.mxu0
      %v594 = vadd.f32 0.0, %v593
      %v595 = vpop.f32.mrf.mxu0
      %596 = vmatprep.mubr.f32.mxu0 0.0
      %597 = vmatmul.mubr.f32.gmra.mxu0 %v519
      %v598 = vpop.f32.mrf.mxu0
      %v599 = vadd.f32 0.0, %v598
      %v600 = vpop.f32.mrf.mxu0
      %601 = vdwg.mxu0
      %v602 = vmul.f32 %v333, 0.35355338
      %v603 = vmul.f32 %v338, 0.35355338
      %v604 = vmul.f32 %v420, 0.35355338
      %v605 = vmul.f32 %v425, 0.35355338
      %v606 = vmul.f32 %v507, 0.35355338
      %v607 = vmul.f32 %v512, 0.35355338
      %v608 = vmul.f32 %v594, 0.35355338
      %v609 = vmul.f32 %v599, 0.35355338
      %vm610 = vcmask 130048
      %v611 = vsel %vm610, %v602, -inf
      %612 = vmax.xlane.f32.xlu0 %v611
      %v613 = vpop.xlane.xlu0 %612
      %v614 = vsel %vm610, %v603, -inf
      %615 = vmax.xlane.f32.xlu0 %v614
      %v616 = vpop.xlane.xlu0 %615
      %v617 = vsel %vm610, %v604, -inf
      %618 = vmax.xlane.f32.xlu0 %v617
      %v619 = vpop.xlane.xlu0 %618
      %v620 = vsel %vm610, %v605, -inf
      %621 = vmax.xlane.f32.xlu0 %v620
      %v622 = vpop.xlane.xlu0 %621
      %v623 = vsel %vm610, %v606, -inf
      %624 = vmax.xlane.f32.xlu0 %v623
      %v625 = vpop.xlane.xlu0 %624
      %v626 = vsel %vm610, %v607, -inf
      %627 = vmax.xlane.f32.xlu0 %v626
      %v628 = vpop.xlane.xlu0 %627
      %v629 = vsel %vm610, %v608, -inf
      %630 = vmax.xlane.f32.xlu0 %v629
      %v631 = vpop.xlane.xlu0 %630
      %v632 = vsel %vm610, %v609, -inf
      %633 = vmax.xlane.f32.xlu0 %v632
      %v634 = vpop.xlane.xlu0 %633
      %v635 = vsub.f32 %v602, %v613
      %v636 = vsub.f32 %v603, %v616
      %v637 = vsub.f32 %v604, %v619
      %v638 = vsub.f32 %v605, %v622
      %v639 = vsub.f32 %v606, %v625
      %v640 = vsub.f32 %v607, %v628
      %v641 = vsub.f32 %v608, %v631
      %v642 = vsub.f32 %v609, %v634
      %v643 = vmul.f32 %v635, 1.442695
      %v644 = vpow.pop %v643
      %v645 = vmul.f32 %v636, 1.442695
      %v646 = vpow.pop %v645
      %v647 = vmul.f32 %v637, 1.442695
      %v648 = vpow.pop %v647
      %v649 = vmul.f32 %v638, 1.442695
      %v650 = vpow.pop %v649
      %v651 = vmul.f32 %v639, 1.442695
      %v652 = vpow.pop %v651
      %v653 = vmul.f32 %v640, 1.442695
      %v654 = vpow.pop %v653
      %v655 = vmul.f32 %v641, 1.442695
      %v656 = vpow.pop %v655
      %v657 = vmul.f32 %v642, 1.442695
      %v658 = vpow.pop %v657
      %v659 = vsel %vm610, %v644, 0.0
      %660 = vadd.xlane.f32.xlu0 %v659
      %v661 = vpop.xlane.xlu0 %660
      %v662 = vsel %vm610, %v646, 0.0
      %663 = vadd.xlane.f32.xlu0 %v662
      %v664 = vpop.xlane.xlu0 %663
      %v665 = vsel %vm610, %v648, 0.0
      %666 = vadd.xlane.f32.xlu0 %v665
      %v667 = vpop.xlane.xlu0 %666
      %v668 = vsel %vm610, %v650, 0.0
      %669 = vadd.xlane.f32.xlu0 %v668
      %v670 = vpop.xlane.xlu0 %669
      %v671 = vsel %vm610, %v652, 0.0
      %672 = vadd.xlane.f32.xlu0 %v671
      %v673 = vpop.xlane.xlu0 %672
      %v674 = vsel %vm610, %v654, 0.0
      %675 = vadd.xlane.f32.xlu0 %v674
      %v676 = vpop.xlane.xlu0 %675
      %v677 = vsel %vm610, %v656, 0.0
      %678 = vadd.xlane.f32.xlu0 %v677
      %v679 = vpop.xlane.xlu0 %678
      %v680 = vsel %vm610, %v658, 0.0
      %681 = vadd.xlane.f32.xlu0 %v680
      %v682 = vpop.xlane.xlu0 %681
      %v683 = vrcp.pop %v661
      %v684 = vrcp.pop %v664
      %v685 = vrcp.pop %v667
      %v686 = vrcp.pop %v670
      %v687 = vrcp.pop %v673
      %v688 = vrcp.pop %v676
      %v689 = vrcp.pop %v679
      %v690 = vrcp.pop %v682
      %v692 = vsel %vm610, %v644, 0
      %v695 = vsel %vm610, %v646, 0
      %697 = vmatprep.subr.mxu0 0.0
      %698 = vmatpush1.msra.mxu0 0.0
      %699 = vmatprep.subr.mxu0 0.0
      %700 = vmatpush1.msra.mxu0 0.0
      %701 = vmatprep.subr.mxu0 0.0
      %702 = vmatpush1.msra.mxu0 0.0
      %703 = vmatprep.subr.mxu0 0.0
      %704 = vmatpush1.msra.mxu0 0.0
      %705 = vmatprep.subr.mxu0 0.0
      %706 = vmatpush1.msra.mxu0 0.0
      %707 = vmatprep.subr.mxu0 0.0
      %708 = vmatpush1.msra.mxu0 0.0
      %709 = vmatprep.subr.mxu0 0.0
      %710 = vmatpush1.msra.mxu0 0.0
      %711 = vmatprep.subr.mxu0 0.0
      %712 = vmatpush1.msra.mxu0 0.0
      %713 = vmatprep.subr.mxu0 0.0
      %714 = vmatpush1.msra.mxu0 0.0
      %715 = vmatprep.subr.mxu0 0.0
      %716 = vmatpush1.msra.mxu0 0.0
      %717 = vmatprep.subr.mxu0 0.0
      %718 = vmatpush1.msra.mxu0 0.0
      %719 = vmatprep.subr.mxu0 0.0
      %720 = vmatpush1.msra.mxu0 0.0
      %721 = vmatprep.subr.mxu0 0.0
      %722 = vmatpush1.msra.mxu0 0.0
      %723 = vmatprep.subr.mxu0 0.0
      %724 = vmatpush1.msra.mxu0 0.0
      %725 = vmatprep.subr.mxu0 0.0
      %726 = vmatpush1.msra.mxu0 %v246
      %727 = vmatprep.subr.mxu0 0.0
      %728 = vmatpush1.msra.mxu0 %v245
      %729 = vmatprep.subr.mxu0 0.0
      %730 = vmatpush2.msra.mxu0 0.0
      %731 = vmatprep.subr.mxu0 0.0
      %732 = vmatpush2.msra.mxu0 0.0
      %733 = vmatprep.subr.mxu0 0.0
      %734 = vmatpush2.msra.mxu0 0.0
      %735 = vmatprep.subr.mxu0 0.0
      %736 = vmatpush2.msra.mxu0 0.0
      %737 = vmatprep.subr.mxu0 0.0
      %738 = vmatpush2.msra.mxu0 0.0
      %739 = vmatprep.subr.mxu0 0.0
      %740 = vmatpush2.msra.mxu0 0.0
      %741 = vmatprep.subr.mxu0 0.0
      %742 = vmatpush2.msra.mxu0 0.0
      %743 = vmatprep.subr.mxu0 0.0
      %744 = vmatpush2.msra.mxu0 0.0
      %745 = vmatprep.subr.mxu0 0.0
      %746 = vmatpush2.msra.mxu0 0.0
      %747 = vmatprep.subr.mxu0 0.0
      %748 = vmatpush2.msra.mxu0 0.0
      %749 = vmatprep.subr.mxu0 0.0
      %750 = vmatpush2.msra.mxu0 0.0
      %751 = vmatprep.subr.mxu0 0.0
      %752 = vmatpush2.msra.mxu0 0.0
      %753 = vmatprep.subr.mxu0 0.0
      %754 = vmatpush2.msra.mxu0 0.0
      %755 = vmatprep.subr.mxu0 0.0
      %756 = vmatpush2.msra.mxu0 0.0
      %757 = vmatprep.subr.mxu0 0.0
      %758 = vmatpush2.msra.mxu0 0.0
      %759 = vmatprep.subr.mxu0 0.0
      %760 = vmatpush2.msra.mxu0 0.0
      %761 = vmatprep.mubr.f32.mxu0 0.0
      %762 = vmatmul.mubr.f32.gmra.mxu0 %v692
      %v763 = vpop.f32.mrf.mxu0
      %v764 = vadd.f32 0.0, %v763
      %v765 = vpop.f32.mrf.mxu0
      %766 = vmatprep.mubr.f32.mxu0 0.0
      %767 = vmatmul.mubr.f32.gmra.mxu0 %v695
      %v768 = vpop.f32.mrf.mxu0
      %v769 = vadd.f32 0.0, %v768
      %v770 = vpop.f32.mrf.mxu0
      %771 = vdwg.mxu0
      %v773 = vsel %vm610, %v648, 0
      %v776 = vsel %vm610, %v650, 0
      %778 = vmatprep.subr.mxu0 0.0
      %779 = vmatpush1.msra.mxu0 0.0
      %780 = vmatprep.subr.mxu0 0.0
      %781 = vmatpush1.msra.mxu0 0.0
      %782 = vmatprep.subr.mxu0 0.0
      %783 = vmatpush1.msra.mxu0 0.0
      %784 = vmatprep.subr.mxu0 0.0
      %785 = vmatpush1.msra.mxu0 0.0
      %786 = vmatprep.subr.mxu0 0.0
      %787 = vmatpush1.msra.mxu0 0.0
      %788 = vmatprep.subr.mxu0 0.0
      %789 = vmatpush1.msra.mxu0 0.0
      %790 = vmatprep.subr.mxu0 0.0
      %791 = vmatpush1.msra.mxu0 0.0
      %792 = vmatprep.subr.mxu0 0.0
      %793 = vmatpush1.msra.mxu0 0.0
      %794 = vmatprep.subr.mxu0 0.0
      %795 = vmatpush1.msra.mxu0 0.0
      %796 = vmatprep.subr.mxu0 0.0
      %797 = vmatpush1.msra.mxu0 0.0
      %798 = vmatprep.subr.mxu0 0.0
      %799 = vmatpush1.msra.mxu0 0.0
      %800 = vmatprep.subr.mxu0 0.0
      %801 = vmatpush1.msra.mxu0 0.0
      %802 = vmatprep.subr.mxu0 0.0
      %803 = vmatpush1.msra.mxu0 0.0
      %804 = vmatprep.subr.mxu0 0.0
      %805 = vmatpush1.msra.mxu0 0.0
      %806 = vmatprep.subr.mxu0 0.0
      %807 = vmatpush1.msra.mxu0 %v248
      %808 = vmatprep.subr.mxu0 0.0
      %809 = vmatpush1.msra.mxu0 %v247
      %810 = vmatprep.subr.mxu0 0.0
      %811 = vmatpush2.msra.mxu0 0.0
      %812 = vmatprep.subr.mxu0 0.0
      %813 = vmatpush2.msra.mxu0 0.0
      %814 = vmatprep.subr.mxu0 0.0
      %815 = vmatpush2.msra.mxu0 0.0
      %816 = vmatprep.subr.mxu0 0.0
      %817 = vmatpush2.msra.mxu0 0.0
      %818 = vmatprep.subr.mxu0 0.0
      %819 = vmatpush2.msra.mxu0 0.0
      %820 = vmatprep.subr.mxu0 0.0
      %821 = vmatpush2.msra.mxu0 0.0
      %822 = vmatprep.subr.mxu0 0.0
      %823 = vmatpush2.msra.mxu0 0.0
      %824 = vmatprep.subr.mxu0 0.0
      %825 = vmatpush2.msra.mxu0 0.0
      %826 = vmatprep.subr.mxu0 0.0
      %827 = vmatpush2.msra.mxu0 0.0
      %828 = vmatprep.subr.mxu0 0.0
      %829 = vmatpush2.msra.mxu0 0.0
      %830 = vmatprep.subr.mxu0 0.0
      %831 = vmatpush2.msra.mxu0 0.0
      %832 = vmatprep.subr.mxu0 0.0
      %833 = vmatpush2.msra.mxu0 0.0
      %834 = vmatprep.subr.mxu0 0.0
      %835 = vmatpush2.msra.mxu0 0.0
      %836 = vmatprep.subr.mxu0 0.0
      %837 = vmatpush2.msra.mxu0 0.0
      %838 = vmatprep.subr.mxu0 0.0
      %839 = vmatpush2.msra.mxu0 0.0
      %840 = vmatprep.subr.mxu0 0.0
      %841 = vmatpush2.msra.mxu0 0.0
      %842 = vmatprep.mubr.f32.mxu0 0.0
      %843 = vmatmul.mubr.f32.gmra.mxu0 %v773
      %v844 = vpop.f32.mrf.mxu0
      %v845 = vadd.f32 0.0, %v844
      %v846 = vpop.f32.mrf.mxu0
      %847 = vmatprep.mubr.f32.mxu0 0.0
      %848 = vmatmul.mubr.f32.gmra.mxu0 %v776
      %v849 = vpop.f32.mrf.mxu0
      %v850 = vadd.f32 0.0, %v849
      %v851 = vpop.f32.mrf.mxu0
      %852 = vdwg.mxu0
      %v854 = vsel %vm610, %v652, 0
      %v857 = vsel %vm610, %v654, 0
      %859 = vmatprep.subr.mxu0 0.0
      %860 = vmatpush1.msra.mxu0 0.0
      %861 = vmatprep.subr.mxu0 0.0
      %862 = vmatpush1.msra.mxu0 0.0
      %863 = vmatprep.subr.mxu0 0.0
      %864 = vmatpush1.msra.mxu0 0.0
      %865 = vmatprep.subr.mxu0 0.0
      %866 = vmatpush1.msra.mxu0 0.0
      %867 = vmatprep.subr.mxu0 0.0
      %868 = vmatpush1.msra.mxu0 0.0
      %869 = vmatprep.subr.mxu0 0.0
      %870 = vmatpush1.msra.mxu0 0.0
      %871 = vmatprep.subr.mxu0 0.0
      %872 = vmatpush1.msra.mxu0 0.0
      %873 = vmatprep.subr.mxu0 0.0
      %874 = vmatpush1.msra.mxu0 0.0
      %875 = vmatprep.subr.mxu0 0.0
      %876 = vmatpush1.msra.mxu0 0.0
      %877 = vmatprep.subr.mxu0 0.0
      %878 = vmatpush1.msra.mxu0 0.0
      %879 = vmatprep.subr.mxu0 0.0
      %880 = vmatpush1.msra.mxu0 0.0
      %881 = vmatprep.subr.mxu0 0.0
      %882 = vmatpush1.msra.mxu0 0.0
      %883 = vmatprep.subr.mxu0 0.0
      %884 = vmatpush1.msra.mxu0 0.0
      %885 = vmatprep.subr.mxu0 0.0
      %886 = vmatpush1.msra.mxu0 0.0
      %887 = vmatprep.subr.mxu0 0.0
      %888 = vmatpush1.msra.mxu0 %v250
      %889 = vmatprep.subr.mxu0 0.0
      %890 = vmatpush1.msra.mxu0 %v249
      %891 = vmatprep.subr.mxu0 0.0
      %892 = vmatpush2.msra.mxu0 0.0
      %893 = vmatprep.subr.mxu0 0.0
      %894 = vmatpush2.msra.mxu0 0.0
      %895 = vmatprep.subr.mxu0 0.0
      %896 = vmatpush2.msra.mxu0 0.0
      %897 = vmatprep.subr.mxu0 0.0
      %898 = vmatpush2.msra.mxu0 0.0
      %899 = vmatprep.subr.mxu0 0.0
      %900 = vmatpush2.msra.mxu0 0.0
      %901 = vmatprep.subr.mxu0 0.0
      %902 = vmatpush2.msra.mxu0 0.0
      %903 = vmatprep.subr.mxu0 0.0
      %904 = vmatpush2.msra.mxu0 0.0
      %905 = vmatprep.subr.mxu0 0.0
      %906 = vmatpush2.msra.mxu0 0.0
      %907 = vmatprep.subr.mxu0 0.0
      %908 = vmatpush2.msra.mxu0 0.0
      %909 = vmatprep.subr.mxu0 0.0
      %910 = vmatpush2.msra.mxu0 0.0
      %911 = vmatprep.subr.mxu0 0.0
      %912 = vmatpush2.msra.mxu0 0.0
      %913 = vmatprep.subr.mxu0 0.0
      %914 = vmatpush2.msra.mxu0 0.0
      %915 = vmatprep.subr.mxu0 0.0
      %916 = vmatpush2.msra.mxu0 0.0
      %917 = vmatprep.subr.mxu0 0.0
      %918 = vmatpush2.msra.mxu0 0.0
      %919 = vmatprep.subr.mxu0 0.0
      %920 = vmatpush2.msra.mxu0 0.0
      %921 = vmatprep.subr.mxu0 0.0
      %922 = vmatpush2.msra.mxu0 0.0
      %923 = vmatprep.mubr.f32.mxu0 0.0
      %924 = vmatmul.mubr.f32.gmra.mxu0 %v854
      %v925 = vpop.f32.mrf.mxu0
      %v926 = vadd.f32 0.0, %v925
      %v927 = vpop.f32.mrf.mxu0
      %928 = vmatprep.mubr.f32.mxu0 0.0
      %929 = vmatmul.mubr.f32.gmra.mxu0 %v857
      %v930 = vpop.f32.mrf.mxu0
      %v931 = vadd.f32 0.0, %v930
      %v932 = vpop.f32.mrf.mxu0
      %933 = vdwg.mxu0
      %v935 = vsel %vm610, %v656, 0
      %v938 = vsel %vm610, %v658, 0
      %940 = vmatprep.subr.mxu0 0.0
      %941 = vmatpush1.msra.mxu0 0.0
      %942 = vmatprep.subr.mxu0 0.0
      %943 = vmatpush1.msra.mxu0 0.0
      %944 = vmatprep.subr.mxu0 0.0
      %945 = vmatpush1.msra.mxu0 0.0
      %946 = vmatprep.subr.mxu0 0.0
      %947 = vmatpush1.msra.mxu0 0.0
      %948 = vmatprep.subr.mxu0 0.0
      %949 = vmatpush1.msra.mxu0 0.0
      %950 = vmatprep.subr.mxu0 0.0
      %951 = vmatpush1.msra.mxu0 0.0
      %952 = vmatprep.subr.mxu0 0.0
      %953 = vmatpush1.msra.mxu0 0.0
      %954 = vmatprep.subr.mxu0 0.0
      %955 = vmatpush1.msra.mxu0 0.0
      %956 = vmatprep.subr.mxu0 0.0
      %957 = vmatpush1.msra.mxu0 0.0
      %958 = vmatprep.subr.mxu0 0.0
      %959 = vmatpush1.msra.mxu0 0.0
      %960 = vmatprep.subr.mxu0 0.0
      %961 = vmatpush1.msra.mxu0 0.0
      %962 = vmatprep.subr.mxu0 0.0
      %963 = vmatpush1.msra.mxu0 0.0
      %964 = vmatprep.subr.mxu0 0.0
      %965 = vmatpush1.msra.mxu0 0.0
      %966 = vmatprep.subr.mxu0 0.0
      %967 = vmatpush1.msra.mxu0 0.0
      %968 = vmatprep.subr.mxu0 0.0
      %969 = vmatpush1.msra.mxu0 %v252
      %970 = vmatprep.subr.mxu0 0.0
      %971 = vmatpush1.msra.mxu0 %v251
      %972 = vmatprep.subr.mxu0 0.0
      %973 = vmatpush2.msra.mxu0 0.0
      %974 = vmatprep.subr.mxu0 0.0
      %975 = vmatpush2.msra.mxu0 0.0
      %976 = vmatprep.subr.mxu0 0.0
      %977 = vmatpush2.msra.mxu0 0.0
      %978 = vmatprep.subr.mxu0 0.0
      %979 = vmatpush2.msra.mxu0 0.0
      %980 = vmatprep.subr.mxu0 0.0
      %981 = vmatpush2.msra.mxu0 0.0
      %982 = vmatprep.subr.mxu0 0.0
      %983 = vmatpush2.msra.mxu0 0.0
      %984 = vmatprep.subr.mxu0 0.0
      %985 = vmatpush2.msra.mxu0 0.0
      %986 = vmatprep.subr.mxu0 0.0
      %987 = vmatpush2.msra.mxu0 0.0
      %988 = vmatprep.subr.mxu0 0.0
      %989 = vmatpush2.msra.mxu0 0.0
      %990 = vmatprep.subr.mxu0 0.0
      %991 = vmatpush2.msra.mxu0 0.0
      %992 = vmatprep.subr.mxu0 0.0
      %993 = vmatpush2.msra.mxu0 0.0
      %994 = vmatprep.subr.mxu0 0.0
      %995 = vmatpush2.msra.mxu0 0.0
      %996 = vmatprep.subr.mxu0 0.0
      %997 = vmatpush2.msra.mxu0 0.0
      %998 = vmatprep.subr.mxu0 0.0
      %999 = vmatpush2.msra.mxu0 0.0
      %1000 = vmatprep.subr.mxu0 0.0
      %1001 = vmatpush2.msra.mxu0 0.0
      %1002 = vmatprep.subr.mxu0 0.0
      %1003 = vmatpush2.msra.mxu0 0.0
      %1004 = vmatprep.mubr.f32.mxu0 0.0
      %1005 = vmatmul.mubr.f32.gmra.mxu0 %v935
      %v1006 = vpop.f32.mrf.mxu0
      %v1007 = vadd.f32 0.0, %v1006
      %v1008 = vpop.f32.mrf.mxu0
      %1009 = vmatprep.mubr.f32.mxu0 0.0
      %1010 = vmatmul.mubr.f32.gmra.mxu0 %v938
      %v1011 = vpop.f32.mrf.mxu0
      %v1012 = vadd.f32 0.0, %v1011
      %v1013 = vpop.f32.mrf.mxu0
      %1014 = vdwg.mxu0
      %v1015 = vmul.f32 %v764, %v683
      %v1016 = vmul.f32 %v769, %v684
      %v1017 = vmul.f32 %v845, %v685
      %v1018 = vmul.f32 %v850, %v686
      %v1019 = vmul.f32 %v926, %v687
      %v1020 = vmul.f32 %v931, %v688
      %v1021 = vmul.f32 %v1007, %v689
      %v1022 = vmul.f32 %v1012, %v690
      %1023 = vst.msk [vmem:[%s227] sm:$0xff] %vm253, %v1015
      %1024 = vst.msk [vmem:[%s227 + $0x8] sm:$0xff] %vm253, %v1016
      %1025 = vst.msk [vmem:[%s227 + $0x10] sm:$0xff] %vm253, %v1017
      %1026 = vst.msk [vmem:[%s227 + $0x18] sm:$0xff] %vm253, %v1018
      %1027 = vst.msk [vmem:[%s227 + $0x20] sm:$0xff] %vm253, %v1019
      %1028 = vst.msk [vmem:[%s227 + $0x28] sm:$0xff] %vm253, %v1020
      %1029 = vst.msk [vmem:[%s227 + $0x30] sm:$0xff] %vm253, %v1021
      %1030 = vst.msk [vmem:[%s227 + $0x38] sm:$0xff] %vm253, %v1022
      %s1031 = smul.u32 4, %s14
      %p1032 = scmp.lt.s32.totalorder %s1031, 7
      %s1033 = scalar_select %p1032, %s1031, 7
      %s1034 = smul.addr %s1033, 2
      %s1035 = smul.addr %s1034, 8
      %s1036 = scalar_lea.vmem %s3, %s1035
      // Predicated region
      $region33: #{cross_attention_gcn_forward.36} parent=31 // pred_check
        %p1037 = pneg %p110
      $region34: #{cross_attention_gcn_forward.36} parent=31 // pred_check_branch
        %1039 = sbr.rel (%p1037) target = $region36
      $region35: #{cross_attention_gcn_forward.36} parent=31 // pred_region
        %s1040 = smul.u32 4, %s14
      $region36: #{cross_attention_gcn_forward.36} parent=31 // pred_fallthru
        _
    $region32: #{cross_attention_gcn_forward.36} parent=5 // pred_fallthru
      _
    %p1041 = scmp.le.s32.totalorder 2, %s9
    // Predicated region
    $region37: #{cross_attention_gcn_forward.36} parent=5 // pred_check
      %p1042 = pneg %p1041
    $region38: #{cross_attention_gcn_forward.36} parent=5 // pred_check_branch
      %1044 = sbr.rel (%p1042) target = $region40
    $region39: #{cross_attention_gcn_forward.36} parent=5 // pred_region
      %s1045 = ssub.s32 %s9, 2
      // Predicated region
      $region41: #{cross_attention_gcn_forward.36} parent=39 // pred_check
        %p1046 = pneg %p116
      $region42: #{cross_attention_gcn_forward.36} parent=39 // pred_check_branch
        %1048 = sbr.rel (%p1046) target = $region44
      $region43: #{cross_attention_gcn_forward.36} parent=39 // pred_region
        %s1049 = smul.u32 4, %s15
        %p1050 = scmp.lt.s32.totalorder %s1049, 7
        %s1051 = scalar_select %p1050, %s1049, 7
        %s1052 = smul.addr %s1051, 2
        %s1053 = smul.addr %s1052, 8
        %s1054 = scalar_lea.vmem %s3, %s1053
      $region44: #{cross_attention_gcn_forward.36} parent=39 // pred_fallthru
        _
    $region40: #{cross_attention_gcn_forward.36} parent=5 // pred_fallthru
      _
  $region6: #{cross_attention_gcn_forward.36} parent=0 // loop_footer
    %s13 = sadd.s32 1, %s9
  $region7: #{cross_attention_gcn_forward.36} parent=0 // loop_footer_branch
    %8 = sbr.rel target = $region3
  $region8: #{cross_attention_gcn_forward.36} parent=0 // loop_exit
    _

// kernel: cross_attention_gcn_forward.39
$region0: #{cross_attention_gcn_forward.39}
  #allocation0 [shape = 'u32[]', space=smem, size = 0x4, offset = 0x4, fixed_abs, tag = 'smem constant byte address 0x4 - core index']
  #allocation1 [shape = 'u32[144,128]{1,0:T(1,128)}', space=vmem, size = 0x12000, scoped, tag = 'internal scratch']
  %s0 = inlined_call_operand.vmem [shape: f32[16,32], index: 0, kind: input, shape index: {}]
  %s1 = inlined_call_operand.vmem [shape: f32[1,32], index: 1, kind: input, shape index: {}]
  %s2 = inlined_call_operand.vmem [shape: f32[1,32], index: 2, kind: input, shape index: {}]
  %s3 = inlined_call_operand.vmem [shape: f32[32,128], index: 3, kind: input, shape index: {}]
  %s4 = inlined_call_operand.vmem [shape: f32[1,128], index: 4, kind: input, shape index: {}]
  %s5 = inlined_call_operand.vmem [shape: f32[128,32], index: 5, kind: input, shape index: {}]
  %s6 = inlined_call_operand.vmem [shape: f32[1,32], index: 6, kind: input, shape index: {}]
  %s7 = inlined_call_operand.vmem [shape: f32[16,32], index: 7, kind: output, shape index: {}]
  %s8 = sld [smem:[#allocation0]]
  $region61: #{cross_attention_gcn_forward.39} parent=0
    _
  %s10 = ssub.s32 1, %s8
  %s11 = scalar_select 0, %s10, %s8
  loop: start=0, step=1, limit=4
  $region2: #{cross_attention_gcn_forward.39} parent=0 // loop_pre_header
    _
  $region3: #{cross_attention_gcn_forward.39} parent=0 // loop_header
    %s13 = sphi 0, %s17
    %p14 = scmp.ge.s32.totalorder %s13, 4
    %s23 = sphi 0, %s25
    %s26 = sphi 0, %s23
    %s27 = sphi 0, %s26
    %s43 = sphi 0, %s27
    %s47 = sphi 0, %s47
    %s49 = sphi 0, %s47
    %s50 = sphi 0, %s49
    %s64 = sphi 0, %s50
    %s68 = sphi 0, %s68
    %s70 = sphi 0, %s68
    %s71 = sphi 0, %s70
    %s85 = sphi 0, %s71
    %s89 = sphi 0, %s89
    %s91 = sphi 0, %s89
    %s92 = sphi 0, %s91
    %s106 = sphi 0, %s92
    %s110 = sphi 0, %s110
    %s112 = sphi 0, %s110
    %s113 = sphi 0, %s112
    %s127 = sphi 0, %s113
    %s131 = sphi 0, %s131
    %s133 = sphi 0, %s131
    %s134 = sphi 0, %s133
    %s148 = sphi 0, %s134
    %s152 = sphi 0, %s152
    %s154 = sphi 0, %s152
    %s155 = sphi 0, %s154
    %s169 = sphi 0, %s155
    %s175 = sphi 0, %s177
    %s178 = sphi 0, %s175
    %s179 = sphi 0, %s178
    %s195 = sphi 0, %s179
  $region4: #{cross_attention_gcn_forward.39} parent=0 // loop_header_branch
    %16 = sbr.rel (%p14) target = $region8
  $region5: #{cross_attention_gcn_forward.39} parent=0 // loop_body
    %s18 = ssub.s32 %s13, 1
    %s19 = ssub.s32 %s13, 2
    %s20 = sadd.s32 %s13, 1
    %s21 = ssub.s32 %s13, %s20
    %p22 = scmp.eq.s32.totalorder %s21, 0
    %s24 = sadd.s32 %s23, 1
    %s25 = scalar_select %p22, %s23, %s24
    %p28 = pneg %p22
    %p29 = scmp.eq.s32.totalorder %s13, 1
    %p30 = por %p28, %p29
    %p31 = scmp.ne.s32.totalorder %s23, %s26
    %p32 = scmp.eq.s32.totalorder %s13, 0
    %p33 = por %p31, %p32
    %p34 = scmp.ne.s32.totalorder %s23, %s26
    %p35 = scmp.eq.s32.totalorder %s18, 1
    %p36 = por %p34, %p35
    %p37 = scmp.ne.s32.totalorder %s26, %s27
    %p38 = scmp.eq.s32.totalorder %s18, 0
    %p39 = por %p37, %p38
    %p40 = scmp.ne.s32.totalorder %s26, %s27
    %p41 = scmp.eq.s32.totalorder %s19, 1
    %p42 = por %p40, %p41
    %p44 = scmp.ne.s32.totalorder %s27, %s43
    %p45 = scmp.eq.s32.totalorder %s19, 0
    %p46 = por %p44, %p45
    %s48 = sadd.s32 %s47, 1
    %p51 = scmp.eq.s32.totalorder %s13, 1
    %p52 = scmp.ne.s32.totalorder %s47, %s49
    %p53 = scmp.eq.s32.totalorder %s13, 0
    %p54 = por %p52, %p53
    %p55 = scmp.ne.s32.totalorder %s47, %s49
    %p56 = scmp.eq.s32.totalorder %s18, 1
    %p57 = por %p55, %p56
    %p58 = scmp.ne.s32.totalorder %s49, %s50
    %p59 = scmp.eq.s32.totalorder %s18, 0
    %p60 = por %p58, %p59
    %p61 = scmp.ne.s32.totalorder %s49, %s50
    %p62 = scmp.eq.s32.totalorder %s19, 1
    %p63 = por %p61, %p62
    %p65 = scmp.ne.s32.totalorder %s50, %s64
    %p66 = scmp.eq.s32.totalorder %s19, 0
    %p67 = por %p65, %p66
    %s69 = sadd.s32 %s68, 1
    %p72 = scmp.eq.s32.totalorder %s13, 1
    %p73 = scmp.ne.s32.totalorder %s68, %s70
    %p74 = scmp.eq.s32.totalorder %s13, 0
    %p75 = por %p73, %p74
    %p76 = scmp.ne.s32.totalorder %s68, %s70
    %p77 = scmp.eq.s32.totalorder %s18, 1
    %p78 = por %p76, %p77
    %p79 = scmp.ne.s32.totalorder %s70, %s71
    %p80 = scmp.eq.s32.totalorder %s18, 0
    %p81 = por %p79, %p80
    %p82 = scmp.ne.s32.totalorder %s70, %s71
    %p83 = scmp.eq.s32.totalorder %s19, 1
    %p84 = por %p82, %p83
    %p86 = scmp.ne.s32.totalorder %s71, %s85
    %p87 = scmp.eq.s32.totalorder %s19, 0
    %p88 = por %p86, %p87
    %s90 = sadd.s32 %s89, 1
    %p93 = scmp.eq.s32.totalorder %s13, 1
    %p94 = scmp.ne.s32.totalorder %s89, %s91
    %p95 = scmp.eq.s32.totalorder %s13, 0
    %p96 = por %p94, %p95
    %p97 = scmp.ne.s32.totalorder %s89, %s91
    %p98 = scmp.eq.s32.totalorder %s18, 1
    %p99 = por %p97, %p98
    %p100 = scmp.ne.s32.totalorder %s91, %s92
    %p101 = scmp.eq.s32.totalorder %s18, 0
    %p102 = por %p100, %p101
    %p103 = scmp.ne.s32.totalorder %s91, %s92
    %p104 = scmp.eq.s32.totalorder %s19, 1
    %p105 = por %p103, %p104
    %p107 = scmp.ne.s32.totalorder %s92, %s106
    %p108 = scmp.eq.s32.totalorder %s19, 0
    %p109 = por %p107, %p108
    %s111 = sadd.s32 %s110, 1
    %p114 = scmp.eq.s32.totalorder %s13, 1
    %p115 = scmp.ne.s32.totalorder %s110, %s112
    %p116 = scmp.eq.s32.totalorder %s13, 0
    %p117 = por %p115, %p116
    %p118 = scmp.ne.s32.totalorder %s110, %s112
    %p119 = scmp.eq.s32.totalorder %s18, 1
    %p120 = por %p118, %p119
    %p121 = scmp.ne.s32.totalorder %s112, %s113
    %p122 = scmp.eq.s32.totalorder %s18, 0
    %p123 = por %p121, %p122
    %p124 = scmp.ne.s32.totalorder %s112, %s113
    %p125 = scmp.eq.s32.totalorder %s19, 1
    %p126 = por %p124, %p125
    %p128 = scmp.ne.s32.totalorder %s113, %s127
    %p129 = scmp.eq.s32.totalorder %s19, 0
    %p130 = por %p128, %p129
    %s132 = sadd.s32 %s131, 1
    %p135 = scmp.eq.s32.totalorder %s13, 1
    %p136 = scmp.ne.s32.totalorder %s131, %s133
    %p137 = scmp.eq.s32.totalorder %s13, 0
    %p138 = por %p136, %p137
    %p139 = scmp.ne.s32.totalorder %s131, %s133
    %p140 = scmp.eq.s32.totalorder %s18, 1
    %p141 = por %p139, %p140
    %p142 = scmp.ne.s32.totalorder %s133, %s134
    %p143 = scmp.eq.s32.totalorder %s18, 0
    %p144 = por %p142, %p143
    %p145 = scmp.ne.s32.totalorder %s133, %s134
    %p146 = scmp.eq.s32.totalorder %s19, 1
    %p147 = por %p145, %p146
    %p149 = scmp.ne.s32.totalorder %s134, %s148
    %p150 = scmp.eq.s32.totalorder %s19, 0
    %p151 = por %p149, %p150
    %s153 = sadd.s32 %s152, 1
    %p156 = scmp.eq.s32.totalorder %s13, 1
    %p157 = scmp.ne.s32.totalorder %s152, %s154
    %p158 = scmp.eq.s32.totalorder %s13, 0
    %p159 = por %p157, %p158
    %p160 = scmp.ne.s32.totalorder %s152, %s154
    %p161 = scmp.eq.s32.totalorder %s18, 1
    %p162 = por %p160, %p161
    %p163 = scmp.ne.s32.totalorder %s154, %s155
    %p164 = scmp.eq.s32.totalorder %s18, 0
    %p165 = por %p163, %p164
    %p166 = scmp.ne.s32.totalorder %s154, %s155
    %p167 = scmp.eq.s32.totalorder %s19, 1
    %p168 = por %p166, %p167
    %p170 = scmp.ne.s32.totalorder %s155, %s169
    %p171 = scmp.eq.s32.totalorder %s19, 0
    %p172 = por %p170, %p171
    %s173 = ssub.s32 %s13, %s20
    %p174 = scmp.eq.s32.totalorder %s173, 0
    %s176 = sadd.s32 %s175, 1
    %s177 = scalar_select %p174, %s175, %s176
    %p180 = pneg %p174
    %p181 = scmp.eq.s32.totalorder %s13, 1
    %p182 = por %p180, %p181
    %p183 = scmp.ne.s32.totalorder %s175, %s178
    %p184 = scmp.eq.s32.totalorder %s13, 0
    %p185 = por %p183, %p184
    %p186 = scmp.ne.s32.totalorder %s175, %s178
    %p187 = scmp.eq.s32.totalorder %s18, 1
    %p188 = por %p186, %p187
    %p189 = scmp.ne.s32.totalorder %s178, %s179
    %p190 = scmp.eq.s32.totalorder %s18, 0
    %p191 = por %p189, %p190
    %p192 = scmp.ne.s32.totalorder %s178, %s179
    %p193 = scmp.eq.s32.totalorder %s19, 1
    %p194 = por %p192, %p193
    %p196 = scmp.ne.s32.totalorder %s179, %s195
    %p197 = scmp.eq.s32.totalorder %s19, 0
    %p198 = por %p196, %p197
    %p199 = scmp.le.s32.totalorder 1, %s13
    %p200 = scmp.lt.s32.totalorder %s13, 3
    %p201 = pnand %p199, %p200
    %p202 = pneg %p201
    // Predicated region
    $region9: #{cross_attention_gcn_forward.39} parent=5 // pred_check
      _
    $region10: #{cross_attention_gcn_forward.39} parent=5 // pred_check_branch
      %204 = sbr.rel (%p201) target = $region12
    $region11: #{cross_attention_gcn_forward.39} parent=5 // pred_region
      %s205 = ssub.s32 %s13, 1
      // Predicated region
      $region13: #{cross_attention_gcn_forward.39} parent=11 // pred_check
        %p206 = pneg %p60
      $region14: #{cross_attention_gcn_forward.39} parent=11 // pred_check_branch
        %208 = sbr.rel (%p206) target = $region16
      $region15: #{cross_attention_gcn_forward.39} parent=11 // pred_region
        _
      $region16: #{cross_attention_gcn_forward.39} parent=11 // pred_fallthru
        _
      // Predicated region
      $region17: #{cross_attention_gcn_forward.39} parent=11 // pred_check
        %p209 = pneg %p81
      $region18: #{cross_attention_gcn_forward.39} parent=11 // pred_check_branch
        %211 = sbr.rel (%p209) target = $region20
      $region19: #{cross_attention_gcn_forward.39} parent=11 // pred_region
        _
      $region20: #{cross_attention_gcn_forward.39} parent=11 // pred_fallthru
        _
      // Predicated region
      $region21: #{cross_attention_gcn_forward.39} parent=11 // pred_check
        %p212 = pneg %p102
      $region22: #{cross_attention_gcn_forward.39} parent=11 // pred_check_branch
        %214 = sbr.rel (%p212) target = $region24
      $region23: #{cross_attention_gcn_forward.39} parent=11 // pred_region
        _
      $region24: #{cross_attention_gcn_forward.39} parent=11 // pred_fallthru
        _
      // Predicated region
      $region25: #{cross_attention_gcn_forward.39} parent=11 // pred_check
        %p215 = pneg %p123
      $region26: #{cross_attention_gcn_forward.39} parent=11 // pred_check_branch
        %217 = sbr.rel (%p215) target = $region28
      $region27: #{cross_attention_gcn_forward.39} parent=11 // pred_region
        _
      $region28: #{cross_attention_gcn_forward.39} parent=11 // pred_fallthru
        _
      // Predicated region
      $region29: #{cross_attention_gcn_forward.39} parent=11 // pred_check
        %p218 = pneg %p144
      $region30: #{cross_attention_gcn_forward.39} parent=11 // pred_check_branch
        %220 = sbr.rel (%p218) target = $region32
      $region31: #{cross_attention_gcn_forward.39} parent=11 // pred_region
        _
      $region32: #{cross_attention_gcn_forward.39} parent=11 // pred_fallthru
        _
      // Predicated region
      $region33: #{cross_attention_gcn_forward.39} parent=11 // pred_check
        %p221 = pneg %p165
      $region34: #{cross_attention_gcn_forward.39} parent=11 // pred_check_branch
        %223 = sbr.rel (%p221) target = $region36
      $region35: #{cross_attention_gcn_forward.39} parent=11 // pred_region
        _
      $region36: #{cross_attention_gcn_forward.39} parent=11 // pred_fallthru
        _
    $region12: #{cross_attention_gcn_forward.39} parent=5 // pred_fallthru
      _
    %p224 = scmp.lt.s32.totalorder %s13, 2
    // Predicated region
    $region37: #{cross_attention_gcn_forward.39} parent=5 // pred_check
      %p225 = pneg %p224
    $region38: #{cross_attention_gcn_forward.39} parent=5 // pred_check_branch
      %227 = sbr.rel (%p225) target = $region40
    $region39: #{cross_attention_gcn_forward.39} parent=5 // pred_region
      // Predicated region
      $region41: #{cross_attention_gcn_forward.39} parent=39 // pred_check
        %p228 = pneg %p33
      $region42: #{cross_attention_gcn_forward.39} parent=39 // pred_check_branch
        %230 = sbr.rel (%p228) target = $region44
      $region43: #{cross_attention_gcn_forward.39} parent=39 // pred_region
        %p231 = scmp.lt.s32.totalorder %s13, 1
        %s232 = scalar_select %p231, %s13, 1
        %s233 = smul.addr %s232, 8
        %s234 = scalar_lea.vmem %s0, %s233
      $region44: #{cross_attention_gcn_forward.39} parent=39 // pred_fallthru
        _
    $region40: #{cross_attention_gcn_forward.39} parent=5 // pred_fallthru
      _
    %p235 = scmp.le.s32.totalorder 1, %s13
    %p236 = scmp.lt.s32.totalorder %s13, 3
    %p237 = pnand %p235, %p236
    %p238 = pneg %p237
    // Predicated region
    $region45: #{cross_attention_gcn_forward.39} parent=5 // pred_check
      _
    $region46: #{cross_attention_gcn_forward.39} parent=5 // pred_check_branch
      %240 = sbr.rel (%p237) target = $region48
    $region47: #{cross_attention_gcn_forward.39} parent=5 // pred_region
      %s241 = ssub.s32 %s13, 1
      %p242 = scmp.lt.s32.totalorder %s18, 1
      %s243 = scalar_select %p242, %s18, 1
      %s244 = smul.addr %s243, 8
      %s245 = scalar_lea.vmem %s0, %s244
      %p246 = pneg %p39
      %p247 = pneg %p36
      %p248 = pneg %p60
      %p249 = pneg %p57
      %p250 = pneg %p81
      %p251 = pneg %p78
      %p252 = pneg %p102
      %p253 = pneg %p99
      %p254 = pneg %p123
      %p255 = pneg %p120
      %p256 = pneg %p144
      %p257 = pneg %p141
      %p258 = pneg %p165
      %p259 = pneg %p162
      %p260 = pneg %p191
      %p261 = pneg %p188
      %p262 = scmp.lt.s32.totalorder %s18, 1
      %s263 = scalar_select %p262, %s18, 1
      %s264 = smul.addr %s263, 8
      %s265 = scalar_lea.vmem %s7, %s264
      %p266 = scmp.lt.s32.totalorder %s18, 1
      %s267 = scalar_select %p266, %s18, 1
      %s268 = smul.addr %s267, 8
      %s269 = scalar_lea.vmem %s0, %s268
      %p270 = scmp.lt.s32.totalorder %s18, 1
      %s271 = scalar_select %p270, %s18, 1
      %s272 = smul.addr %s271, 8
      %s273 = scalar_lea.vmem %s7, %s272
      %v274 = vld [vmem:[%s269] sm:$0xff]
      %v275 = vld [vmem:[%s1] sm:$0x1]
      %v276 = vld [vmem:[%s2] sm:$0x1]
      %vm277 = vcmask 261120
      %v278 = vsel %vm277, %v274, 0.0
      %279 = vadd.xlane.f32.xlu0 %v278
      %v280 = vpop.xlane.xlu0 %279
      %v281 = vrcp.pop 32.0
      %v282 = vmul.f32 %v280, %v281
      %v283 = vsub.f32 %v274, %v282
      %v284 = vmul.f32 %v283, %v283
      %v285 = vsel %vm277, %v284, 0.0
      %286 = vadd.xlane.f32.xlu0 %v285
      %v287 = vpop.xlane.xlu0 %286
      %v288 = vmul.f32 %v287, %v281
      %v289 = vadd.f32 %v288, 1e-05
      %v290 = vrsqrt.pop %v289
      %v291 = vmul.f32 %v283, %v290
      %v293 = vlaneseq
      %v294 = vshrl.u32 %v293, 7
      %v295 = vsub.s32 0, %v294
      %v296 = vrot.slane %v275, %v295
      %v298 = vmul.f32 %v291, %v296
      %v300 = vlaneseq
      %v301 = vshrl.u32 %v300, 7
      %v302 = vsub.s32 0, %v301
      %v303 = vrot.slane %v276, %v302
      %v305 = vadd.f32 %v298, %v303
      %v306 = vld [vmem:[%s3] sm:$0xff]
      %v307 = vld [vmem:[%s3 + $0x8] sm:$0xff]
      %v308 = vld [vmem:[%s3 + $0x10] sm:$0xff]
      %v309 = vld [vmem:[%s3 + $0x18] sm:$0xff]
      %v310 = vld [vmem:[%s4] sm:$0x1]
      %v312 = vlaneseq
      %v313 = vshrl.u32 %v312, 7
      %v314 = vsub.s32 0, %v313
      %v315 = vrot.slane %v310, %v314
      %v318 = vsel %vm277, %v305, 0
      %320 = vmatprep.subr.mxu0 0.0
      %321 = vmatpush1.msra.mxu0 0.0
      %322 = vmatprep.subr.mxu0 0.0
      %323 = vmatpush1.msra.mxu0 0.0
      %324 = vmatprep.subr.mxu0 0.0
      %325 = vmatpush1.msra.mxu0 0.0
      %326 = vmatprep.subr.mxu0 0.0
      %327 = vmatpush1.msra.mxu0 0.0
      %328 = vmatprep.subr.mxu0 0.0
      %329 = vmatpush1.msra.mxu0 0.0
      %330 = vmatprep.subr.mxu0 0.0
      %331 = vmatpush1.msra.mxu0 0.0
      %332 = vmatprep.subr.mxu0 0.0
      %333 = vmatpush1.msra.mxu0 0.0
      %334 = vmatprep.subr.mxu0 0.0
      %335 = vmatpush1.msra.mxu0 0.0
      %336 = vmatprep.subr.mxu0 0.0
      %337 = vmatpush1.msra.mxu0 0.0
      %338 = vmatprep.subr.mxu0 0.0
      %339 = vmatpush1.msra.mxu0 0.0
      %340 = vmatprep.subr.mxu0 0.0
      %341 = vmatpush1.msra.mxu0 0.0
      %342 = vmatprep.subr.mxu0 0.0
      %343 = vmatpush1.msra.mxu0 0.0
      %344 = vmatprep.subr.mxu0 0.0
      %345 = vmatpush1.msra.mxu0 %v309
      %346 = vmatprep.subr.mxu0 0.0
      %347 = vmatpush1.msra.mxu0 %v308
      %348 = vmatprep.subr.mxu0 0.0
      %349 = vmatpush1.msra.mxu0 %v307
      %350 = vmatprep.subr.mxu0 0.0
      %351 = vmatpush1.msra.mxu0 %v306
      %352 = vmatprep.subr.mxu0 0.0
      %353 = vmatpush2.msra.mxu0 0.0
      %354 = vmatprep.subr.mxu0 0.0
      %355 = vmatpush2.msra.mxu0 0.0
      %356 = vmatprep.subr.mxu0 0.0
      %357 = vmatpush2.msra.mxu0 0.0
      %358 = vmatprep.subr.mxu0 0.0
      %359 = vmatpush2.msra.mxu0 0.0
      %360 = vmatprep.subr.mxu0 0.0
      %361 = vmatpush2.msra.mxu0 0.0
      %362 = vmatprep.subr.mxu0 0.0
      %363 = vmatpush2.msra.mxu0 0.0
      %364 = vmatprep.subr.mxu0 0.0
      %365 = vmatpush2.msra.mxu0 0.0
      %366 = vmatprep.subr.mxu0 0.0
      %367 = vmatpush2.msra.mxu0 0.0
      %368 = vmatprep.subr.mxu0 0.0
      %369 = vmatpush2.msra.mxu0 0.0
      %370 = vmatprep.subr.mxu0 0.0
      %371 = vmatpush2.msra.mxu0 0.0
      %372 = vmatprep.subr.mxu0 0.0
      %373 = vmatpush2.msra.mxu0 0.0
      %374 = vmatprep.subr.mxu0 0.0
      %375 = vmatpush2.msra.mxu0 0.0
      %376 = vmatprep.subr.mxu0 0.0
      %377 = vmatpush2.msra.mxu0 0.0
      %378 = vmatprep.subr.mxu0 0.0
      %379 = vmatpush2.msra.mxu0 0.0
      %380 = vmatprep.subr.mxu0 0.0
      %381 = vmatpush2.msra.mxu0 0.0
      %382 = vmatprep.subr.mxu0 0.0
      %383 = vmatpush2.msra.mxu0 0.0
      %384 = vmatprep.mubr.f32.mxu0 0.0
      %385 = vmatmul.mubr.f32.gmra.mxu0 %v318
      %v386 = vpop.f32.mrf.mxu0
      %v387 = vadd.f32 %v315, %v386
      %v388 = vpop.f32.mrf.mxu0
      %389 = vdwg.mxu0
      %v390 = vmax.f32 %v387, 0.0
      %v391 = vmul.f32 %v390, %v390
      %v392 = vld [vmem:[%s5] sm:$0xff]
      %v393 = vld [vmem:[%s5 + $0x8] sm:$0xff]
      %v394 = vld [vmem:[%s5 + $0x10] sm:$0xff]
      %v395 = vld [vmem:[%s5 + $0x18] sm:$0xff]
      %v396 = vld [vmem:[%s5 + $0x20] sm:$0xff]
      %v397 = vld [vmem:[%s5 + $0x28] sm:$0xff]
      %v398 = vld [vmem:[%s5 + $0x30] sm:$0xff]
      %v399 = vld [vmem:[%s5 + $0x38] sm:$0xff]
      %v400 = vld [vmem:[%s5 + $0x40] sm:$0xff]
      %v401 = vld [vmem:[%s5 + $0x48] sm:$0xff]
      %v402 = vld [vmem:[%s5 + $0x50] sm:$0xff]
      %v403 = vld [vmem:[%s5 + $0x58] sm:$0xff]
      %v404 = vld [vmem:[%s5 + $0x60] sm:$0xff]
      %v405 = vld [vmem:[%s5 + $0x68] sm:$0xff]
      %v406 = vld [vmem:[%s5 + $0x70] sm:$0xff]
      %v407 = vld [vmem:[%s5 + $0x78] sm:$0xff]
      %v408 = vld [vmem:[%s6] sm:$0x1]
      %v410 = vlaneseq
      %v411 = vshrl.u32 %v410, 7
      %v412 = vsub.s32 0, %v411
      %v413 = vrot.slane %v408, %v412
      %415 = vmatprep.subr.mxu0 0.0
      %416 = vmatpush1.msra.mxu0 %v407
      %417 = vmatprep.subr.mxu0 0.0
      %418 = vmatpush1.msra.mxu0 %v406
      %419 = vmatprep.subr.mxu0 0.0
      %420 = vmatpush1.msra.mxu0 %v405
      %421 = vmatprep.subr.mxu0 0.0
      %422 = vmatpush1.msra.mxu0 %v404
      %423 = vmatprep.subr.mxu0 0.0
      %424 = vmatpush1.msra.mxu0 %v403
      %425 = vmatprep.subr.mxu0 0.0
      %426 = vmatpush1.msra.mxu0 %v402
      %427 = vmatprep.subr.mxu0 0.0
      %428 = vmatpush1.msra.mxu0 %v401
      %429 = vmatprep.subr.mxu0 0.0
      %430 = vmatpush1.msra.mxu0 %v400
      %431 = vmatprep.subr.mxu0 0.0
      %432 = vmatpush1.msra.mxu0 %v399
      %433 = vmatprep.subr.mxu0 0.0
      %434 = vmatpush1.msra.mxu0 %v398
      %435 = vmatprep.subr.mxu0 0.0
      %436 = vmatpush1.msra.mxu0 %v397
      %437 = vmatprep.subr.mxu0 0.0
      %438 = vmatpush1.msra.mxu0 %v396
      %439 = vmatprep.subr.mxu0 0.0
      %440 = vmatpush1.msra.mxu0 %v395
      %441 = vmatprep.subr.mxu0 0.0
      %442 = vmatpush1.msra.mxu0 %v394
      %443 = vmatprep.subr.mxu0 0.0
      %444 = vmatpush1.msra.mxu0 %v393
      %445 = vmatprep.subr.mxu0 0.0
      %446 = vmatpush1.msra.mxu0 %v392
      %447 = vmatprep.subr.mxu0 0.0
      %448 = vmatpush2.msra.mxu0 0.0
      %449 = vmatprep.subr.mxu0 0.0
      %450 = vmatpush2.msra.mxu0 0.0
      %451 = vmatprep.subr.mxu0 0.0
      %452 = vmatpush2.msra.mxu0 0.0
      %453 = vmatprep.subr.mxu0 0.0
      %454 = vmatpush2.msra.mxu0 0.0
      %455 = vmatprep.subr.mxu0 0.0
      %456 = vmatpush2.msra.mxu0 0.0
      %457 = vmatprep.subr.mxu0 0.0
      %458 = vmatpush2.msra.mxu0 0.0
      %459 = vmatprep.subr.mxu0 0.0
      %460 = vmatpush2.msra.mxu0 0.0
      %461 = vmatprep.subr.mxu0 0.0
      %462 = vmatpush2.msra.mxu0 0.0
      %463 = vmatprep.subr.mxu0 0.0
      %464 = vmatpush2.msra.mxu0 0.0
      %465 = vmatprep.subr.mxu0 0.0
      %466 = vmatpush2.msra.mxu0 0.0
      %467 = vmatprep.subr.mxu0 0.0
      %468 = vmatpush2.msra.mxu0 0.0
      %469 = vmatprep.subr.mxu0 0.0
      %470 = vmatpush2.msra.mxu0 0.0
      %471 = vmatprep.subr.mxu0 0.0
      %472 = vmatpush2.msra.mxu0 0.0
      %473 = vmatprep.subr.mxu0 0.0
      %474 = vmatpush2.msra.mxu0 0.0
      %475 = vmatprep.subr.mxu0 0.0
      %476 = vmatpush2.msra.mxu0 0.0
      %477 = vmatprep.subr.mxu0 0.0
      %478 = vmatpush2.msra.mxu0 0.0
      %479 = vmatprep.mubr.f32.mxu0 0.0
      %480 = vmatmul.mubr.f32.gmra.mxu0 %v391
      %v481 = vpop.f32.mrf.mxu0
      %v482 = vadd.f32 %v413, %v481
      %v483 = vpop.f32.mrf.mxu0
      %484 = vdwg.mxu0
      %v485 = vadd.f32 %v274, %v482
      %486 = vst.msk [vmem:[%s273] sm:$0xff] %vm277, %v485
      %p487 = scmp.lt.s32.totalorder %s18, 1
      %s488 = scalar_select %p487, %s18, 1
      %s489 = smul.addr %s488, 8
      %s490 = scalar_lea.vmem %s7, %s489
      // Predicated region
      $region49: #{cross_attention_gcn_forward.39} parent=47 // pred_check
        %p491 = pneg %p188
      $region50: #{cross_attention_gcn_forward.39} parent=47 // pred_check_branch
        %493 = sbr.rel (%p491) target = $region52
      $region51: #{cross_attention_gcn_forward.39} parent=47 // pred_region
        _
      $region52: #{cross_attention_gcn_forward.39} parent=47 // pred_fallthru
        _
    $region48: #{cross_attention_gcn_forward.39} parent=5 // pred_fallthru
      _
    %p494 = scmp.le.s32.totalorder 2, %s13
    // Predicated region
    $region53: #{cross_attention_gcn_forward.39} parent=5 // pred_check
      %p495 = pneg %p494
    $region54: #{cross_attention_gcn_forward.39} parent=5 // pred_check_branch
      %497 = sbr.rel (%p495) target = $region56
    $region55: #{cross_attention_gcn_forward.39} parent=5 // pred_region
      %s498 = ssub.s32 %s13, 2
      // Predicated region
      $region57: #{cross_attention_gcn_forward.39} parent=55 // pred_check
        %p499 = pneg %p194
      $region58: #{cross_attention_gcn_forward.39} parent=55 // pred_check_branch
        %501 = sbr.rel (%p499) target = $region60
      $region59: #{cross_attention_gcn_forward.39} parent=55 // pred_region
        %p502 = scmp.lt.s32.totalorder %s19, 1
        %s503 = scalar_select %p502, %s19, 1
        %s504 = smul.addr %s503, 8
        %s505 = scalar_lea.vmem %s7, %s504
      $region60: #{cross_attention_gcn_forward.39} parent=55 // pred_fallthru
        _
    $region56: #{cross_attention_gcn_forward.39} parent=5 // pred_fallthru
      _
  $region6: #{cross_attention_gcn_forward.39} parent=0 // loop_footer
    %s17 = sadd.s32 1, %s13
  $region7: #{cross_attention_gcn_forward.39} parent=0 // loop_footer_branch
    %12 = sbr.rel target = $region3
  $region8: #{cross_attention_gcn_forward.39} parent=0 // loop_exit
    _

// kernel: cross_attention_gcn_forward.51
$region0: #{cross_attention_gcn_forward.51}
  #allocation0 [shape = 'u32[]', space=smem, size = 0x4, offset = 0x4, fixed_abs, tag = 'smem constant byte address 0x4 - core index']
  #allocation1 [shape = 'u32[144,128]{1,0:T(1,128)}', space=vmem, size = 0x12000, scoped, tag = 'internal scratch']
  %s0 = inlined_call_operand.vmem [shape: f32[16,32], index: 0, kind: input, shape index: {}]
  %s1 = inlined_call_operand.vmem [shape: f32[32,32], index: 1, kind: input, shape index: {}]
  %s2 = inlined_call_operand.vmem [shape: f32[1,32], index: 2, kind: input, shape index: {}]
  %s3 = inlined_call_operand.hbm [shape: f32[16,32], index: 3, kind: output, shape index: {}]
  %s4 = sld [smem:[#allocation0]]
  $region45: #{cross_attention_gcn_forward.51} parent=0
    _
  %s6 = ssub.s32 1, %s4
  %s7 = scalar_select 0, %s6, %s4
  $region1: #{cross_attention_gcn_forward.51} parent=0
    #allocation2 [shape = 'u8[8192]{0}', space=vmem, size = 0x2000, scoped, tag = 'output window, operand 0']
    #allocation3 [shape = 's32[2]{0}', space=sflag, size = 0x8, scoped, tag = 'scoped memory for cross_attention_gcn_forward.51']
    %8 = vsyncpa [#allocation3], 0
    %s9 = scalar_lea.sflag [#allocation3], 1
    %10 = vsyncpa %s9, 0
    loop: start=0, step=1, limit=4
    $region2: #{cross_attention_gcn_forward.51} parent=1 // loop_pre_header
      _
    $region3: #{cross_attention_gcn_forward.51} parent=1 // loop_header
      %s12 = sphi 0, %s16
      %p13 = scmp.ge.s32.totalorder %s12, 4
      %s22 = sphi 0, %s24
      %s25 = sphi 0, %s22
      %s26 = sphi 0, %s25
      %s42 = sphi 0, %s26
      %s46 = sphi 0, %s46
      %s48 = sphi 0, %s46
      %s49 = sphi 0, %s48
      %s63 = sphi 0, %s49
      %s67 = sphi 0, %s67
      %s69 = sphi 0, %s67
      %s70 = sphi 0, %s69
      %s84 = sphi 0, %s70
      %s90 = sphi 0, %s92
      %s93 = sphi 0, %s90
      %s94 = sphi 0, %s93
      %s110 = sphi 0, %s94
    $region4: #{cross_attention_gcn_forward.51} parent=1 // loop_header_branch
      %15 = sbr.rel (%p13) target = $region8
    $region5: #{cross_attention_gcn_forward.51} parent=1 // loop_body
      %s17 = ssub.s32 %s12, 1
      %s18 = ssub.s32 %s12, 2
      %s19 = sadd.s32 %s12, 1
      %s20 = ssub.s32 %s12, %s19
      %p21 = scmp.eq.s32.totalorder %s20, 0
      %s23 = sadd.s32 %s22, 1
      %s24 = scalar_select %p21, %s22, %s23
      %p27 = pneg %p21
      %p28 = scmp.eq.s32.totalorder %s12, 1
      %p29 = por %p27, %p28
      %p30 = scmp.ne.s32.totalorder %s22, %s25
      %p31 = scmp.eq.s32.totalorder %s12, 0
      %p32 = por %p30, %p31
      %p33 = scmp.ne.s32.totalorder %s22, %s25
      %p34 = scmp.eq.s32.totalorder %s17, 1
      %p35 = por %p33, %p34
      %p36 = scmp.ne.s32.totalorder %s25, %s26
      %p37 = scmp.eq.s32.totalorder %s17, 0
      %p38 = por %p36, %p37
      %p39 = scmp.ne.s32.totalorder %s25, %s26
      %p40 = scmp.eq.s32.totalorder %s18, 1
      %p41 = por %p39, %p40
      %p43 = scmp.ne.s32.totalorder %s26, %s42
      %p44 = scmp.eq.s32.totalorder %s18, 0
      %p45 = por %p43, %p44
      %s47 = sadd.s32 %s46, 1
      %p50 = scmp.eq.s32.totalorder %s12, 1
      %p51 = scmp.ne.s32.totalorder %s46, %s48
      %p52 = scmp.eq.s32.totalorder %s12, 0
      %p53 = por %p51, %p52
      %p54 = scmp.ne.s32.totalorder %s46, %s48
      %p55 = scmp.eq.s32.totalorder %s17, 1
      %p56 = por %p54, %p55
      %p57 = scmp.ne.s32.totalorder %s48, %s49
      %p58 = scmp.eq.s32.totalorder %s17, 0
      %p59 = por %p57, %p58
      %p60 = scmp.ne.s32.totalorder %s48, %s49
      %p61 = scmp.eq.s32.totalorder %s18, 1
      %p62 = por %p60, %p61
      %p64 = scmp.ne.s32.totalorder %s49, %s63
      %p65 = scmp.eq.s32.totalorder %s18, 0
      %p66 = por %p64, %p65
      %s68 = sadd.s32 %s67, 1
      %p71 = scmp.eq.s32.totalorder %s12, 1
      %p72 = scmp.ne.s32.totalorder %s67, %s69
      %p73 = scmp.eq.s32.totalorder %s12, 0
      %p74 = por %p72, %p73
      %p75 = scmp.ne.s32.totalorder %s67, %s69
      %p76 = scmp.eq.s32.totalorder %s17, 1
      %p77 = por %p75, %p76
      %p78 = scmp.ne.s32.totalorder %s69, %s70
      %p79 = scmp.eq.s32.totalorder %s17, 0
      %p80 = por %p78, %p79
      %p81 = scmp.ne.s32.totalorder %s69, %s70
      %p82 = scmp.eq.s32.totalorder %s18, 1
      %p83 = por %p81, %p82
      %p85 = scmp.ne.s32.totalorder %s70, %s84
      %p86 = scmp.eq.s32.totalorder %s18, 0
      %p87 = por %p85, %p86
      %s88 = ssub.s32 %s12, %s19
      %p89 = scmp.eq.s32.totalorder %s88, 0
      %s91 = sadd.s32 %s90, 1
      %s92 = scalar_select %p89, %s90, %s91
      %p95 = pneg %p89
      %p96 = scmp.eq.s32.totalorder %s12, 1
      %p97 = por %p95, %p96
      %p98 = scmp.ne.s32.totalorder %s90, %s93
      %p99 = scmp.eq.s32.totalorder %s12, 0
      %p100 = por %p98, %p99
      %p101 = scmp.ne.s32.totalorder %s90, %s93
      %p102 = scmp.eq.s32.totalorder %s17, 1
      %p103 = por %p101, %p102
      %p104 = scmp.ne.s32.totalorder %s93, %s94
      %p105 = scmp.eq.s32.totalorder %s17, 0
      %p106 = por %p104, %p105
      %p107 = scmp.ne.s32.totalorder %s93, %s94
      %p108 = scmp.eq.s32.totalorder %s18, 1
      %p109 = por %p107, %p108
      %p111 = scmp.ne.s32.totalorder %s94, %s110
      %p112 = scmp.eq.s32.totalorder %s18, 0
      %p113 = por %p111, %p112
      %p114 = scmp.le.s32.totalorder 1, %s12
      %p115 = scmp.lt.s32.totalorder %s12, 3
      %p116 = pnand %p114, %p115
      %p117 = pneg %p116
      // Predicated region
      $region9: #{cross_attention_gcn_forward.51} parent=5 // pred_check
        _
      $region10: #{cross_attention_gcn_forward.51} parent=5 // pred_check_branch
        %119 = sbr.rel (%p116) target = $region12
      $region11: #{cross_attention_gcn_forward.51} parent=5 // pred_region
        %s120 = ssub.s32 %s12, 1
        // Predicated region
        $region13: #{cross_attention_gcn_forward.51} parent=11 // pred_check
          %p121 = pneg %p59
        $region14: #{cross_attention_gcn_forward.51} parent=11 // pred_check_branch
          %123 = sbr.rel (%p121) target = $region16
        $region15: #{cross_attention_gcn_forward.51} parent=11 // pred_region
          _
        $region16: #{cross_attention_gcn_forward.51} parent=11 // pred_fallthru
          _
        // Predicated region
        $region17: #{cross_attention_gcn_forward.51} parent=11 // pred_check
          %p124 = pneg %p80
        $region18: #{cross_attention_gcn_forward.51} parent=11 // pred_check_branch
          %126 = sbr.rel (%p124) target = $region20
        $region19: #{cross_attention_gcn_forward.51} parent=11 // pred_region
          _
        $region20: #{cross_attention_gcn_forward.51} parent=11 // pred_fallthru
          _
      $region12: #{cross_attention_gcn_forward.51} parent=5 // pred_fallthru
        _
      %p127 = scmp.lt.s32.totalorder %s12, 2
      // Predicated region
      $region21: #{cross_attention_gcn_forward.51} parent=5 // pred_check
        %p128 = pneg %p127
      $region22: #{cross_attention_gcn_forward.51} parent=5 // pred_check_branch
        %130 = sbr.rel (%p128) target = $region24
      $region23: #{cross_attention_gcn_forward.51} parent=5 // pred_region
        // Predicated region
        $region25: #{cross_attention_gcn_forward.51} parent=23 // pred_check
          %p131 = pneg %p32
        $region26: #{cross_attention_gcn_forward.51} parent=23 // pred_check_branch
          %133 = sbr.rel (%p131) target = $region28
        $region27: #{cross_attention_gcn_forward.51} parent=23 // pred_region
          %p134 = scmp.lt.s32.totalorder %s12, 1
          %s135 = scalar_select %p134, %s12, 1
          %s136 = smul.addr %s135, 8
          %s137 = scalar_lea.vmem %s0, %s136
        $region28: #{cross_attention_gcn_forward.51} parent=23 // pred_fallthru
          _
      $region24: #{cross_attention_gcn_forward.51} parent=5 // pred_fallthru
        _
      %p138 = scmp.le.s32.totalorder 1, %s12
      %p139 = scmp.lt.s32.totalorder %s12, 3
      %p140 = pnand %p138, %p139
      %p141 = pneg %p140
      // Predicated region
      $region29: #{cross_attention_gcn_forward.51} parent=5 // pred_check
        _
      $region30: #{cross_attention_gcn_forward.51} parent=5 // pred_check_branch
        %143 = sbr.rel (%p140) target = $region32
      $region31: #{cross_attention_gcn_forward.51} parent=5 // pred_region
        %s144 = ssub.s32 %s12, 1
        %p145 = scmp.lt.s32.totalorder %s17, 1
        %s146 = scalar_select %p145, %s17, 1
        %s147 = smul.addr %s146, 8
        %s148 = scalar_lea.vmem %s0, %s147
        %p149 = pneg %p38
        %p150 = pneg %p35
        %p151 = pneg %p59
        %p152 = pneg %p56
        %p153 = pneg %p80
        %p154 = pneg %p77
        %p155 = pneg %p106
        %p156 = pneg %p103
        %s157 = sand.u32 %s93, 1
        %s158 = scalar_lea.sflag [#allocation3], %s157
        %s159 = sand.u32 %s93, 1
        %s160 = smul.addr %s159, 8
        %s161 = scalar_lea.vmem [#allocation2], %s160
        %p162 = scmp.lt.s32.totalorder %s17, 1
        %s163 = scalar_select %p162, %s17, 1
        %s164 = smul.addr %s163, 8
        %s165 = scalar_lea.vmem %s0, %s164
        %v166 = vld [vmem:[%s165] sm:$0xff]
        %v167 = vld [vmem:[%s1] sm:$0xff]
        %v168 = vld [vmem:[%s1 + $0x8] sm:$0xff]
        %v169 = vld [vmem:[%s1 + $0x10] sm:$0xff]
        %v170 = vld [vmem:[%s1 + $0x18] sm:$0xff]
        %v171 = vld [vmem:[%s2] sm:$0x1]
        %v173 = vlaneseq
        %v174 = vshrl.u32 %v173, 7
        %v175 = vsub.s32 0, %v174
        %v176 = vrot.slane %v171, %v175
        %vm178 = vcmask 261120
        %v180 = vsel %vm178, %v166, 0
        %182 = vmatprep.subr.mxu0 0.0
        %183 = vmatpush1.msra.mxu0 0.0
        %184 = vmatprep.subr.mxu0 0.0
        %185 = vmatpush1.msra.mxu0 0.0
        %186 = vmatprep.subr.mxu0 0.0
        %187 = vmatpush1.msra.mxu0 0.0
        %188 = vmatprep.subr.mxu0 0.0
        %189 = vmatpush1.msra.mxu0 0.0
        %190 = vmatprep.subr.mxu0 0.0
        %191 = vmatpush1.msra.mxu0 0.0
        %192 = vmatprep.subr.mxu0 0.0
        %193 = vmatpush1.msra.mxu0 0.0
        %194 = vmatprep.subr.mxu0 0.0
        %195 = vmatpush1.msra.mxu0 0.0
        %196 = vmatprep.subr.mxu0 0.0
        %197 = vmatpush1.msra.mxu0 0.0
        %198 = vmatprep.subr.mxu0 0.0
        %199 = vmatpush1.msra.mxu0 0.0
        %200 = vmatprep.subr.mxu0 0.0
        %201 = vmatpush1.msra.mxu0 0.0
        %202 = vmatprep.subr.mxu0 0.0
        %203 = vmatpush1.msra.mxu0 0.0
        %204 = vmatprep.subr.mxu0 0.0
        %205 = vmatpush1.msra.mxu0 0.0
        %206 = vmatprep.subr.mxu0 0.0
        %207 = vmatpush1.msra.mxu0 %v170
        %208 = vmatprep.subr.mxu0 0.0
        %209 = vmatpush1.msra.mxu0 %v169
        %210 = vmatprep.subr.mxu0 0.0
        %211 = vmatpush1.msra.mxu0 %v168
        %212 = vmatprep.subr.mxu0 0.0
        %213 = vmatpush1.msra.mxu0 %v167
        %214 = vmatprep.subr.mxu0 0.0
        %215 = vmatpush2.msra.mxu0 0.0
        %216 = vmatprep.subr.mxu0 0.0
        %217 = vmatpush2.msra.mxu0 0.0
        %218 = vmatprep.subr.mxu0 0.0
        %219 = vmatpush2.msra.mxu0 0.0
        %220 = vmatprep.subr.mxu0 0.0
        %221 = vmatpush2.msra.mxu0 0.0
        %222 = vmatprep.subr.mxu0 0.0
        %223 = vmatpush2.msra.mxu0 0.0
        %224 = vmatprep.subr.mxu0 0.0
        %225 = vmatpush2.msra.mxu0 0.0
        %226 = vmatprep.subr.mxu0 0.0
        %227 = vmatpush2.msra.mxu0 0.0
        %228 = vmatprep.subr.mxu0 0.0
        %229 = vmatpush2.msra.mxu0 0.0
        %230 = vmatprep.subr.mxu0 0.0
        %231 = vmatpush2.msra.mxu0 0.0
        %232 = vmatprep.subr.mxu0 0.0
        %233 = vmatpush2.msra.mxu0 0.0
        %234 = vmatprep.subr.mxu0 0.0
        %235 = vmatpush2.msra.mxu0 0.0
        %236 = vmatprep.subr.mxu0 0.0
        %237 = vmatpush2.msra.mxu0 0.0
        %238 = vmatprep.subr.mxu0 0.0
        %239 = vmatpush2.msra.mxu0 0.0
        %240 = vmatprep.subr.mxu0 0.0
        %241 = vmatpush2.msra.mxu0 0.0
        %242 = vmatprep.subr.mxu0 0.0
        %243 = vmatpush2.msra.mxu0 0.0
        %244 = vmatprep.subr.mxu0 0.0
        %245 = vmatpush2.msra.mxu0 0.0
        %246 = vmatprep.mubr.f32.mxu0 0.0
        %247 = vmatmul.mubr.f32.gmra.mxu0 %v180
        %v248 = vpop.f32.mrf.mxu0
        %v249 = vadd.f32 %v176, %v248
        %v250 = vpop.f32.mrf.mxu0
        %251 = vdwg.mxu0
        %252 = vst.msk [vmem:[%s161] sm:$0xff] %vm178, %v249
        %s253 = sand.u32 %s93, 1
        %s254 = scalar_lea.sflag [#allocation3], %s253
        %s255 = sand.u32 %s93, 1
        %s256 = smul.addr %s255, 8
        %s257 = scalar_lea.vmem [#allocation2], %s256
        // Predicated region
        $region33: #{cross_attention_gcn_forward.51} parent=31 // pred_check
          %p258 = pneg %p103
        $region34: #{cross_attention_gcn_forward.51} parent=31 // pred_check_branch
          %260 = sbr.rel (%p258) target = $region36
        $region35: #{cross_attention_gcn_forward.51} parent=31 // pred_region
          %s262 = ssub.s32 128, 128
          %263 = vsyncadd %s254, %s262
          %s264 = smul.addr %s17, 128
          %s265 = scalar_lea.hbm %s3, %s264
          %s267 = sshll.u32 %s257, 4
          %s268 = int_to_ptr.vmem [resolvable:$true] %s267
          %270 = dma.vmem_to_hbm [thread:$0]  %s268, 128, %s265, %s254
        $region36: #{cross_attention_gcn_forward.51} parent=31 // pred_fallthru
          _
      $region32: #{cross_attention_gcn_forward.51} parent=5 // pred_fallthru
        _
      %p271 = scmp.le.s32.totalorder 2, %s12
      // Predicated region
      $region37: #{cross_attention_gcn_forward.51} parent=5 // pred_check
        %p272 = pneg %p271
      $region38: #{cross_attention_gcn_forward.51} parent=5 // pred_check_branch
        %274 = sbr.rel (%p272) target = $region40
      $region39: #{cross_attention_gcn_forward.51} parent=5 // pred_region
        %s275 = ssub.s32 %s12, 2
        // Predicated region
        $region41: #{cross_attention_gcn_forward.51} parent=39 // pred_check
          %p276 = pneg %p109
        $region42: #{cross_attention_gcn_forward.51} parent=39 // pred_check_branch
          %278 = sbr.rel (%p276) target = $region44
        $region43: #{cross_attention_gcn_forward.51} parent=39 // pred_region
          %s279 = sand.u32 %s94, 1
          %s280 = scalar_lea.sflag [#allocation3], %s279
          %s281 = sand.u32 %s94, 1
          %s282 = smul.addr %s281, 8
          %s283 = scalar_lea.vmem [#allocation2], %s282
          %284 = dma.done %s280, 128
        $region44: #{cross_attention_gcn_forward.51} parent=39 // pred_fallthru
          _
      $region40: #{cross_attention_gcn_forward.51} parent=5 // pred_fallthru
        _
    $region6: #{cross_attention_gcn_forward.51} parent=1 // loop_footer
      %s16 = sadd.s32 1, %s12
    $region7: #{cross_attention_gcn_forward.51} parent=1 // loop_footer_branch
      %11 = sbr.rel target = $region3
    $region8: #{cross_attention_gcn_forward.51} parent=1 // loop_exit
      _
    %285 = vsyncpa [#allocation3], 1
    %s286 = scalar_lea.sflag [#allocation3], 1
    %287 = vsyncpa %s286, 1

</llo_original>
